<compile_context>
chip_gen: v7x
topology: tpu7x:2x2x1
jax: 0.10.0
libtpu: 0.0.40
codegen_flags: <defaults>
</compile_context>

<pallas_src>
import numpy as np
import jax
import jax.numpy as jnp
from jax.experimental import pallas as pl
from jax.experimental.pallas import tpu as pltpu

LANE = 128
EPS = 1e-5


def _round_up(v, m):
    return (v + m - 1) // m * m


def make_encoder_kernel(K, TN, n_real, inv_coef):
    """Fused two-branch PolyGCL encoder kernel (see module docstring for phases)."""

    def kernel(x_ref, p_ref, w1_ref, b1_ref, g_ref, bt_ref, w2_ref, b2_ref,
               pa_ref, sgn_ref, msk_ref, out_ref,
               cur0_ref, cur1_ref, acc_ref, sum_ref, ssq_ref):
        k = pl.program_id(0)
        t = pl.program_id(1)
        row0 = pl.multiple_of(t * TN, TN)

        # ---- phase 0: shared input encoder (Linear in->hidden; dropout p=0 = id) ----
        @pl.when(k == 0)
        def _():
            h = jnp.dot(x_ref[...], w1_ref[...],
                        preferred_element_type=jnp.float32) + b1_ref[...]
            rows = row0 + jax.lax.broadcasted_iota(jnp.int32, (TN, 1), 0)
            h = jnp.where(rows < n_real, h, 0.0)          # zero any padded node rows
            cur0_ref[pl.ds(row0, TN), :] = h.astype(jnp.bfloat16)
            acc_ref[pl.ds(row0, TN), :] = h

        # ---- phases 1..K: polynomial propagation (both branches in one MXU matmul) ----
        def propagate(src_ref, dst_ref):
            prev = src_ref[...]                                    # (Np, 2Hp) bf16
            pc = jnp.dot(p_ref[...], prev,
                         preferred_element_type=jnp.float32)       # (TN, 2Hp) f32
            prev_strip = src_ref[pl.ds(row0, TN), :].astype(jnp.float32)
            # low lanes:  +P@cur          high lanes: cur - P@cur
            new = pc * sgn_ref[...] + prev_strip * msk_ref[...]
            dst_ref[pl.ds(row0, TN), :] = new.astype(jnp.bfloat16)
            acc_new = acc_ref[pl.ds(row0, TN), :] + new
            acc_ref[pl.ds(row0, TN), :] = acc_new

            # last propagation step: BatchNorm batch statistics (reuse acc_new vregs)
            @pl.when(k == K)
            def _():
                @pl.when(t == 0)
                def _():
                    sum_ref[...] = jnp.zeros_like(sum_ref)
                    ssq_ref[...] = jnp.zeros_like(ssq_ref)
                sum_ref[...] += jnp.sum(acc_new, axis=0, keepdims=True)
                ssq_ref[...] += jnp.sum(acc_new * acc_new, axis=0, keepdims=True)

        in_prop = jnp.logical_and(k >= 1, k <= K)
        k_odd = (k % 2) == 1

        @pl.when(jnp.logical_and(in_prop, k_odd))
        def _():
            propagate(cur0_ref, cur1_ref)

        @pl.when(jnp.logical_and(in_prop, jnp.logical_not(k_odd)))
        def _():
            propagate(cur1_ref, cur0_ref)

        # ---- phase K+1: BatchNorm (batch stats) -> Linear(hidden->out) -> PReLU ----
        @pl.when(k == K + 1)
        def _():
            a = acc_ref[pl.ds(row0, TN), :] * inv_coef     # hoisted uniform coefficient
            mean = sum_ref[...] * (inv_coef / n_real)
            ex2 = ssq_ref[...] * (inv_coef * inv_coef / n_real)
            var = jnp.maximum(ex2 - mean * mean, 0.0)
            hn = (a - mean) * jax.lax.rsqrt(var + EPS) * g_ref[...] + bt_ref[...]
            z = jnp.dot(hn.astype(jnp.bfloat16), w2_ref[...],
                        preferred_element_type=jnp.float32) + b2_ref[...]
            # PReLU: max(z,0) + a*min(z,0)  (a = 0.25 -> nn.PReLU default)
            out_ref[...] = jnp.maximum(z, 0.0) + pa_ref[...] * jnp.minimum(z, 0.0)

    return kernel


def build_propagation(edge_index, n):
    """Plain-JAX glue: dense symmetric-normalized adjacency (low-pass filter).

    TODO(synk): symmetrizes and de-duplicates edges (undirected, unweighted graph).
    """
    row, col = edge_index[0], edge_index[1]
    A = jnp.zeros((n, n), jnp.float32).at[row, col].set(1.0)
    A = jnp.maximum(A, A.T)
    A = A + jnp.eye(n, dtype=jnp.float32)      # self loops
    deg = jnp.sum(A, axis=1)
    dinv = jax.lax.rsqrt(deg)
    return dinv[:, None] * A * dinv[None, :]


def _vmem_capacity_bytes():
    try:
        cap = getattr(pltpu.get_tpu_info(), "vmem_capacity_bytes", None)
        if cap:
            return int(cap)
    except Exception:
        pass
    return 64 << 20   # conservative (v7x-sized) fallback


def poly_gcl_forward(x, edge_index, params, *, K):
    """PolyGCLModel.forward for both branches: returns (Z_L, Z_H)."""
    assert K >= 1, "PolyGCL polynomial order K must be >= 1"
    N, F = x.shape
    H = params["w1"].shape[1]
    O = params["w2"].shape[1]
    f32 = jnp.float32

    Fp = _round_up(F, LANE)
    Hp = _round_up(H, LANE)
    Op = _round_up(O, LANE)

    # Per-generation VMEM budget (headroom left for Mosaic internal temps):
    # ~48 MiB on v7x (64 MiB physical), capped at 100 MiB on v5e/v6e (128 MiB).
    cap = _vmem_capacity_bytes()
    vmem_budget = max(32 << 20, min(cap - (16 << 20), 100 << 20))

    def vmem_bytes(tn, npad):
        # double-buffered streamed blocks + (conservatively double-buffered) weights
        blocks = 2 * (tn * Fp * 2 + tn * npad * 2 + tn * 2 * Op * 4)
        weights = 2 * (Fp * 2 * Hp * 2 + 2 * Hp * 2 * Op * 2
                       + 6 * 2 * Hp * 4 + 2 * Op * 4 + 4)
        # persistent scratch: 2x bf16 cur + f32 acc (full height) + BN vectors
        scratch = npad * 2 * Hp * (2 + 2 + 4) + 2 * 2 * Hp * 4
        return blocks + weights + scratch

    # Resident-P fast path: single node tile, P DMA'd once (constant block index).
    Np = _round_up(N, LANE)
    if vmem_bytes(Np, Np) <= vmem_budget:
        TN = Np
    else:
        TN = 128
        for cand in (512, 256, 128):
            if vmem_bytes(cand, _round_up(N, cand)) <= vmem_budget:
                TN = cand
                break
        Np = _round_up(N, TN)
        # TODO(synk): if even TN=128 overflows (huge Np), the full-height cur/acc
        # scratch is the binding constraint and the design needs block-sparse P.
    T = Np // TN

    # Low-pass propagation matrix only; the high-pass (I - P) is derived in-kernel.
    P = build_propagation(edge_index, N)
    P_pad = jnp.zeros((Np, Np), f32).at[:N, :N].set(P).astype(jnp.bfloat16)
    x_pad = jnp.zeros((Np, Fp), f32).at[:N, :F].set(x).astype(jnp.bfloat16)

    def pad2(a, r, c):
        return jnp.zeros((r, c), f32).at[:a.shape[0], :a.shape[1]].set(a)

    # Duplicate the shared per-branch parameters on the lane axis so both branches
    # ride one lane-dense (>=256-wide) matmul; the up-projection becomes block-diag.
    w1p = pad2(params["w1"], Fp, Hp)
    w1d = jnp.concatenate([w1p, w1p], axis=1).astype(jnp.bfloat16)          # (Fp, 2Hp)
    b1d = jnp.concatenate([pad2(params["b1"], 1, Hp)] * 2, axis=1)          # (1, 2Hp)
    gd = jnp.concatenate([pad2(params["bn_gamma"], 1, Hp)] * 2, axis=1)
    btd = jnp.concatenate([pad2(params["bn_beta"], 1, Hp)] * 2, axis=1)
    w2p = pad2(params["w2"], Hp, Op)
    zer = jnp.zeros_like(w2p)
    w2d = jnp.concatenate(
        [jnp.concatenate([w2p, zer], axis=1),
         jnp.concatenate([zer, w2p], axis=1)], axis=0).astype(jnp.bfloat16)  # (2Hp, 2Op)
    b2d = jnp.concatenate([pad2(params["b2"], 1, Op)] * 2, axis=1)          # (1, 2Op)
    pa = jnp.full((1, 1), params["prelu_a"], f32)
    # lane-branch constants: +1 / -1 sign and 0/1 high-pass mask (hoisted from kernel)
    lane_high = jnp.arange(2 * Hp) >= Hp
    sgn = jnp.where(lane_high, -1.0, 1.0).astype(f32)[None, :]              # (1, 2Hp)
    msk = lane_high.astype(f32)[None, :]                                    # (1, 2Hp)

    kernel = make_encoder_kernel(K=K, TN=TN, n_real=N, inv_coef=1.0 / (K + 1))

    # Phase-aware index maps: operands only advance in the phases that read them,
    # and the output block index is frozen until the final phase (no garbage
    # write-backs of uninitialized output blocks during phases 0..K).
    x_map = lambda k, t: (jnp.where(k == 0, t, 0), 0)
    p_map = lambda k, t: (jnp.where(jnp.logical_and(k >= 1, k <= K), t, 0), 0)
    const_map = lambda k, t: (0, 0)
    out_map = lambda k, t: (jnp.where(k == K + 1, t, 0), 0)

    out = pl.pallas_call(
        kernel,
        out_shape=jax.ShapeDtypeStruct((Np, 2 * Op), f32),
        grid_spec=pltpu.PrefetchScalarGridSpec(
            num_scalar_prefetch=0,
            grid=(K + 2, T),                                  # k-major; node tiles inner
            in_specs=[
                pl.BlockSpec((TN, Fp), x_map),                # x row strip (phase 0 only)
                pl.BlockSpec((TN, Np), p_map),                # P row strip (phases 1..K)
                pl.BlockSpec((Fp, 2 * Hp), const_map),        # [W1 | W1]
                pl.BlockSpec((1, 2 * Hp), const_map),         # [b1 | b1]
                pl.BlockSpec((1, 2 * Hp), const_map),         # [gamma | gamma]
                pl.BlockSpec((1, 2 * Hp), const_map),         # [beta | beta]
                pl.BlockSpec((2 * Hp, 2 * Op), const_map),    # blockdiag(W2, W2)
                pl.BlockSpec((1, 2 * Op), const_map),         # [b2 | b2]
                pl.BlockSpec((1, 1), const_map),              # PReLU weight
                pl.BlockSpec((1, 2 * Hp), const_map),         # branch sign (+1 / -1)
                pl.BlockSpec((1, 2 * Hp), const_map),         # high-pass mask (0 / 1)
            ],
            out_specs=pl.BlockSpec((TN, 2 * Op), out_map),
            scratch_shapes=[
                pltpu.VMEM((Np, 2 * Hp), jnp.bfloat16),  # cur buffer 0 (poly state, bf16)
                pltpu.VMEM((Np, 2 * Hp), jnp.bfloat16),  # cur buffer 1
                pltpu.VMEM((Np, 2 * Hp), f32),           # polynomial accumulator
                pltpu.VMEM((1, 2 * Hp), f32),            # BN per-channel sum
                pltpu.VMEM((1, 2 * Hp), f32),            # BN per-channel sum of squares
            ],
        ),
        compiler_params=pltpu.CompilerParams(
            # Node tiles share the persistent cur/acc/BN scratch across grid steps,
            # so both axes must stay sequential on one TensorCore.
            dimension_semantics=("arbitrary", "arbitrary"),
            vmem_limit_bytes=int(vmem_budget),
        ),
    )(x_pad, P_pad, w1d, b1d, gd, btd, w2d, b2d, pa, sgn, msk)

    Z_L = out[:N, :O]
    Z_H = out[:N, Op:Op + O]
    return Z_L, Z_H


def reference_forward(x, P, params, *, K):
    """Pure-JAX reference with the same bf16-MXU / bf16-state / f32-accumulate mix."""
    bf, f32 = jnp.bfloat16, jnp.float32
    h = jnp.dot(x.astype(bf), params["w1"].astype(bf),
                preferred_element_type=f32) + params["b1"]
    Pb = P.astype(bf)

    def branch(high_pass):
        cur = h.astype(bf)     # polynomial state kept in bf16 (matches kernel scratch)
        acc = h                # accumulator in f32
        for _ in range(K):
            pc = jnp.dot(Pb, cur, preferred_element_type=f32)
            new = cur.astype(f32) - pc if high_pass else pc
            acc = acc + new
            cur = new.astype(bf)
        acc = acc * (1.0 / (K + 1))
        mean = jnp.mean(acc, axis=0, keepdims=True)
        var = jnp.mean((acc - mean) ** 2, axis=0, keepdims=True)
        hn = (acc - mean) * jax.lax.rsqrt(var + EPS) * params["bn_gamma"] + params["bn_beta"]
        z = jnp.dot(hn.astype(bf), params["w2"].astype(bf),
                    preferred_element_type=f32) + params["b2"]
        return jnp.maximum(z, 0.0) + params["prelu_a"] * jnp.minimum(z, 0.0)

    return branch(False), branch(True)


if __name__ == "__main__":
    key = jax.random.PRNGKey(0)
    N, IN_SIZE, HIDDEN, OUT_SIZE, K = 32, 48, 32, 16, 3
    NUM_EDGES = 96

    keys = jax.random.split(key, 5)
    x = jax.random.normal(keys[0], (N, IN_SIZE), jnp.float32)
    src = jax.random.randint(keys[1], (NUM_EDGES,), 0, N)
    dst = jax.random.randint(keys[2], (NUM_EDGES,), 0, N)
    edge_index = jnp.stack([src, dst], axis=0)

    def xavier_uniform(k, shape):
        fan_in, fan_out = shape
        limit = (6.0 / (fan_in + fan_out)) ** 0.5
        return jax.random.uniform(k, shape, jnp.float32, -limit, limit)

    params = {
        "w1": xavier_uniform(keys[3], (IN_SIZE, HIDDEN)),
        "b1": jnp.zeros((1, HIDDEN), jnp.float32),
        "bn_gamma": jnp.ones((1, HIDDEN), jnp.float32),
        "bn_beta": jnp.zeros((1, HIDDEN), jnp.float32),
        "w2": xavier_uniform(keys[4], (HIDDEN, OUT_SIZE)),
        "b2": jnp.zeros((1, OUT_SIZE), jnp.float32),
        "prelu_a": 0.25,   # nn.PReLU() default weight (act_fn='prelu')
    }
    # TODO(synk): alpha/beta and the Discriminator of PolyGCL are built in
    # __init__ but are not used in forward(); they are omitted here.

    Z_L, Z_H = poly_gcl_forward(x, edge_index, params, K=K)
    jax.block_until_ready((Z_L, Z_H))
    assert Z_L.shape == (N, OUT_SIZE) and Z_H.shape == (N, OUT_SIZE)

    # Numerics check against a pure-JAX reference with matching bf16/f32 mix.
    P = build_propagation(edge_index, N)
    R_L, R_H = reference_forward(x, P, params, K=K)
    np.testing.assert_allclose(np.asarray(Z_L), np.asarray(R_L), rtol=1e-2, atol=1e-2)
    np.testing.assert_allclose(np.asarray(Z_H), np.asarray(R_H), rtol=1e-2, atol=1e-2)

    print("KERNEL_OK")
</pallas_src>

<mosaic_0001>
module attributes {stable_mosaic.version = 11 : i64} {
  func.func @kernel(%arg0: i32, %arg1: i32, %arg2: memref<128x128xbf16, #tpu.memory_space<vmem>>, %arg3: memref<128x128xbf16, #tpu.memory_space<vmem>>, %arg4: memref<128x256xbf16, #tpu.memory_space<vmem>>, %arg5: memref<1x256xf32, #tpu.memory_space<vmem>>, %arg6: memref<1x256xf32, #tpu.memory_space<vmem>>, %arg7: memref<1x256xf32, #tpu.memory_space<vmem>>, %arg8: memref<256x256xbf16, #tpu.memory_space<vmem>>, %arg9: memref<1x256xf32, #tpu.memory_space<vmem>>, %arg10: memref<1x1xf32, #tpu.memory_space<vmem>>, %arg11: memref<1x256xf32, #tpu.memory_space<vmem>>, %arg12: memref<1x256xf32, #tpu.memory_space<vmem>>, %arg13: memref<128x256xf32, #tpu.memory_space<vmem>>, %arg14: memref<128x256xbf16, #tpu.memory_space<vmem>>, %arg15: memref<128x256xbf16, #tpu.memory_space<vmem>>, %arg16: memref<128x256xf32, #tpu.memory_space<vmem>>, %arg17: memref<1x256xf32, #tpu.memory_space<vmem>>, %arg18: memref<1x256xf32, #tpu.memory_space<vmem>>) attributes {dimension_semantics = [#tpu.dimension_semantics<arbitrary>, #tpu.dimension_semantics<arbitrary>], iteration_bounds = array<i64: 5, 1>, scalar_prefetch = 0 : i64, scratch_operands = 5 : i64, tpu.core_type = #tpu.core_type<tc>, window_params = [{transform_indices = @transform_0, window_bounds = array<i64: 128, 128>}, {transform_indices = @transform_1, window_bounds = array<i64: 128, 128>}, {pipeline_mode = #tpu.pipeline_mode<synchronous>, transform_indices = @transform_2, window_bounds = array<i64: 128, 256>}, {pipeline_mode = #tpu.pipeline_mode<synchronous>, transform_indices = @transform_3, window_bounds = array<i64: 1, 256>}, {pipeline_mode = #tpu.pipeline_mode<synchronous>, transform_indices = @transform_4, window_bounds = array<i64: 1, 256>}, {pipeline_mode = #tpu.pipeline_mode<synchronous>, transform_indices = @transform_5, window_bounds = array<i64: 1, 256>}, {pipeline_mode = #tpu.pipeline_mode<synchronous>, transform_indices = @transform_6, window_bounds = array<i64: 256, 256>}, {pipeline_mode = #tpu.pipeline_mode<synchronous>, transform_indices = @transform_7, window_bounds = array<i64: 1, 256>}, {pipeline_mode = #tpu.pipeline_mode<synchronous>, transform_indices = @transform_8, window_bounds = array<i64: 1, 1>}, {pipeline_mode = #tpu.pipeline_mode<synchronous>, transform_indices = @transform_9, window_bounds = array<i64: 1, 256>}, {pipeline_mode = #tpu.pipeline_mode<synchronous>, transform_indices = @transform_10, window_bounds = array<i64: 1, 256>}, {transform_indices = @transform_11, window_bounds = array<i64: 128, 256>}]} {
    %c128_i32 = arith.constant 128 : i32
    %0 = arith.muli %arg1, %c128_i32 : i32
    %1 = tpu.assume_multiple %0, 128 : i32
    %c0_i32 = arith.constant 0 : i32
    %2 = arith.cmpi eq, %arg0, %c0_i32 : i32
    %3 = arith.extui %2 : i1 to i32
    %c0_i32_0 = arith.constant 0 : i32
    %4 = arith.cmpi ne, %3, %c0_i32_0 : i32
    scf.if %4 {
      %c0 = arith.constant 0 : index
      %c0_10 = arith.constant 0 : index
      %29 = vector.load %arg2[%c0, %c0_10] : memref<128x128xbf16, #tpu.memory_space<vmem>>, vector<128x128xbf16>
      %c0_11 = arith.constant 0 : index
      %c0_12 = arith.constant 0 : index
      %30 = vector.load %arg4[%c0_11, %c0_12] : memref<128x256xbf16, #tpu.memory_space<vmem>>, vector<128x256xbf16>
      %cst = arith.constant dense<0.000000e+00> : vector<128x256xf32>
      %31 = tpu.matmul %29, %30, %cst {dimension_numbers = #tpu.dot_dimension_numbers<[1], [0], [0], [1], [0, 0, 1, 1], [], []>} : vector<128x128xbf16>, vector<128x256xbf16>, vector<128x256xf32> -> vector<128x256xf32>
      %c0_13 = arith.constant 0 : index
      %c0_14 = arith.constant 0 : index
      %32 = vector.load %arg5[%c0_13, %c0_14] : memref<1x256xf32, #tpu.memory_space<vmem>>, vector<1x256xf32>
      %33 = vector.broadcast %32 : vector<1x256xf32> to vector<128x256xf32>
      %34 = arith.addf %31, %33 : vector<128x256xf32>
      %35 = tpu.iota {dimensions = array<i32: 0>} : vector<128x1xi32>
      %36 = vector.broadcast %1 : i32 to vector<128x1xi32>
      %37 = arith.addi %36, %35 : vector<128x1xi32>
      %c32_i32 = arith.constant 32 : i32
      %38 = vector.broadcast %c32_i32 : i32 to vector<128x1xi32>
      %39 = arith.cmpi slt, %37, %38 : vector<128x1xi32>
      %cst_15 = arith.constant 0.000000e+00 : f32
      %40 = vector.shape_cast %39 : vector<128x1xi1> to vector<128x1xi1>
      %41 = vector.broadcast %40 : vector<128x1xi1> to vector<128x256xi1>
      %42 = vector.broadcast %cst_15 : f32 to vector<128x256xf32>
      %43 = arith.select %41, %34, %42 : vector<128x256xi1>, vector<128x256xf32>
      %44 = arith.truncf %43 : vector<128x256xf32> to vector<128x256xbf16>
      %45 = arith.index_cast %1 : i32 to index
      %c0_16 = arith.constant 0 : index
      %46 = vector.load %arg14[%45, %c0_16] : memref<128x256xbf16, #tpu.memory_space<vmem>>, vector<128x256xbf16>
      tpu.vector_store %arg14[%45, %c0_16], %44 {strides = array<i32>} : memref<128x256xbf16, #tpu.memory_space<vmem>>, vector<128x256xbf16>,
      %47 = arith.index_cast %1 : i32 to index
      %c0_17 = arith.constant 0 : index
      %48 = vector.load %arg16[%47, %c0_17] : memref<128x256xf32, #tpu.memory_space<vmem>>, vector<128x256xf32>
      tpu.vector_store %arg16[%47, %c0_17], %43 {strides = array<i32>} : memref<128x256xf32, #tpu.memory_space<vmem>>, vector<128x256xf32>,
    } else {
    }
    %c1_i32 = arith.constant 1 : i32
    %5 = arith.cmpi sge, %arg0, %c1_i32 : i32
    %c3_i32 = arith.constant 3 : i32
    %6 = arith.cmpi sle, %arg0, %c3_i32 : i32
    %7 = arith.andi %5, %6 : i1
    %c2_i32 = arith.constant 2 : i32
    %c0_i32_1 = arith.constant 0 : i32
    %8 = arith.cmpi eq, %c2_i32, %c0_i32_1 : i32
    %c1_i32_2 = arith.constant 1 : i32
    %9 = arith.select %8, %c1_i32_2, %c2_i32 : i32
    %10 = arith.remsi %arg0, %9 : i32
    %c0_i32_3 = arith.constant 0 : i32
    %11 = arith.cmpi ne, %10, %c0_i32_3 : i32
    %c0_i32_4 = arith.constant 0 : i32
    %12 = arith.cmpi slt, %10, %c0_i32_4 : i32
    %c0_i32_5 = arith.constant 0 : i32
    %13 = arith.cmpi slt, %9, %c0_i32_5 : i32
    %14 = arith.xori %12, %13 : i1
    %15 = arith.andi %14, %11 : i1
    %16 = arith.addi %10, %9 : i32
    %17 = arith.select %15, %16, %10 : i32
    %c1_i32_6 = arith.constant 1 : i32
    %18 = arith.cmpi eq, %17, %c1_i32_6 : i32
    %19 = arith.andi %7, %18 : i1
    %20 = arith.extui %19 : i1 to i32
    %c0_i32_7 = arith.constant 0 : i32
    %21 = arith.cmpi ne, %20, %c0_i32_7 : i32
    scf.if %21 {
      %c0 = arith.constant 0 : index
      %c0_10 = arith.constant 0 : index
      %29 = vector.load %arg14[%c0, %c0_10] : memref<128x256xbf16, #tpu.memory_space<vmem>>, vector<128x256xbf16>
      %c0_11 = arith.constant 0 : index
      %c0_12 = arith.constant 0 : index
      %30 = vector.load %arg3[%c0_11, %c0_12] : memref<128x128xbf16, #tpu.memory_space<vmem>>, vector<128x128xbf16>
      %cst = arith.constant dense<0.000000e+00> : vector<128x256xf32>
      %31 = tpu.matmul %30, %29, %cst {dimension_numbers = #tpu.dot_dimension_numbers<[1], [0], [0], [1], [0, 0, 1, 1], [], []>} : vector<128x128xbf16>, vector<128x256xbf16>, vector<128x256xf32> -> vector<128x256xf32>
      %32 = arith.index_cast %1 : i32 to index
      %c0_13 = arith.constant 0 : index
      %33 = vector.load %arg14[%32, %c0_13] : memref<128x256xbf16, #tpu.memory_space<vmem>>, vector<128x256xbf16>
      %34 = arith.extf %33 : vector<128x256xbf16> to vector<128x256xf32>
      %c0_14 = arith.constant 0 : index
      %c0_15 = arith.constant 0 : index
      %35 = vector.load %arg11[%c0_14, %c0_15] : memref<1x256xf32, #tpu.memory_space<vmem>>, vector<1x256xf32>
      %36 = vector.broadcast %35 : vector<1x256xf32> to vector<128x256xf32>
      %37 = arith.mulf %31, %36 : vector<128x256xf32>
      %c0_16 = arith.constant 0 : index
      %c0_17 = arith.constant 0 : index
      %38 = vector.load %arg12[%c0_16, %c0_17] : memref<1x256xf32, #tpu.memory_space<vmem>>, vector<1x256xf32>
      %39 = vector.broadcast %38 : vector<1x256xf32> to vector<128x256xf32>
      %40 = arith.mulf %34, %39 : vector<128x256xf32>
      %41 = arith.addf %37, %40 : vector<128x256xf32>
      %42 = arith.truncf %41 : vector<128x256xf32> to vector<128x256xbf16>
      %43 = arith.index_cast %1 : i32 to index
      %c0_18 = arith.constant 0 : index
      %44 = vector.load %arg15[%43, %c0_18] : memref<128x256xbf16, #tpu.memory_space<vmem>>, vector<128x256xbf16>
      tpu.vector_store %arg15[%43, %c0_18], %42 {strides = array<i32>} : memref<128x256xbf16, #tpu.memory_space<vmem>>, vector<128x256xbf16>,
      %45 = arith.index_cast %1 : i32 to index
      %c0_19 = arith.constant 0 : index
      %46 = vector.load %arg16[%45, %c0_19] : memref<128x256xf32, #tpu.memory_space<vmem>>, vector<128x256xf32>
      %47 = arith.addf %46, %41 : vector<128x256xf32>
      %48 = arith.index_cast %1 : i32 to index
      %c0_20 = arith.constant 0 : index
      %49 = vector.load %arg16[%48, %c0_20] : memref<128x256xf32, #tpu.memory_space<vmem>>, vector<128x256xf32>
      tpu.vector_store %arg16[%48, %c0_20], %47 {strides = array<i32>} : memref<128x256xf32, #tpu.memory_space<vmem>>, vector<128x256xf32>,
      %c3_i32_21 = arith.constant 3 : i32
      %50 = arith.cmpi eq, %arg0, %c3_i32_21 : i32
      %51 = arith.extui %50 : i1 to i32
      %c0_i32_22 = arith.constant 0 : i32
      %52 = arith.cmpi ne, %51, %c0_i32_22 : i32
      scf.if %52 {
        %c0_i32_23 = arith.constant 0 : i32
        %53 = arith.cmpi eq, %arg1, %c0_i32_23 : i32
        %54 = arith.extui %53 : i1 to i32
        %c0_i32_24 = arith.constant 0 : i32
        %55 = arith.cmpi ne, %54, %c0_i32_24 : i32
        scf.if %55 {
          %cst_35 = arith.constant 0.000000e+00 : f32
          %67 = vector.broadcast %cst_35 : f32 to vector<1x256xf32>
          %c0_36 = arith.constant 0 : index
          %c0_37 = arith.constant 0 : index
          %68 = vector.load %arg17[%c0_36, %c0_37] : memref<1x256xf32, #tpu.memory_space<vmem>>, vector<1x256xf32>
          tpu.vector_store %arg17[%c0_36, %c0_37], %67 {strides = array<i32>} : memref<1x256xf32, #tpu.memory_space<vmem>>, vector<1x256xf32>,
          %cst_38 = arith.constant 0.000000e+00 : f32
          %69 = vector.broadcast %cst_38 : f32 to vector<1x256xf32>
          %c0_39 = arith.constant 0 : index
          %c0_40 = arith.constant 0 : index
          %70 = vector.load %arg18[%c0_39, %c0_40] : memref<1x256xf32, #tpu.memory_space<vmem>>, vector<1x256xf32>
          tpu.vector_store %arg18[%c0_39, %c0_40], %69 {strides = array<i32>} : memref<1x256xf32, #tpu.memory_space<vmem>>, vector<1x256xf32>,
        } else {
        }
        %c0_25 = arith.constant 0 : index
        %c0_26 = arith.constant 0 : index
        %56 = vector.load %arg17[%c0_25, %c0_26] : memref<1x256xf32, #tpu.memory_space<vmem>>, vector<1x256xf32>
        %cst_27 = arith.constant dense<0.000000e+00> : vector<256xf32>
        %57 = vector.multi_reduction <add>, %47, %cst_27 [0] : vector<128x256xf32> to vector<256xf32>
        %58 = vector.shape_cast %57 : vector<256xf32> to vector<1x256xf32>
        %59 = arith.addf %56, %58 : vector<1x256xf32>
        %c0_28 = arith.constant 0 : index
        %c0_29 = arith.constant 0 : index
        %60 = vector.load %arg17[%c0_28, %c0_29] : memref<1x256xf32, #tpu.memory_space<vmem>>, vector<1x256xf32>
        tpu.vector_store %arg17[%c0_28, %c0_29], %59 {strides = array<i32>} : memref<1x256xf32, #tpu.memory_space<vmem>>, vector<1x256xf32>,
        %c0_30 = arith.constant 0 : index
        %c0_31 = arith.constant 0 : index
        %61 = vector.load %arg18[%c0_30, %c0_31] : memref<1x256xf32, #tpu.memory_space<vmem>>, vector<1x256xf32>
        %62 = arith.mulf %47, %47 : vector<128x256xf32>
        %cst_32 = arith.constant dense<0.000000e+00> : vector<256xf32>
        %63 = vector.multi_reduction <add>, %62, %cst_32 [0] : vector<128x256xf32> to vector<256xf32>
        %64 = vector.shape_cast %63 : vector<256xf32> to vector<1x256xf32>
        %65 = arith.addf %61, %64 : vector<1x256xf32>
        %c0_33 = arith.constant 0 : index
        %c0_34 = arith.constant 0 : index
        %66 = vector.load %arg18[%c0_33, %c0_34] : memref<1x256xf32, #tpu.memory_space<vmem>>, vector<1x256xf32>
        tpu.vector_store %arg18[%c0_33, %c0_34], %65 {strides = array<i32>} : memref<1x256xf32, #tpu.memory_space<vmem>>, vector<1x256xf32>,
      } else {
      }
    } else {
    }
    %true = arith.constant true
    %22 = arith.xori %18, %true : i1
    %23 = arith.andi %7, %22 : i1
    %24 = arith.extui %23 : i1 to i32
    %c0_i32_8 = arith.constant 0 : i32
    %25 = arith.cmpi ne, %24, %c0_i32_8 : i32
    scf.if %25 {
      %c0 = arith.constant 0 : index
      %c0_10 = arith.constant 0 : index
      %29 = vector.load %arg15[%c0, %c0_10] : memref<128x256xbf16, #tpu.memory_space<vmem>>, vector<128x256xbf16>
      %c0_11 = arith.constant 0 : index
      %c0_12 = arith.constant 0 : index
      %30 = vector.load %arg3[%c0_11, %c0_12] : memref<128x128xbf16, #tpu.memory_space<vmem>>, vector<128x128xbf16>
      %cst = arith.constant dense<0.000000e+00> : vector<128x256xf32>
      %31 = tpu.matmul %30, %29, %cst {dimension_numbers = #tpu.dot_dimension_numbers<[1], [0], [0], [1], [0, 0, 1, 1], [], []>} : vector<128x128xbf16>, vector<128x256xbf16>, vector<128x256xf32> -> vector<128x256xf32>
      %32 = arith.index_cast %1 : i32 to index
      %c0_13 = arith.constant 0 : index
      %33 = vector.load %arg15[%32, %c0_13] : memref<128x256xbf16, #tpu.memory_space<vmem>>, vector<128x256xbf16>
      %34 = arith.extf %33 : vector<128x256xbf16> to vector<128x256xf32>
      %c0_14 = arith.constant 0 : index
      %c0_15 = arith.constant 0 : index
      %35 = vector.load %arg11[%c0_14, %c0_15] : memref<1x256xf32, #tpu.memory_space<vmem>>, vector<1x256xf32>
      %36 = vector.broadcast %35 : vector<1x256xf32> to vector<128x256xf32>
      %37 = arith.mulf %31, %36 : vector<128x256xf32>
      %c0_16 = arith.constant 0 : index
      %c0_17 = arith.constant 0 : index
      %38 = vector.load %arg12[%c0_16, %c0_17] : memref<1x256xf32, #tpu.memory_space<vmem>>, vector<1x256xf32>
      %39 = vector.broadcast %38 : vector<1x256xf32> to vector<128x256xf32>
      %40 = arith.mulf %34, %39 : vector<128x256xf32>
      %41 = arith.addf %37, %40 : vector<128x256xf32>
      %42 = arith.truncf %41 : vector<128x256xf32> to vector<128x256xbf16>
      %43 = arith.index_cast %1 : i32 to index
      %c0_18 = arith.constant 0 : index
      %44 = vector.load %arg14[%43, %c0_18] : memref<128x256xbf16, #tpu.memory_space<vmem>>, vector<128x256xbf16>
      tpu.vector_store %arg14[%43, %c0_18], %42 {strides = array<i32>} : memref<128x256xbf16, #tpu.memory_space<vmem>>, vector<128x256xbf16>,
      %45 = arith.index_cast %1 : i32 to index
      %c0_19 = arith.constant 0 : index
      %46 = vector.load %arg16[%45, %c0_19] : memref<128x256xf32, #tpu.memory_space<vmem>>, vector<128x256xf32>
      %47 = arith.addf %46, %41 : vector<128x256xf32>
      %48 = arith.index_cast %1 : i32 to index
      %c0_20 = arith.constant 0 : index
      %49 = vector.load %arg16[%48, %c0_20] : memref<128x256xf32, #tpu.memory_space<vmem>>, vector<128x256xf32>
      tpu.vector_store %arg16[%48, %c0_20], %47 {strides = array<i32>} : memref<128x256xf32, #tpu.memory_space<vmem>>, vector<128x256xf32>,
      %c3_i32_21 = arith.constant 3 : i32
      %50 = arith.cmpi eq, %arg0, %c3_i32_21 : i32
      %51 = arith.extui %50 : i1 to i32
      %c0_i32_22 = arith.constant 0 : i32
      %52 = arith.cmpi ne, %51, %c0_i32_22 : i32
      scf.if %52 {
        %c0_i32_23 = arith.constant 0 : i32
        %53 = arith.cmpi eq, %arg1, %c0_i32_23 : i32
        %54 = arith.extui %53 : i1 to i32
        %c0_i32_24 = arith.constant 0 : i32
        %55 = arith.cmpi ne, %54, %c0_i32_24 : i32
        scf.if %55 {
          %cst_35 = arith.constant 0.000000e+00 : f32
          %67 = vector.broadcast %cst_35 : f32 to vector<1x256xf32>
          %c0_36 = arith.constant 0 : index
          %c0_37 = arith.constant 0 : index
          %68 = vector.load %arg17[%c0_36, %c0_37] : memref<1x256xf32, #tpu.memory_space<vmem>>, vector<1x256xf32>
          tpu.vector_store %arg17[%c0_36, %c0_37], %67 {strides = array<i32>} : memref<1x256xf32, #tpu.memory_space<vmem>>, vector<1x256xf32>,
          %cst_38 = arith.constant 0.000000e+00 : f32
          %69 = vector.broadcast %cst_38 : f32 to vector<1x256xf32>
          %c0_39 = arith.constant 0 : index
          %c0_40 = arith.constant 0 : index
          %70 = vector.load %arg18[%c0_39, %c0_40] : memref<1x256xf32, #tpu.memory_space<vmem>>, vector<1x256xf32>
          tpu.vector_store %arg18[%c0_39, %c0_40], %69 {strides = array<i32>} : memref<1x256xf32, #tpu.memory_space<vmem>>, vector<1x256xf32>,
        } else {
        }
        %c0_25 = arith.constant 0 : index
        %c0_26 = arith.constant 0 : index
        %56 = vector.load %arg17[%c0_25, %c0_26] : memref<1x256xf32, #tpu.memory_space<vmem>>, vector<1x256xf32>
        %cst_27 = arith.constant dense<0.000000e+00> : vector<256xf32>
        %57 = vector.multi_reduction <add>, %47, %cst_27 [0] : vector<128x256xf32> to vector<256xf32>
        %58 = vector.shape_cast %57 : vector<256xf32> to vector<1x256xf32>
        %59 = arith.addf %56, %58 : vector<1x256xf32>
        %c0_28 = arith.constant 0 : index
        %c0_29 = arith.constant 0 : index
        %60 = vector.load %arg17[%c0_28, %c0_29] : memref<1x256xf32, #tpu.memory_space<vmem>>, vector<1x256xf32>
        tpu.vector_store %arg17[%c0_28, %c0_29], %59 {strides = array<i32>} : memref<1x256xf32, #tpu.memory_space<vmem>>, vector<1x256xf32>,
        %c0_30 = arith.constant 0 : index
        %c0_31 = arith.constant 0 : index
        %61 = vector.load %arg18[%c0_30, %c0_31] : memref<1x256xf32, #tpu.memory_space<vmem>>, vector<1x256xf32>
        %62 = arith.mulf %47, %47 : vector<128x256xf32>
        %cst_32 = arith.constant dense<0.000000e+00> : vector<256xf32>
        %63 = vector.multi_reduction <add>, %62, %cst_32 [0] : vector<128x256xf32> to vector<256xf32>
        %64 = vector.shape_cast %63 : vector<256xf32> to vector<1x256xf32>
        %65 = arith.addf %61, %64 : vector<1x256xf32>
        %c0_33 = arith.constant 0 : index
        %c0_34 = arith.constant 0 : index
        %66 = vector.load %arg18[%c0_33, %c0_34] : memref<1x256xf32, #tpu.memory_space<vmem>>, vector<1x256xf32>
        tpu.vector_store %arg18[%c0_33, %c0_34], %65 {strides = array<i32>} : memref<1x256xf32, #tpu.memory_space<vmem>>, vector<1x256xf32>,
      } else {
      }
    } else {
    }
    %c4_i32 = arith.constant 4 : i32
    %26 = arith.cmpi eq, %arg0, %c4_i32 : i32
    %27 = arith.extui %26 : i1 to i32
    %c0_i32_9 = arith.constant 0 : i32
    %28 = arith.cmpi ne, %27, %c0_i32_9 : i32
    scf.if %28 {
      %29 = arith.index_cast %1 : i32 to index
      %c0 = arith.constant 0 : index
      %30 = vector.load %arg16[%29, %c0] : memref<128x256xf32, #tpu.memory_space<vmem>>, vector<128x256xf32>
      %cst = arith.constant 2.500000e-01 : f32
      %31 = vector.broadcast %cst : f32 to vector<128x256xf32>
      %32 = arith.mulf %30, %31 : vector<128x256xf32>
      %c0_10 = arith.constant 0 : index
      %c0_11 = arith.constant 0 : index
      %33 = vector.load %arg17[%c0_10, %c0_11] : memref<1x256xf32, #tpu.memory_space<vmem>>, vector<1x256xf32>
      %cst_12 = arith.constant 7.812500e-03 : f32
      %34 = vector.broadcast %cst_12 : f32 to vector<1x256xf32>
      %35 = arith.mulf %33, %34 : vector<1x256xf32>
      %c0_13 = arith.constant 0 : index
      %c0_14 = arith.constant 0 : index
      %36 = vector.load %arg18[%c0_13, %c0_14] : memref<1x256xf32, #tpu.memory_space<vmem>>, vector<1x256xf32>
      %cst_15 = arith.constant 0.001953125 : f32
      %37 = vector.broadcast %cst_15 : f32 to vector<1x256xf32>
      %38 = arith.mulf %36, %37 : vector<1x256xf32>
      %39 = arith.mulf %35, %35 : vector<1x256xf32>
      %40 = arith.subf %38, %39 : vector<1x256xf32>
      %cst_16 = arith.constant 0.000000e+00 : f32
      %41 = vector.broadcast %cst_16 : f32 to vector<1x256xf32>
      %42 = arith.maximumf %40, %41 : vector<1x256xf32>
      %43 = vector.broadcast %35 : vector<1x256xf32> to vector<128x256xf32>
      %44 = arith.subf %32, %43 : vector<128x256xf32>
      %cst_17 = arith.constant 9.99999974E-6 : f32
      %45 = vector.broadcast %cst_17 : f32 to vector<1x256xf32>
      %46 = arith.addf %42, %45 : vector<1x256xf32>
      %47 = math.rsqrt %46 : vector<1x256xf32>
      %48 = vector.broadcast %47 : vector<1x256xf32> to vector<128x256xf32>
      %49 = arith.mulf %44, %48 : vector<128x256xf32>
      %c0_18 = arith.constant 0 : index
      %c0_19 = arith.constant 0 : index
      %50 = vector.load %arg6[%c0_18, %c0_19] : memref<1x256xf32, #tpu.memory_space<vmem>>, vector<1x256xf32>
      %51 = vector.broadcast %50 : vector<1x256xf32> to vector<128x256xf32>
      %52 = arith.mulf %49, %51 : vector<128x256xf32>
      %c0_20 = arith.constant 0 : index
      %c0_21 = arith.constant 0 : index
      %53 = vector.load %arg7[%c0_20, %c0_21] : memref<1x256xf32, #tpu.memory_space<vmem>>, vector<1x256xf32>
      %54 = vector.broadcast %53 : vector<1x256xf32> to vector<128x256xf32>
      %55 = arith.addf %52, %54 : vector<128x256xf32>
      %56 = arith.truncf %55 : vector<128x256xf32> to vector<128x256xbf16>
      %c0_22 = arith.constant 0 : index
      %c0_23 = arith.constant 0 : index
      %57 = vector.load %arg8[%c0_22, %c0_23] : memref<256x256xbf16, #tpu.memory_space<vmem>>, vector<256x256xbf16>
      %cst_24 = arith.constant dense<0.000000e+00> : vector<128x256xf32>
      %58 = tpu.matmul %56, %57, %cst_24 {dimension_numbers = #tpu.dot_dimension_numbers<[1], [0], [0], [1], [0, 0, 1, 1], [], []>} : vector<128x256xbf16>, vector<256x256xbf16>, vector<128x256xf32> -> vector<128x256xf32>
      %c0_25 = arith.constant 0 : index
      %c0_26 = arith.constant 0 : index
      %59 = vector.load %arg9[%c0_25, %c0_26] : memref<1x256xf32, #tpu.memory_space<vmem>>, vector<1x256xf32>
      %60 = vector.broadcast %59 : vector<1x256xf32> to vector<128x256xf32>
      %61 = arith.addf %58, %60 : vector<128x256xf32>
      %cst_27 = arith.constant 0.000000e+00 : f32
      %62 = vector.broadcast %cst_27 : f32 to vector<128x256xf32>
      %63 = arith.maximumf %61, %62 : vector<128x256xf32>
      %c0_28 = arith.constant 0 : index
      %c0_29 = arith.constant 0 : index
      %64 = vector.load %arg10[%c0_28, %c0_29] : memref<1x1xf32, #tpu.memory_space<vmem>>, vector<1x1xf32>
      %cst_30 = arith.constant 0.000000e+00 : f32
      %65 = vector.broadcast %cst_30 : f32 to vector<128x256xf32>
      %66 = arith.minimumf %61, %65 : vector<128x256xf32>
      %67 = vector.broadcast %64 : vector<1x1xf32> to vector<128x256xf32>
      %68 = arith.mulf %67, %66 : vector<128x256xf32>
      %69 = arith.addf %63, %68 : vector<128x256xf32>
      %c0_31 = arith.constant 0 : index
      %c0_32 = arith.constant 0 : index
      %70 = vector.load %arg13[%c0_31, %c0_32] : memref<128x256xf32, #tpu.memory_space<vmem>>, vector<128x256xf32>
      tpu.vector_store %arg13[%c0_31, %c0_32], %69 {strides = array<i32>} : memref<128x256xf32, #tpu.memory_space<vmem>>, vector<128x256xf32>,
    } else {
    }
    return
  }
  func.func @transform_0(%arg0: i32, %arg1: i32) -> (i32, i32) {
    %c0_i32 = arith.constant 0 : i32
    %0 = arith.cmpi eq, %arg0, %c0_i32 : i32
    %c0_i32_0 = arith.constant 0 : i32
    %1 = arith.select %0, %arg1, %c0_i32_0 : i32
    %c0_i32_1 = arith.constant 0 : i32
    %c0_i32_2 = arith.constant 0 : i32
    return %1, %c0_i32_1 : i32, i32
  }
  func.func @transform_1(%arg0: i32, %arg1: i32) -> (i32, i32) {
    %c1_i32 = arith.constant 1 : i32
    %0 = arith.cmpi sge, %arg0, %c1_i32 : i32
    %c3_i32 = arith.constant 3 : i32
    %1 = arith.cmpi sle, %arg0, %c3_i32 : i32
    %2 = arith.andi %0, %1 : i1
    %c0_i32 = arith.constant 0 : i32
    %3 = arith.select %2, %arg1, %c0_i32 : i32
    %c0_i32_0 = arith.constant 0 : i32
    %c0_i32_1 = arith.constant 0 : i32
    return %3, %c0_i32_0 : i32, i32
  }
  func.func @transform_2(%arg0: i32, %arg1: i32) -> (i32, i32) {
    %c0_i32 = arith.constant 0 : i32
    %c0_i32_0 = arith.constant 0 : i32
    %c0_i32_1 = arith.constant 0 : i32
    return %c0_i32, %c0_i32_0 : i32, i32
  }
  func.func @transform_3(%arg0: i32, %arg1: i32) -> (i32, i32) {
    %c0_i32 = arith.constant 0 : i32
    %c0_i32_0 = arith.constant 0 : i32
    %c0_i32_1 = arith.constant 0 : i32
    return %c0_i32, %c0_i32_0 : i32, i32
  }
  func.func @transform_4(%arg0: i32, %arg1: i32) -> (i32, i32) {
    %c0_i32 = arith.constant 0 : i32
    %c0_i32_0 = arith.constant 0 : i32
    %c0_i32_1 = arith.constant 0 : i32
    return %c0_i32, %c0_i32_0 : i32, i32
  }
  func.func @transform_5(%arg0: i32, %arg1: i32) -> (i32, i32) {
    %c0_i32 = arith.constant 0 : i32
    %c0_i32_0 = arith.constant 0 : i32
    %c0_i32_1 = arith.constant 0 : i32
    return %c0_i32, %c0_i32_0 : i32, i32
  }
  func.func @transform_6(%arg0: i32, %arg1: i32) -> (i32, i32) {
    %c0_i32 = arith.constant 0 : i32
    %c0_i32_0 = arith.constant 0 : i32
    %c0_i32_1 = arith.constant 0 : i32
    return %c0_i32, %c0_i32_0 : i32, i32
  }
  func.func @transform_7(%arg0: i32, %arg1: i32) -> (i32, i32) {
    %c0_i32 = arith.constant 0 : i32
    %c0_i32_0 = arith.constant 0 : i32
    %c0_i32_1 = arith.constant 0 : i32
    return %c0_i32, %c0_i32_0 : i32, i32
  }
  func.func @transform_8(%arg0: i32, %arg1: i32) -> (i32, i32) {
    %c0_i32 = arith.constant 0 : i32
    %c0_i32_0 = arith.constant 0 : i32
    %c0_i32_1 = arith.constant 0 : i32
    return %c0_i32, %c0_i32_0 : i32, i32
  }
  func.func @transform_9(%arg0: i32, %arg1: i32) -> (i32, i32) {
    %c0_i32 = arith.constant 0 : i32
    %c0_i32_0 = arith.constant 0 : i32
    %c0_i32_1 = arith.constant 0 : i32
    return %c0_i32, %c0_i32_0 : i32, i32
  }
  func.func @transform_10(%arg0: i32, %arg1: i32) -> (i32, i32) {
    %c0_i32 = arith.constant 0 : i32
    %c0_i32_0 = arith.constant 0 : i32
    %c0_i32_1 = arith.constant 0 : i32
    return %c0_i32, %c0_i32_0 : i32, i32
  }
  func.func @transform_11(%arg0: i32, %arg1: i32) -> (i32, i32) {
    %c4_i32 = arith.constant 4 : i32
    %0 = arith.cmpi eq, %arg0, %c4_i32 : i32
    %c0_i32 = arith.constant 0 : i32
    %1 = arith.select %0, %arg1, %c0_i32 : i32
    %c0_i32_0 = arith.constant 0 : i32
    %c0_i32_1 = arith.constant 0 : i32
    return %1, %c0_i32_0 : i32, i32
  }
}

</mosaic_0001>

<llo_original>
// kernel: tpu_custom_call.1
$region0: #{tpu_custom_call.1}
  #allocation0 [shape = 'u32[]', space=smem, size = 0x4, offset = 0x4, fixed_abs, tag = 'smem constant byte address 0x4 - core index']
  #allocation1 [shape = 'u32[144,128]{1,0:T(1,128)}', space=vmem, size = 0x12000, scoped, tag = 'internal scratch']
  #allocation2 [shape = 'bf16[128,256]{1,0:T(16,128)(2,1)}', space=vmem, size = 0x10000, scoped, tag = 'scratch operand']
  #allocation3 [shape = 'bf16[128,256]{1,0:T(16,128)(2,1)}', space=vmem, size = 0x10000, scoped, tag = 'scratch operand']
  #allocation4 [shape = 'f32[128,256]{1,0:T(8,128)}', space=vmem, size = 0x20000, scoped, tag = 'scratch operand']
  #allocation5 [shape = 'f32[1,256]{1,0:T(1,128)}', space=vmem, size = 0x400, scoped, tag = 'scratch operand']
  #allocation6 [shape = 'f32[1,256]{1,0:T(1,128)}', space=vmem, size = 0x400, scoped, tag = 'scratch operand']
  #allocation7 [shape = 'f32[1,1]{1,0:T(1,128)S(1)}', space=vmem, size = 0x200, scoped, tag = 'scoped memory for tpu_custom_call.1']
  %s0 = inlined_call_operand.hbm [shape: bf16[128,128], index: 0, kind: input, shape index: {}]
  %s1 = inlined_call_operand.hbm [shape: bf16[128,128], index: 1, kind: input, shape index: {}]
  %s2 = inlined_call_operand.hbm [shape: bf16[128,256], index: 2, kind: input, shape index: {}]
  %s3 = inlined_call_operand.vmem [shape: f32[1,256], index: 3, kind: input, shape index: {}]
  %s4 = inlined_call_operand.vmem [shape: f32[1,256], index: 4, kind: input, shape index: {}]
  %s5 = inlined_call_operand.vmem [shape: f32[1,256], index: 5, kind: input, shape index: {}]
  %s6 = inlined_call_operand.hbm [shape: bf16[256,256], index: 6, kind: input, shape index: {}]
  %s7 = inlined_call_operand.vmem [shape: f32[1,256], index: 7, kind: input, shape index: {}]
  %s8 = inlined_call_operand.<no memory space> [shape: f32[1,1], index: 8, kind: input, shape index: {}]
  %s9 = inlined_call_operand.vmem [shape: f32[1,256], index: 9, kind: input, shape index: {}]
  %s10 = inlined_call_operand.vmem [shape: f32[1,256], index: 10, kind: input, shape index: {}]
  %s11 = inlined_call_operand.hbm [shape: f32[128,256], index: 11, kind: output, shape index: {}]
  %s12 = sld [smem:[#allocation0]]
  $region125: #{tpu_custom_call.1} parent=0
    _
  %s14 = ssub.s32 1, %s12
  %s15 = scalar_select 0, %s14, %s12
  %v16 = vstv %s8
  %17 = vst [vmem:[#allocation7] sm:$0x1] %v16
  $region1: #{tpu_custom_call.1} parent=0
    #allocation8 [shape = 'u8[65536]{0}', space=vmem, size = 0x10000, scoped, tag = 'input window, operand 0']
    #allocation9 [shape = 's32[2]{0}', space=sflag, size = 0x8, scoped, tag = 'scoped memory for tpu_custom_call.1']
    #allocation10 [shape = 's32[2]{0}', space=sflag, size = 0x8, scoped, tag = 'scoped memory for tpu_custom_call.1']
    #allocation11 [shape = 'u8[65536]{0}', space=vmem, size = 0x10000, scoped, tag = 'input window, operand 1']
    #allocation12 [shape = 's32[2]{0}', space=sflag, size = 0x8, scoped, tag = 'scoped memory for tpu_custom_call.1']
    #allocation13 [shape = 'u8[65536]{0}', space=vmem, size = 0x10000, scoped, tag = 'input window, operand 2, single buffered']
    #allocation14 [shape = 'u8[131072]{0}', space=vmem, size = 0x20000, scoped, tag = 'input window, operand 6, single buffered']
    #allocation15 [shape = 's32[1]{0}', space=sflag, size = 0x4, scoped, tag = 'scoped memory for tpu_custom_call.1']
    #allocation16 [shape = 'u8[262144]{0}', space=vmem, size = 0x40000, scoped, tag = 'output window, operand 0']
    %18 = vsyncpa [#allocation9], 0
    %s19 = scalar_lea.sflag [#allocation9], 1
    %20 = vsyncpa %s19, 0
    %21 = vsyncpa [#allocation12], 0
    %s22 = scalar_lea.sflag [#allocation12], 1
    %23 = vsyncpa %s22, 0
    %24 = vsyncpa [#allocation15], 0
    %25 = vsyncpa [#allocation10], 0
    %s26 = scalar_lea.sflag [#allocation10], 1
    %27 = vsyncpa %s26, 0
    loop: start=0, step=1, limit=7
    $region2: #{tpu_custom_call.1} parent=1 // loop_pre_header
      _
    $region3: #{tpu_custom_call.1} parent=1 // loop_header
      %s29 = sphi 0, %s33
      %p30 = scmp.ge.s32.totalorder %s29, 7
      %s36 = sphi 0, %s48
      %s37 = sphi 0, %s44
      %s38 = sphi 0, %s36
      %s39 = sphi 0, %s37
      %s40 = sphi 0, %s38
      %s41 = sphi 0, %s39
      %s55 = sphi 0, %s57
      %s58 = sphi 0, %s55
      %s59 = sphi 0, %s58
      %s75 = sphi 0, %s59
      %s91 = sphi 0, %s93
      %s94 = sphi 0, %s91
      %s95 = sphi 0, %s94
      %s111 = sphi 0, %s95
      %s115 = sphi 0, %s115
      %s117 = sphi 0, %s115
      %s118 = sphi 0, %s117
      %s132 = sphi 0, %s118
      %s136 = sphi 0, %s136
      %s138 = sphi 0, %s136
      %s139 = sphi 0, %s138
      %s153 = sphi 0, %s139
      %s157 = sphi 0, %s157
      %s159 = sphi 0, %s157
      %s160 = sphi 0, %s159
      %s174 = sphi 0, %s160
      %s178 = sphi 0, %s178
      %s180 = sphi 0, %s178
      %s181 = sphi 0, %s180
      %s195 = sphi 0, %s181
      %s199 = sphi 0, %s199
      %s201 = sphi 0, %s199
      %s202 = sphi 0, %s201
      %s216 = sphi 0, %s202
      %s220 = sphi 0, %s220
      %s222 = sphi 0, %s220
      %s223 = sphi 0, %s222
      %s237 = sphi 0, %s223
      %s241 = sphi 0, %s241
      %s243 = sphi 0, %s241
      %s244 = sphi 0, %s243
      %s258 = sphi 0, %s244
      %s262 = sphi 0, %s262
      %s264 = sphi 0, %s262
      %s265 = sphi 0, %s264
      %s279 = sphi 0, %s265
      %s283 = sphi 0, %s283
      %s285 = sphi 0, %s283
      %s286 = sphi 0, %s285
      %s300 = sphi 0, %s286
      %s310 = sphi 0, %s312
      %s313 = sphi 0, %s310
      %s314 = sphi 0, %s313
      %s330 = sphi 0, %s314
    $region4: #{tpu_custom_call.1} parent=1 // loop_header_branch
      %32 = sbr.rel (%p30) target = $region8
    $region5: #{tpu_custom_call.1} parent=1 // loop_body
      %s34 = ssub.s32 %s29, 1
      %s35 = ssub.s32 %s29, 2
      %s42 = sadd.s32 1, %s37
      %p43 = scmp.ge.s32.totalorder %s42, 1
      %s44 = scalar_select %p43, 0, %s42
      %s45 = sadd.s32 1, %s36
      %s46 = scalar_select %p43, %s45, %s36
      %p47 = scmp.ge.s32.totalorder %s46, 5
      %s48 = scalar_select %p47, 0, %s46
      %p49 = scmp.eq.s32.totalorder %s36, 0
      %s50 = scalar_select %p49, %s37, 0
      %p51 = scmp.eq.s32.totalorder %s48, 0
      %s52 = scalar_select %p51, %s44, 0
      %s53 = ssub.s32 %s50, %s52
      %p54 = scmp.eq.s32.totalorder %s53, 0
      %s56 = sadd.s32 %s55, 1
      %s57 = scalar_select %p54, %s55, %s56
      %p60 = pneg %p54
      %p61 = scmp.eq.s32.totalorder %s29, 4
      %p62 = por %p60, %p61
      %p63 = scmp.ne.s32.totalorder %s55, %s58
      %p64 = scmp.eq.s32.totalorder %s29, 0
      %p65 = por %p63, %p64
      %p66 = scmp.ne.s32.totalorder %s55, %s58
      %p67 = scmp.eq.s32.totalorder %s34, 4
      %p68 = por %p66, %p67
      %p69 = scmp.ne.s32.totalorder %s58, %s59
      %p70 = scmp.eq.s32.totalorder %s34, 0
      %p71 = por %p69, %p70
      %p72 = scmp.ne.s32.totalorder %s58, %s59
      %p73 = scmp.eq.s32.totalorder %s35, 4
      %p74 = por %p72, %p73
      %p76 = scmp.ne.s32.totalorder %s59, %s75
      %p77 = scmp.eq.s32.totalorder %s35, 0
      %p78 = por %p76, %p77
      %p79 = scmp.ge.s32.totalorder %s36, 1
      %p80 = scmp.le.s32.totalorder %s36, 3
      %p81 = pnand %p79, %p80
      %p82 = pneg %p81
      %s83 = scalar_select %p82, %s37, 0
      %p84 = scmp.ge.s32.totalorder %s48, 1
      %p85 = scmp.le.s32.totalorder %s48, 3
      %p86 = pnand %p84, %p85
      %p87 = pneg %p86
      %s88 = scalar_select %p87, %s44, 0
      %s89 = ssub.s32 %s83, %s88
      %p90 = scmp.eq.s32.totalorder %s89, 0
      %s92 = sadd.s32 %s91, 1
      %s93 = scalar_select %p90, %s91, %s92
      %p96 = pneg %p90
      %p97 = scmp.eq.s32.totalorder %s29, 4
      %p98 = por %p96, %p97
      %p99 = scmp.ne.s32.totalorder %s91, %s94
      %p100 = scmp.eq.s32.totalorder %s29, 0
      %p101 = por %p99, %p100
      %p102 = scmp.ne.s32.totalorder %s91, %s94
      %p103 = scmp.eq.s32.totalorder %s34, 4
      %p104 = por %p102, %p103
      %p105 = scmp.ne.s32.totalorder %s94, %s95
      %p106 = scmp.eq.s32.totalorder %s34, 0
      %p107 = por %p105, %p106
      %p108 = scmp.ne.s32.totalorder %s94, %s95
      %p109 = scmp.eq.s32.totalorder %s35, 4
      %p110 = por %p108, %p109
      %p112 = scmp.ne.s32.totalorder %s95, %s111
      %p113 = scmp.eq.s32.totalorder %s35, 0
      %p114 = por %p112, %p113
      %s116 = sadd.s32 %s115, 1
      %p119 = scmp.eq.s32.totalorder %s29, 4
      %p120 = scmp.ne.s32.totalorder %s115, %s117
      %p121 = scmp.eq.s32.totalorder %s29, 0
      %p122 = por %p120, %p121
      %p123 = scmp.ne.s32.totalorder %s115, %s117
      %p124 = scmp.eq.s32.totalorder %s34, 4
      %p125 = por %p123, %p124
      %p126 = scmp.ne.s32.totalorder %s117, %s118
      %p127 = scmp.eq.s32.totalorder %s34, 0
      %p128 = por %p126, %p127
      %p129 = scmp.ne.s32.totalorder %s117, %s118
      %p130 = scmp.eq.s32.totalorder %s35, 4
      %p131 = por %p129, %p130
      %p133 = scmp.ne.s32.totalorder %s118, %s132
      %p134 = scmp.eq.s32.totalorder %s35, 0
      %p135 = por %p133, %p134
      %s137 = sadd.s32 %s136, 1
      %p140 = scmp.eq.s32.totalorder %s29, 4
      %p141 = scmp.ne.s32.totalorder %s136, %s138
      %p142 = scmp.eq.s32.totalorder %s29, 0
      %p143 = por %p141, %p142
      %p144 = scmp.ne.s32.totalorder %s136, %s138
      %p145 = scmp.eq.s32.totalorder %s34, 4
      %p146 = por %p144, %p145
      %p147 = scmp.ne.s32.totalorder %s138, %s139
      %p148 = scmp.eq.s32.totalorder %s34, 0
      %p149 = por %p147, %p148
      %p150 = scmp.ne.s32.totalorder %s138, %s139
      %p151 = scmp.eq.s32.totalorder %s35, 4
      %p152 = por %p150, %p151
      %p154 = scmp.ne.s32.totalorder %s139, %s153
      %p155 = scmp.eq.s32.totalorder %s35, 0
      %p156 = por %p154, %p155
      %s158 = sadd.s32 %s157, 1
      %p161 = scmp.eq.s32.totalorder %s29, 4
      %p162 = scmp.ne.s32.totalorder %s157, %s159
      %p163 = scmp.eq.s32.totalorder %s29, 0
      %p164 = por %p162, %p163
      %p165 = scmp.ne.s32.totalorder %s157, %s159
      %p166 = scmp.eq.s32.totalorder %s34, 4
      %p167 = por %p165, %p166
      %p168 = scmp.ne.s32.totalorder %s159, %s160
      %p169 = scmp.eq.s32.totalorder %s34, 0
      %p170 = por %p168, %p169
      %p171 = scmp.ne.s32.totalorder %s159, %s160
      %p172 = scmp.eq.s32.totalorder %s35, 4
      %p173 = por %p171, %p172
      %p175 = scmp.ne.s32.totalorder %s160, %s174
      %p176 = scmp.eq.s32.totalorder %s35, 0
      %p177 = por %p175, %p176
      %s179 = sadd.s32 %s178, 1
      %p182 = scmp.eq.s32.totalorder %s29, 4
      %p183 = scmp.ne.s32.totalorder %s178, %s180
      %p184 = scmp.eq.s32.totalorder %s29, 0
      %p185 = por %p183, %p184
      %p186 = scmp.ne.s32.totalorder %s178, %s180
      %p187 = scmp.eq.s32.totalorder %s34, 4
      %p188 = por %p186, %p187
      %p189 = scmp.ne.s32.totalorder %s180, %s181
      %p190 = scmp.eq.s32.totalorder %s34, 0
      %p191 = por %p189, %p190
      %p192 = scmp.ne.s32.totalorder %s180, %s181
      %p193 = scmp.eq.s32.totalorder %s35, 4
      %p194 = por %p192, %p193
      %p196 = scmp.ne.s32.totalorder %s181, %s195
      %p197 = scmp.eq.s32.totalorder %s35, 0
      %p198 = por %p196, %p197
      %s200 = sadd.s32 %s199, 1
      %p203 = scmp.eq.s32.totalorder %s29, 4
      %p204 = scmp.ne.s32.totalorder %s199, %s201
      %p205 = scmp.eq.s32.totalorder %s29, 0
      %p206 = por %p204, %p205
      %p207 = scmp.ne.s32.totalorder %s199, %s201
      %p208 = scmp.eq.s32.totalorder %s34, 4
      %p209 = por %p207, %p208
      %p210 = scmp.ne.s32.totalorder %s201, %s202
      %p211 = scmp.eq.s32.totalorder %s34, 0
      %p212 = por %p210, %p211
      %p213 = scmp.ne.s32.totalorder %s201, %s202
      %p214 = scmp.eq.s32.totalorder %s35, 4
      %p215 = por %p213, %p214
      %p217 = scmp.ne.s32.totalorder %s202, %s216
      %p218 = scmp.eq.s32.totalorder %s35, 0
      %p219 = por %p217, %p218
      %s221 = sadd.s32 %s220, 1
      %p224 = scmp.eq.s32.totalorder %s29, 4
      %p225 = scmp.ne.s32.totalorder %s220, %s222
      %p226 = scmp.eq.s32.totalorder %s29, 0
      %p227 = por %p225, %p226
      %p228 = scmp.ne.s32.totalorder %s220, %s222
      %p229 = scmp.eq.s32.totalorder %s34, 4
      %p230 = por %p228, %p229
      %p231 = scmp.ne.s32.totalorder %s222, %s223
      %p232 = scmp.eq.s32.totalorder %s34, 0
      %p233 = por %p231, %p232
      %p234 = scmp.ne.s32.totalorder %s222, %s223
      %p235 = scmp.eq.s32.totalorder %s35, 4
      %p236 = por %p234, %p235
      %p238 = scmp.ne.s32.totalorder %s223, %s237
      %p239 = scmp.eq.s32.totalorder %s35, 0
      %p240 = por %p238, %p239
      %s242 = sadd.s32 %s241, 1
      %p245 = scmp.eq.s32.totalorder %s29, 4
      %p246 = scmp.ne.s32.totalorder %s241, %s243
      %p247 = scmp.eq.s32.totalorder %s29, 0
      %p248 = por %p246, %p247
      %p249 = scmp.ne.s32.totalorder %s241, %s243
      %p250 = scmp.eq.s32.totalorder %s34, 4
      %p251 = por %p249, %p250
      %p252 = scmp.ne.s32.totalorder %s243, %s244
      %p253 = scmp.eq.s32.totalorder %s34, 0
      %p254 = por %p252, %p253
      %p255 = scmp.ne.s32.totalorder %s243, %s244
      %p256 = scmp.eq.s32.totalorder %s35, 4
      %p257 = por %p255, %p256
      %p259 = scmp.ne.s32.totalorder %s244, %s258
      %p260 = scmp.eq.s32.totalorder %s35, 0
      %p261 = por %p259, %p260
      %s263 = sadd.s32 %s262, 1
      %p266 = scmp.eq.s32.totalorder %s29, 4
      %p267 = scmp.ne.s32.totalorder %s262, %s264
      %p268 = scmp.eq.s32.totalorder %s29, 0
      %p269 = por %p267, %p268
      %p270 = scmp.ne.s32.totalorder %s262, %s264
      %p271 = scmp.eq.s32.totalorder %s34, 4
      %p272 = por %p270, %p271
      %p273 = scmp.ne.s32.totalorder %s264, %s265
      %p274 = scmp.eq.s32.totalorder %s34, 0
      %p275 = por %p273, %p274
      %p276 = scmp.ne.s32.totalorder %s264, %s265
      %p277 = scmp.eq.s32.totalorder %s35, 4
      %p278 = por %p276, %p277
      %p280 = scmp.ne.s32.totalorder %s265, %s279
      %p281 = scmp.eq.s32.totalorder %s35, 0
      %p282 = por %p280, %p281
      %s284 = sadd.s32 %s283, 1
      %p287 = scmp.eq.s32.totalorder %s29, 4
      %p288 = scmp.ne.s32.totalorder %s283, %s285
      %p289 = scmp.eq.s32.totalorder %s29, 0
      %p290 = por %p288, %p289
      %p291 = scmp.ne.s32.totalorder %s283, %s285
      %p292 = scmp.eq.s32.totalorder %s34, 4
      %p293 = por %p291, %p292
      %p294 = scmp.ne.s32.totalorder %s285, %s286
      %p295 = scmp.eq.s32.totalorder %s34, 0
      %p296 = por %p294, %p295
      %p297 = scmp.ne.s32.totalorder %s285, %s286
      %p298 = scmp.eq.s32.totalorder %s35, 4
      %p299 = por %p297, %p298
      %p301 = scmp.ne.s32.totalorder %s286, %s300
      %p302 = scmp.eq.s32.totalorder %s35, 0
      %p303 = por %p301, %p302
      %p304 = scmp.eq.s32.totalorder %s36, 4
      %s305 = scalar_select %p304, %s37, 0
      %p306 = scmp.eq.s32.totalorder %s48, 4
      %s307 = scalar_select %p306, %s44, 0
      %s308 = ssub.s32 %s305, %s307
      %p309 = scmp.eq.s32.totalorder %s308, 0
      %s311 = sadd.s32 %s310, 1
      %s312 = scalar_select %p309, %s310, %s311
      %p315 = pneg %p309
      %p316 = scmp.eq.s32.totalorder %s29, 4
      %p317 = por %p315, %p316
      %p318 = scmp.ne.s32.totalorder %s310, %s313
      %p319 = scmp.eq.s32.totalorder %s29, 0
      %p320 = por %p318, %p319
      %p321 = scmp.ne.s32.totalorder %s310, %s313
      %p322 = scmp.eq.s32.totalorder %s34, 4
      %p323 = por %p321, %p322
      %p324 = scmp.ne.s32.totalorder %s313, %s314
      %p325 = scmp.eq.s32.totalorder %s34, 0
      %p326 = por %p324, %p325
      %p327 = scmp.ne.s32.totalorder %s313, %s314
      %p328 = scmp.eq.s32.totalorder %s35, 4
      %p329 = por %p327, %p328
      %p331 = scmp.ne.s32.totalorder %s314, %s330
      %p332 = scmp.eq.s32.totalorder %s35, 0
      %p333 = por %p331, %p332
      %p334 = scmp.le.s32.totalorder 1, %s29
      %p335 = scmp.lt.s32.totalorder %s29, 6
      %p336 = pnand %p334, %p335
      %p337 = pneg %p336
      // Predicated region
      $region9: #{tpu_custom_call.1} parent=5 // pred_check
        _
      $region10: #{tpu_custom_call.1} parent=5 // pred_check_branch
        %339 = sbr.rel (%p336) target = $region12
      $region11: #{tpu_custom_call.1} parent=5 // pred_region
        %s340 = ssub.s32 %s29, 1
        // Predicated region
        $region13: #{tpu_custom_call.1} parent=11 // pred_check
          %p341 = pneg %p128
        $region14: #{tpu_custom_call.1} parent=11 // pred_check_branch
          %343 = sbr.rel (%p341) target = $region16
        $region15: #{tpu_custom_call.1} parent=11 // pred_region
          %s345 = ssub.s32 2048, 2048
          %346 = vsyncadd [#allocation12], %s345
          %s347 = sshll.u32 [#allocation13], 4
          %s348 = int_to_ptr.vmem [resolvable:$true] %s347
          %353 = dma.hbm_to_vmem [thread:$0]  %s2, 2048, %s348, [#allocation12], 128, 128, 8
        $region16: #{tpu_custom_call.1} parent=11 // pred_fallthru
          _
        // Predicated region
        $region17: #{tpu_custom_call.1} parent=11 // pred_check
          %p354 = pneg %p149
        $region18: #{tpu_custom_call.1} parent=11 // pred_check_branch
          %356 = sbr.rel (%p354) target = $region20
        $region19: #{tpu_custom_call.1} parent=11 // pred_region
          _
        $region20: #{tpu_custom_call.1} parent=11 // pred_fallthru
          _
        // Predicated region
        $region21: #{tpu_custom_call.1} parent=11 // pred_check
          %p357 = pneg %p170
        $region22: #{tpu_custom_call.1} parent=11 // pred_check_branch
          %359 = sbr.rel (%p357) target = $region24
        $region23: #{tpu_custom_call.1} parent=11 // pred_region
          _
        $region24: #{tpu_custom_call.1} parent=11 // pred_fallthru
          _
        // Predicated region
        $region25: #{tpu_custom_call.1} parent=11 // pred_check
          %p360 = pneg %p191
        $region26: #{tpu_custom_call.1} parent=11 // pred_check_branch
          %362 = sbr.rel (%p360) target = $region28
        $region27: #{tpu_custom_call.1} parent=11 // pred_region
          _
        $region28: #{tpu_custom_call.1} parent=11 // pred_fallthru
          _
        // Predicated region
        $region29: #{tpu_custom_call.1} parent=11 // pred_check
          %p363 = pneg %p212
        $region30: #{tpu_custom_call.1} parent=11 // pred_check_branch
          %365 = sbr.rel (%p363) target = $region32
        $region31: #{tpu_custom_call.1} parent=11 // pred_region
          %s367 = ssub.s32 4096, 4096
          %368 = vsyncadd [#allocation15], %s367
          %s369 = sshll.u32 [#allocation14], 4
          %s370 = int_to_ptr.vmem [resolvable:$true] %s369
          %375 = dma.hbm_to_vmem [thread:$0]  %s6, 4096, %s370, [#allocation15], 128, 128, 8
        $region32: #{tpu_custom_call.1} parent=11 // pred_fallthru
          _
        // Predicated region
        $region33: #{tpu_custom_call.1} parent=11 // pred_check
          %p376 = pneg %p233
        $region34: #{tpu_custom_call.1} parent=11 // pred_check_branch
          %378 = sbr.rel (%p376) target = $region36
        $region35: #{tpu_custom_call.1} parent=11 // pred_region
          _
        $region36: #{tpu_custom_call.1} parent=11 // pred_fallthru
          _
        // Predicated region
        $region37: #{tpu_custom_call.1} parent=11 // pred_check
          %p379 = pneg %p254
        $region38: #{tpu_custom_call.1} parent=11 // pred_check_branch
          %381 = sbr.rel (%p379) target = $region40
        $region39: #{tpu_custom_call.1} parent=11 // pred_region
          _
        $region40: #{tpu_custom_call.1} parent=11 // pred_fallthru
          _
        // Predicated region
        $region41: #{tpu_custom_call.1} parent=11 // pred_check
          %p382 = pneg %p275
        $region42: #{tpu_custom_call.1} parent=11 // pred_check_branch
          %384 = sbr.rel (%p382) target = $region44
        $region43: #{tpu_custom_call.1} parent=11 // pred_region
          _
        $region44: #{tpu_custom_call.1} parent=11 // pred_fallthru
          _
        // Predicated region
        $region45: #{tpu_custom_call.1} parent=11 // pred_check
          %p385 = pneg %p296
        $region46: #{tpu_custom_call.1} parent=11 // pred_check_branch
          %387 = sbr.rel (%p385) target = $region48
        $region47: #{tpu_custom_call.1} parent=11 // pred_region
          _
        $region48: #{tpu_custom_call.1} parent=11 // pred_fallthru
          _
      $region12: #{tpu_custom_call.1} parent=5 // pred_fallthru
        _
      %p388 = scmp.lt.s32.totalorder %s29, 5
      // Predicated region
      $region49: #{tpu_custom_call.1} parent=5 // pred_check
        %p389 = pneg %p388
      $region50: #{tpu_custom_call.1} parent=5 // pred_check_branch
        %391 = sbr.rel (%p389) target = $region52
      $region51: #{tpu_custom_call.1} parent=5 // pred_region
        // Predicated region
        $region53: #{tpu_custom_call.1} parent=51 // pred_check
          %p392 = pneg %p65
        $region54: #{tpu_custom_call.1} parent=51 // pred_check_branch
          %394 = sbr.rel (%p392) target = $region56
        $region55: #{tpu_custom_call.1} parent=51 // pred_region
          %s395 = sand.u32 %s55, 1
          %s396 = scalar_lea.sflag [#allocation9], %s395
          %s397 = sand.u32 %s55, 1
          %s398 = smul.addr %s397, 64
          %s399 = scalar_lea.vmem [#allocation8], %s398
          %p400 = scmp.eq.s32.totalorder %s36, 0
          %s401 = scalar_select %p400, %s37, 0
          %s402 = smul.u32 16, %s401
          %s404 = ssub.s32 1024, 1024
          %405 = vsyncadd %s396, %s404
          %s406 = smul.addr %s402, 64
          %s407 = scalar_lea.hbm %s0, %s406
          %s408 = sshll.u32 %s399, 4
          %s409 = int_to_ptr.vmem [resolvable:$true] %s408
          %414 = dma.hbm_to_vmem [thread:$0]  %s407, 1024, %s409, %s396, 64, 64, 4
        $region56: #{tpu_custom_call.1} parent=51 // pred_fallthru
          _
        // Predicated region
        $region57: #{tpu_custom_call.1} parent=51 // pred_check
          %p415 = pneg %p101
        $region58: #{tpu_custom_call.1} parent=51 // pred_check_branch
          %417 = sbr.rel (%p415) target = $region60
        $region59: #{tpu_custom_call.1} parent=51 // pred_region
          %s418 = sand.u32 %s29, 1
          %s419 = scalar_lea.sflag [#allocation12], %s418
          %s420 = sand.u32 %s91, 1
          %s421 = smul.addr %s420, 64
          %s422 = scalar_lea.vmem [#allocation11], %s421
          %p423 = scmp.ge.s32.totalorder %s36, 1
          %p424 = scmp.le.s32.totalorder %s36, 3
          %p425 = pnand %p423, %p424
          %p426 = pneg %p425
          %s427 = scalar_select %p426, %s37, 0
          %s428 = smul.u32 16, %s427
          %s430 = ssub.s32 1024, 1024
          %431 = vsyncadd %s419, %s430
          %s432 = smul.addr %s428, 64
          %s433 = scalar_lea.hbm %s1, %s432
          %s434 = sshll.u32 %s422, 4
          %s435 = int_to_ptr.vmem [resolvable:$true] %s434
          %440 = dma.hbm_to_vmem [thread:$0]  %s433, 1024, %s435, %s419, 64, 64, 4
        $region60: #{tpu_custom_call.1} parent=51 // pred_fallthru
          _
      $region52: #{tpu_custom_call.1} parent=5 // pred_fallthru
        _
      %p441 = scmp.le.s32.totalorder 1, %s29
      %p442 = scmp.lt.s32.totalorder %s29, 6
      %p443 = pnand %p441, %p442
      %p444 = pneg %p443
      // Predicated region
      $region61: #{tpu_custom_call.1} parent=5 // pred_check
        _
      $region62: #{tpu_custom_call.1} parent=5 // pred_check_branch
        %446 = sbr.rel (%p443) target = $region64
      $region63: #{tpu_custom_call.1} parent=5 // pred_region
        %s447 = ssub.s32 %s29, 1
        %s448 = sand.u32 %s58, 1
        %s449 = scalar_lea.sflag [#allocation9], %s448
        %s450 = sand.u32 %s58, 1
        %s451 = smul.addr %s450, 64
        %s452 = scalar_lea.vmem [#allocation8], %s451
        // Predicated region
        $region65: #{tpu_custom_call.1} parent=63 // pred_check
          %p453 = pneg %p71
        $region66: #{tpu_custom_call.1} parent=63 // pred_check_branch
          %455 = sbr.rel (%p453) target = $region68
        $region67: #{tpu_custom_call.1} parent=63 // pred_region
          %456 = dma.done %s449, 1024
        $region68: #{tpu_custom_call.1} parent=63 // pred_fallthru
          _
        %s457 = sand.u32 %s34, 1
        %s458 = scalar_lea.sflag [#allocation12], %s457
        %s459 = sand.u32 %s94, 1
        %s460 = smul.addr %s459, 64
        %s461 = scalar_lea.vmem [#allocation11], %s460
        // Predicated region
        $region69: #{tpu_custom_call.1} parent=63 // pred_check
          %p462 = pneg %p107
        $region70: #{tpu_custom_call.1} parent=63 // pred_check_branch
          %464 = sbr.rel (%p462) target = $region72
        $region71: #{tpu_custom_call.1} parent=63 // pred_region
          %465 = dma.done %s458, 1024
        $region72: #{tpu_custom_call.1} parent=63 // pred_fallthru
          _
        // Predicated region
        $region73: #{tpu_custom_call.1} parent=63 // pred_check
          %p466 = pneg %p128
        $region74: #{tpu_custom_call.1} parent=63 // pred_check_branch
          %468 = sbr.rel (%p466) target = $region76
        $region75: #{tpu_custom_call.1} parent=63 // pred_region
          %469 = dma.done [#allocation12], 2048
        $region76: #{tpu_custom_call.1} parent=63 // pred_fallthru
          _
        // Predicated region
        $region77: #{tpu_custom_call.1} parent=63 // pred_check
          %p470 = pneg %p212
        $region78: #{tpu_custom_call.1} parent=63 // pred_check_branch
          %472 = sbr.rel (%p470) target = $region80
        $region79: #{tpu_custom_call.1} parent=63 // pred_region
          %473 = dma.done [#allocation15], 4096
        $region80: #{tpu_custom_call.1} parent=63 // pred_fallthru
          _
        %s474 = sand.u32 %s58, 1
        %s475 = scalar_lea.sflag [#allocation9], %s474
        %s476 = sand.u32 %s58, 1
        %s477 = smul.addr %s476, 64
        %s478 = scalar_lea.vmem [#allocation8], %s477
        %p479 = pneg %p71
        %p480 = pneg %p68
        %s481 = sand.u32 %s34, 1
        %s482 = scalar_lea.sflag [#allocation12], %s481
        %s483 = sand.u32 %s94, 1
        %s484 = smul.addr %s483, 64
        %s485 = scalar_lea.vmem [#allocation11], %s484
        %p486 = pneg %p107
        %p487 = pneg %p104
        %p488 = pneg %p128
        %p489 = pneg %p125
        %p490 = pneg %p149
        %p491 = pneg %p146
        %p492 = pneg %p170
        %p493 = pneg %p167
        %p494 = pneg %p191
        %p495 = pneg %p188
        %p496 = pneg %p212
        %p497 = pneg %p209
        %p498 = pneg %p233
        %p499 = pneg %p230
        %p500 = pneg %p254
        %p501 = pneg %p251
        %p502 = pneg %p275
        %p503 = pneg %p272
        %p504 = pneg %p296
        %p505 = pneg %p293
        %p506 = pneg %p326
        %p507 = pneg %p323
        %s508 = sand.u32 %s313, 1
        %s509 = scalar_lea.sflag [#allocation10], %s508
        %s510 = sand.u32 %s313, 1
        %s511 = smul.addr %s510, 256
        %s512 = scalar_lea.vmem [#allocation16], %s511
        %p513 = scmp.eq.s32.totalorder %s38, 0
        %s514 = scalar_select %p513, %s39, 0
        %s515 = smul.u32 16, %s514
        %p516 = scmp.ge.s32.totalorder %s38, 1
        %p517 = scmp.le.s32.totalorder %s38, 3
        %p518 = pnand %p516, %p517
        %p519 = pneg %p518
        %s520 = scalar_select %p519, %s39, 0
        %s521 = smul.u32 16, %s520
        %p522 = scmp.eq.s32.totalorder %s38, 4
        %s523 = scalar_select %p522, %s39, 0
        %s524 = smul.u32 16, %s523
        %s526 = smul.u32 %s39, 128
        %p527 = scmp.eq.s32.totalorder %s38, 0
        // Predicated region
        $region81: #{tpu_custom_call.1} parent=63 // pred_check
          %p528 = pneg %p527
        $region82: #{tpu_custom_call.1} parent=63 // pred_check_branch
          %530 = sbr.rel (%p528) target = $region84
        $region83: #{tpu_custom_call.1} parent=63 // pred_region
          %v531 = vld [vmem:[%s452] sm:$0xf]
          %v532 = vld [vmem:[%s452 + $0x4] sm:$0xf]
          %v533 = vld [vmem:[%s452 + $0x8] sm:$0xf]
          %v534 = vld [vmem:[%s452 + $0xc] sm:$0xf]
          %v535 = vld [vmem:[%s452 + $0x10] sm:$0xf]
          %v536 = vld [vmem:[%s452 + $0x14] sm:$0xf]
          %v537 = vld [vmem:[%s452 + $0x18] sm:$0xf]
          %v538 = vld [vmem:[%s452 + $0x1c] sm:$0xf]
          %v539 = vld [vmem:[%s452 + $0x20] sm:$0xf]
          %v540 = vld [vmem:[%s452 + $0x24] sm:$0xf]
          %v541 = vld [vmem:[%s452 + $0x28] sm:$0xf]
          %v542 = vld [vmem:[%s452 + $0x2c] sm:$0xf]
          %v543 = vld [vmem:[%s452 + $0x30] sm:$0xf]
          %v544 = vld [vmem:[%s452 + $0x34] sm:$0xf]
          %v545 = vld [vmem:[%s452 + $0x38] sm:$0xf]
          %v546 = vld [vmem:[%s452 + $0x3c] sm:$0xf]
          %v547 = vld [vmem:[#allocation13] sm:$0xff]
          %v548 = vld [vmem:[#allocation13 + $0x8] sm:$0xff]
          %v549 = vld [vmem:[#allocation13 + $0x10] sm:$0xff]
          %v550 = vld [vmem:[#allocation13 + $0x18] sm:$0xff]
          %v551 = vld [vmem:[#allocation13 + $0x20] sm:$0xff]
          %v552 = vld [vmem:[#allocation13 + $0x28] sm:$0xff]
          %v553 = vld [vmem:[#allocation13 + $0x30] sm:$0xff]
          %v554 = vld [vmem:[#allocation13 + $0x38] sm:$0xff]
          %v555 = vld [vmem:[#allocation13 + $0x40] sm:$0xff]
          %v556 = vld [vmem:[#allocation13 + $0x48] sm:$0xff]
          %v557 = vld [vmem:[#allocation13 + $0x50] sm:$0xff]
          %v558 = vld [vmem:[#allocation13 + $0x58] sm:$0xff]
          %v559 = vld [vmem:[#allocation13 + $0x60] sm:$0xff]
          %v560 = vld [vmem:[#allocation13 + $0x68] sm:$0xff]
          %v561 = vld [vmem:[#allocation13 + $0x70] sm:$0xff]
          %v562 = vld [vmem:[#allocation13 + $0x78] sm:$0xff]
          %v563 = vld [vmem:[%s3] sm:$0x3]
          %v565 = vlaneseq
          %v566 = vshrl.u32 %v565, 7
          %v567 = vsub.s32 0, %v566
          %v568 = vrot.slane %v563, %v567
          %v569 = vlaneseq
          %v570 = vshrl.u32 %v569, 7
          %v571 = vsub.s32 1, %v570
          %v572 = vrot.slane %v563, %v571
          %v591 = vunpack.c.l.b16 %v531
          %v592 = vunpack.c.l.b16 %v532
          %v593 = vunpack.c.l.b16 %v533
          %v594 = vunpack.c.l.b16 %v534
          %v595 = vunpack.c.l.b16 %v535
          %v596 = vunpack.c.l.b16 %v536
          %v597 = vunpack.c.l.b16 %v537
          %v598 = vunpack.c.l.b16 %v538
          %v599 = vunpack.c.l.b16 %v539
          %v600 = vunpack.c.l.b16 %v540
          %v601 = vunpack.c.l.b16 %v541
          %v602 = vunpack.c.l.b16 %v542
          %v603 = vunpack.c.l.b16 %v543
          %v604 = vunpack.c.l.b16 %v544
          %v605 = vunpack.c.l.b16 %v545
          %v606 = vunpack.c.l.b16 %v546
          %v607 = vpack.c.b16 %v592, %v591
          %v608 = vpack.c.b16 %v594, %v593
          %v609 = vpack.c.b16 %v596, %v595
          %v610 = vpack.c.b16 %v598, %v597
          %v611 = vpack.c.b16 %v600, %v599
          %v612 = vpack.c.b16 %v602, %v601
          %v613 = vpack.c.b16 %v604, %v603
          %v614 = vpack.c.b16 %v606, %v605
          %v639 = vunpack.c.l.b16 %v547
          %v640 = vunpack.c.h.b16 %v547
          %v641 = vunpack.c.l.b16 %v548
          %v642 = vunpack.c.h.b16 %v548
          %v643 = vunpack.c.l.b16 %v549
          %v644 = vunpack.c.h.b16 %v549
          %v645 = vunpack.c.l.b16 %v550
          %v646 = vunpack.c.h.b16 %v550
          %v647 = vunpack.c.l.b16 %v551
          %v648 = vunpack.c.h.b16 %v551
          %v649 = vunpack.c.l.b16 %v552
          %v650 = vunpack.c.h.b16 %v552
          %v651 = vunpack.c.l.b16 %v553
          %v652 = vunpack.c.h.b16 %v553
          %v653 = vunpack.c.l.b16 %v554
          %v654 = vunpack.c.h.b16 %v554
          %v655 = vunpack.c.l.b16 %v555
          %v656 = vunpack.c.h.b16 %v555
          %v657 = vunpack.c.l.b16 %v556
          %v658 = vunpack.c.h.b16 %v556
          %v659 = vunpack.c.l.b16 %v557
          %v660 = vunpack.c.h.b16 %v557
          %v661 = vunpack.c.l.b16 %v558
          %v662 = vunpack.c.h.b16 %v558
          %v663 = vunpack.c.l.b16 %v559
          %v664 = vunpack.c.h.b16 %v559
          %v665 = vunpack.c.l.b16 %v560
          %v666 = vunpack.c.h.b16 %v560
          %v667 = vunpack.c.l.b16 %v561
          %v668 = vunpack.c.h.b16 %v561
          %v669 = vunpack.c.l.b16 %v562
          %v670 = vunpack.c.h.b16 %v562
          %v671 = vpack.c.b16 %v641, %v639
          %v672 = vpack.c.b16 %v642, %v640
          %v673 = vpack.c.b16 %v645, %v643
          %v674 = vpack.c.b16 %v646, %v644
          %v675 = vpack.c.b16 %v649, %v647
          %v676 = vpack.c.b16 %v650, %v648
          %v677 = vpack.c.b16 %v653, %v651
          %v678 = vpack.c.b16 %v654, %v652
          %v679 = vpack.c.b16 %v657, %v655
          %v680 = vpack.c.b16 %v658, %v656
          %v681 = vpack.c.b16 %v661, %v659
          %v682 = vpack.c.b16 %v662, %v660
          %v683 = vpack.c.b16 %v665, %v663
          %v684 = vpack.c.b16 %v666, %v664
          %v685 = vpack.c.b16 %v669, %v667
          %v686 = vpack.c.b16 %v670, %v668
          %703 = vmatprep.subr.bf16.mxu0 %v672
          %704 = vmatpush1.bf16.msra.mxu0 %v671
          %705 = vmatprep.subr.bf16.mxu0 %v674
          %706 = vmatpush1.bf16.msra.mxu0 %v673
          %707 = vmatprep.subr.bf16.mxu0 %v676
          %708 = vmatpush1.bf16.msra.mxu0 %v675
          %709 = vmatprep.subr.bf16.mxu0 %v678
          %710 = vmatpush1.bf16.msra.mxu0 %v677
          %711 = vmatprep.subr.bf16.mxu0 %v680
          %712 = vmatpush1.bf16.msra.mxu0 %v679
          %713 = vmatprep.subr.bf16.mxu0 %v682
          %714 = vmatpush1.bf16.msra.mxu0 %v681
          %715 = vmatprep.subr.bf16.mxu0 %v684
          %716 = vmatpush1.bf16.msra.mxu0 %v683
          %717 = vmatprep.subr.bf16.mxu0 %v686
          %718 = vmatpush1.bf16.msra.mxu0 %v685
          %719 = vmatprep.subr.bf16.mxu0 0
          %720 = vmatpush1.bf16.msra.mxu0 0
          %721 = vmatprep.subr.bf16.mxu0 0
          %722 = vmatpush1.bf16.msra.mxu0 0
          %723 = vmatprep.subr.bf16.mxu0 0
          %724 = vmatpush1.bf16.msra.mxu0 0
          %725 = vmatprep.subr.bf16.mxu0 0
          %726 = vmatpush1.bf16.msra.mxu0 0
          %727 = vmatprep.subr.bf16.mxu0 0
          %728 = vmatpush1.bf16.msra.mxu0 0
          %729 = vmatprep.subr.bf16.mxu0 0
          %730 = vmatpush1.bf16.msra.mxu0 0
          %731 = vmatprep.subr.bf16.mxu0 0
          %732 = vmatpush1.bf16.msra.mxu0 0
          %733 = vmatprep.subr.bf16.mxu0 0
          %734 = vmatpush1.bf16.msra.mxu0 0
          %735 = vmatprep.mubr.bf16.mxu0 0
          %736 = vmatmul.mubr.bf16.gmra.mrb[0].mxu0 %v607
          %v737 = vpop.f32.mrb[0].mxu0
          %v738 = vadd.f32 %v568, %v737
          %v739 = vpop.f32.mrb[0].mxu0
          %v740 = vadd.f32 %v572, %v739
          %v741 = vpop.f32.mrb[0].mxu0
          %v742 = vadd.f32 %v568, %v741
          %v743 = vpop.f32.mrb[0].mxu0
          %v744 = vadd.f32 %v572, %v743
          %745 = vmatprep.mubr.bf16.mxu0 0
          %746 = vmatmul.mubr.bf16.gmra.mrb[0].mxu0 %v608
          %v747 = vpop.f32.mrb[0].mxu0
          %v748 = vadd.f32 %v568, %v747
          %v749 = vpop.f32.mrb[0].mxu0
          %v750 = vadd.f32 %v572, %v749
          %v751 = vpop.f32.mrb[0].mxu0
          %v752 = vadd.f32 %v568, %v751
          %v753 = vpop.f32.mrb[0].mxu0
          %v754 = vadd.f32 %v572, %v753
          %755 = vmatprep.mubr.bf16.mxu0 0
          %756 = vmatmul.mubr.bf16.gmra.mrb[0].mxu0 %v609
          %v757 = vpop.f32.mrb[0].mxu0
          %v758 = vadd.f32 %v568, %v757
          %v759 = vpop.f32.mrb[0].mxu0
          %v760 = vadd.f32 %v572, %v759
          %v761 = vpop.f32.mrb[0].mxu0
          %v762 = vadd.f32 %v568, %v761
          %v763 = vpop.f32.mrb[0].mxu0
          %v764 = vadd.f32 %v572, %v763
          %765 = vmatprep.mubr.bf16.mxu0 0
          %766 = vmatmul.mubr.bf16.gmra.mrb[0].mxu0 %v610
          %v767 = vpop.f32.mrb[0].mxu0
          %v768 = vadd.f32 %v568, %v767
          %v769 = vpop.f32.mrb[0].mxu0
          %v770 = vadd.f32 %v572, %v769
          %v771 = vpop.f32.mrb[0].mxu0
          %v772 = vadd.f32 %v568, %v771
          %v773 = vpop.f32.mrb[0].mxu0
          %v774 = vadd.f32 %v572, %v773
          %775 = vmatprep.mubr.bf16.mxu0 0
          %776 = vmatmul.mubr.bf16.gmra.mrb[0].mxu0 %v611
          %v777 = vpop.f32.mrb[0].mxu0
          %v778 = vadd.f32 %v568, %v777
          %v779 = vpop.f32.mrb[0].mxu0
          %v780 = vadd.f32 %v572, %v779
          %v781 = vpop.f32.mrb[0].mxu0
          %v782 = vadd.f32 %v568, %v781
          %v783 = vpop.f32.mrb[0].mxu0
          %v784 = vadd.f32 %v572, %v783
          %785 = vmatprep.mubr.bf16.mxu0 0
          %786 = vmatmul.mubr.bf16.gmra.mrb[0].mxu0 %v612
          %v787 = vpop.f32.mrb[0].mxu0
          %v788 = vadd.f32 %v568, %v787
          %v789 = vpop.f32.mrb[0].mxu0
          %v790 = vadd.f32 %v572, %v789
          %v791 = vpop.f32.mrb[0].mxu0
          %v792 = vadd.f32 %v568, %v791
          %v793 = vpop.f32.mrb[0].mxu0
          %v794 = vadd.f32 %v572, %v793
          %795 = vmatprep.mubr.bf16.mxu0 0
          %796 = vmatmul.mubr.bf16.gmra.mrb[0].mxu0 %v613
          %v797 = vpop.f32.mrb[0].mxu0
          %v798 = vadd.f32 %v568, %v797
          %v799 = vpop.f32.mrb[0].mxu0
          %v800 = vadd.f32 %v572, %v799
          %v801 = vpop.f32.mrb[0].mxu0
          %v802 = vadd.f32 %v568, %v801
          %v803 = vpop.f32.mrb[0].mxu0
          %v804 = vadd.f32 %v572, %v803
          %805 = vmatprep.mubr.bf16.mxu0 0
          %806 = vmatmul.mubr.bf16.gmra.mrb[0].mxu0 %v614
          %v807 = vpop.f32.mrb[0].mxu0
          %v808 = vadd.f32 %v568, %v807
          %v809 = vpop.f32.mrb[0].mxu0
          %v810 = vadd.f32 %v572, %v809
          %v811 = vpop.f32.mrb[0].mxu0
          %v812 = vadd.f32 %v568, %v811
          %v813 = vpop.f32.mrb[0].mxu0
          %v814 = vadd.f32 %v572, %v813
          %815 = vdwg.mxu0
          %v816 = vlaneseq
          %v817 = vshrl.u32 %v816, 7
          %v818 = vadd.s32 %v817, 8
          %v819 = vadd.s32 %v817, 16
          %v820 = vadd.s32 %v817, 24
          %v821 = vadd.s32 %v817, 32
          %v822 = vadd.s32 %v817, 40
          %v823 = vadd.s32 %v817, 48
          %v824 = vadd.s32 %v817, 56
          %v825 = vadd.s32 %v817, 64
          %v826 = vadd.s32 %v817, 72
          %v827 = vadd.s32 %v817, 80
          %v828 = vadd.s32 %v817, 88
          %v829 = vadd.s32 %v817, 96
          %v830 = vadd.s32 %v817, 104
          %v831 = vadd.s32 %v817, 112
          %v832 = vadd.s32 %v817, 120
          %v833 = vstv %s526
          %v834 = vadd.s32 %v833, %v817
          %v835 = vadd.s32 %v833, %v818
          %v836 = vadd.s32 %v833, %v819
          %v837 = vadd.s32 %v833, %v820
          %v838 = vadd.s32 %v833, %v821
          %v839 = vadd.s32 %v833, %v822
          %v840 = vadd.s32 %v833, %v823
          %v841 = vadd.s32 %v833, %v824
          %v842 = vadd.s32 %v833, %v825
          %v843 = vadd.s32 %v833, %v826
          %v844 = vadd.s32 %v833, %v827
          %v845 = vadd.s32 %v833, %v828
          %v846 = vadd.s32 %v833, %v829
          %v847 = vadd.s32 %v833, %v830
          %v848 = vadd.s32 %v833, %v831
          %v849 = vadd.s32 %v833, %v832
          %vm850 = vcmp.lt.s32.totalorder %v834, 32
          %vm851 = vcmp.lt.s32.totalorder %v835, 32
          %vm852 = vcmp.lt.s32.totalorder %v836, 32
          %vm853 = vcmp.lt.s32.totalorder %v837, 32
          %vm854 = vcmp.lt.s32.totalorder %v838, 32
          %vm855 = vcmp.lt.s32.totalorder %v839, 32
          %vm856 = vcmp.lt.s32.totalorder %v840, 32
          %vm857 = vcmp.lt.s32.totalorder %v841, 32
          %vm858 = vcmp.lt.s32.totalorder %v842, 32
          %vm859 = vcmp.lt.s32.totalorder %v843, 32
          %vm860 = vcmp.lt.s32.totalorder %v844, 32
          %vm861 = vcmp.lt.s32.totalorder %v845, 32
          %vm862 = vcmp.lt.s32.totalorder %v846, 32
          %vm863 = vcmp.lt.s32.totalorder %v847, 32
          %vm864 = vcmp.lt.s32.totalorder %v848, 32
          %vm865 = vcmp.lt.s32.totalorder %v849, 32
          %v866 = vsel %vm850, 1, 0
          %v867 = vsel %vm851, 1, 0
          %v868 = vsel %vm852, 1, 0
          %v869 = vsel %vm853, 1, 0
          %v870 = vsel %vm854, 1, 0
          %v871 = vsel %vm855, 1, 0
          %v872 = vsel %vm856, 1, 0
          %v873 = vsel %vm857, 1, 0
          %v874 = vsel %vm858, 1, 0
          %v875 = vsel %vm859, 1, 0
          %v876 = vsel %vm860, 1, 0
          %v877 = vsel %vm861, 1, 0
          %v878 = vsel %vm862, 1, 0
          %v879 = vsel %vm863, 1, 0
          %v880 = vsel %vm864, 1, 0
          %v881 = vsel %vm865, 1, 0
          %vm882 = vcmp.eq.s32.totalorder %v866, 1
          %vm883 = vcmp.eq.s32.totalorder %v867, 1
          %vm884 = vcmp.eq.s32.totalorder %v868, 1
          %vm885 = vcmp.eq.s32.totalorder %v869, 1
          %vm886 = vcmp.eq.s32.totalorder %v870, 1
          %vm887 = vcmp.eq.s32.totalorder %v871, 1
          %vm888 = vcmp.eq.s32.totalorder %v872, 1
          %vm889 = vcmp.eq.s32.totalorder %v873, 1
          %vm890 = vcmp.eq.s32.totalorder %v874, 1
          %vm891 = vcmp.eq.s32.totalorder %v875, 1
          %vm892 = vcmp.eq.s32.totalorder %v876, 1
          %vm893 = vcmp.eq.s32.totalorder %v877, 1
          %vm894 = vcmp.eq.s32.totalorder %v878, 1
          %vm895 = vcmp.eq.s32.totalorder %v879, 1
          %vm896 = vcmp.eq.s32.totalorder %v880, 1
          %vm897 = vcmp.eq.s32.totalorder %v881, 1
          %v898 = vsel %vm882, %v738, 0.0
          %v899 = vsel %vm882, %v740, 0.0
          %v900 = vsel %vm883, %v742, 0.0
          %v901 = vsel %vm883, %v744, 0.0
          %v902 = vsel %vm884, %v748, 0.0
          %v903 = vsel %vm884, %v750, 0.0
          %v904 = vsel %vm885, %v752, 0.0
          %v905 = vsel %vm885, %v754, 0.0
          %v906 = vsel %vm886, %v758, 0.0
          %v907 = vsel %vm886, %v760, 0.0
          %v908 = vsel %vm887, %v762, 0.0
          %v909 = vsel %vm887, %v764, 0.0
          %v910 = vsel %vm888, %v768, 0.0
          %v911 = vsel %vm888, %v770, 0.0
          %v912 = vsel %vm889, %v772, 0.0
          %v913 = vsel %vm889, %v774, 0.0
          %v914 = vsel %vm890, %v778, 0.0
          %v915 = vsel %vm890, %v780, 0.0
          %v916 = vsel %vm891, %v782, 0.0
          %v917 = vsel %vm891, %v784, 0.0
          %v918 = vsel %vm892, %v788, 0.0
          %v919 = vsel %vm892, %v790, 0.0
          %v920 = vsel %vm893, %v792, 0.0
          %v921 = vsel %vm893, %v794, 0.0
          %v922 = vsel %vm894, %v798, 0.0
          %v923 = vsel %vm894, %v800, 0.0
          %v924 = vsel %vm895, %v802, 0.0
          %v925 = vsel %vm895, %v804, 0.0
          %v926 = vsel %vm896, %v808, 0.0
          %v927 = vsel %vm896, %v810, 0.0
          %v928 = vsel %vm897, %v812, 0.0
          %v929 = vsel %vm897, %v814, 0.0
          %v930 = vpack.c.bf16 %v900, %v898
          %v931 = vpack.c.bf16 %v901, %v899
          %v932 = vpack.c.bf16 %v904, %v902
          %v933 = vpack.c.bf16 %v905, %v903
          %v934 = vpack.c.bf16 %v908, %v906
          %v935 = vpack.c.bf16 %v909, %v907
          %v936 = vpack.c.bf16 %v912, %v910
          %v937 = vpack.c.bf16 %v913, %v911
          %v938 = vpack.c.bf16 %v916, %v914
          %v939 = vpack.c.bf16 %v917, %v915
          %v940 = vpack.c.bf16 %v920, %v918
          %v941 = vpack.c.bf16 %v921, %v919
          %v942 = vpack.c.bf16 %v924, %v922
          %v943 = vpack.c.bf16 %v925, %v923
          %v944 = vpack.c.bf16 %v928, %v926
          %v945 = vpack.c.bf16 %v929, %v927
          %s946 = sshra.s32 %s526, 4
          %s947 = sand.u32 %s526, 15
          %s948 = smul.u32 %s946, 2
          %s949 = smul.addr %s948, 8
          %s950 = scalar_lea.vmem [#allocation2], %s949
          %951 = vst [vmem:[%s950] sm:$0xff] %v930
          %952 = vst [vmem:[%s950 + $0x8] sm:$0xff] %v931
          %953 = vst [vmem:[%s950 + $0x10] sm:$0xff] %v932
          %954 = vst [vmem:[%s950 + $0x18] sm:$0xff] %v933
          %955 = vst [vmem:[%s950 + $0x20] sm:$0xff] %v934
          %956 = vst [vmem:[%s950 + $0x28] sm:$0xff] %v935
          %957 = vst [vmem:[%s950 + $0x30] sm:$0xff] %v936
          %958 = vst [vmem:[%s950 + $0x38] sm:$0xff] %v937
          %959 = vst [vmem:[%s950 + $0x40] sm:$0xff] %v938
          %960 = vst [vmem:[%s950 + $0x48] sm:$0xff] %v939
          %961 = vst [vmem:[%s950 + $0x50] sm:$0xff] %v940
          %962 = vst [vmem:[%s950 + $0x58] sm:$0xff] %v941
          %963 = vst [vmem:[%s950 + $0x60] sm:$0xff] %v942
          %964 = vst [vmem:[%s950 + $0x68] sm:$0xff] %v943
          %965 = vst [vmem:[%s950 + $0x70] sm:$0xff] %v944
          %966 = vst [vmem:[%s950 + $0x78] sm:$0xff] %v945
          %s967 = sshra.s32 %s526, 3
          %s968 = sand.u32 %s526, 7
          %s969 = smul.u32 %s967, 2
          %s970 = smul.addr %s969, 8
          %s971 = scalar_lea.vmem [#allocation4], %s970
          %972 = vst [vmem:[%s971] sm:$0xff] %v898
          %973 = vst [vmem:[%s971 + $0x8] sm:$0xff] %v899
          %974 = vst [vmem:[%s971 + $0x10] sm:$0xff] %v900
          %975 = vst [vmem:[%s971 + $0x18] sm:$0xff] %v901
          %976 = vst [vmem:[%s971 + $0x20] sm:$0xff] %v902
          %977 = vst [vmem:[%s971 + $0x28] sm:$0xff] %v903
          %978 = vst [vmem:[%s971 + $0x30] sm:$0xff] %v904
          %979 = vst [vmem:[%s971 + $0x38] sm:$0xff] %v905
          %980 = vst [vmem:[%s971 + $0x40] sm:$0xff] %v906
          %981 = vst [vmem:[%s971 + $0x48] sm:$0xff] %v907
          %982 = vst [vmem:[%s971 + $0x50] sm:$0xff] %v908
          %983 = vst [vmem:[%s971 + $0x58] sm:$0xff] %v909
          %984 = vst [vmem:[%s971 + $0x60] sm:$0xff] %v910
          %985 = vst [vmem:[%s971 + $0x68] sm:$0xff] %v911
          %986 = vst [vmem:[%s971 + $0x70] sm:$0xff] %v912
          %987 = vst [vmem:[%s971 + $0x78] sm:$0xff] %v913
          %988 = vst [vmem:[%s971 + $0x80] sm:$0xff] %v914
          %989 = vst [vmem:[%s971 + $0x88] sm:$0xff] %v915
          %990 = vst [vmem:[%s971 + $0x90] sm:$0xff] %v916
          %991 = vst [vmem:[%s971 + $0x98] sm:$0xff] %v917
          %992 = vst [vmem:[%s971 + $0xa0] sm:$0xff] %v918
          %993 = vst [vmem:[%s971 + $0xa8] sm:$0xff] %v919
          %994 = vst [vmem:[%s971 + $0xb0] sm:$0xff] %v920
          %995 = vst [vmem:[%s971 + $0xb8] sm:$0xff] %v921
          %996 = vst [vmem:[%s971 + $0xc0] sm:$0xff] %v922
          %997 = vst [vmem:[%s971 + $0xc8] sm:$0xff] %v923
          %998 = vst [vmem:[%s971 + $0xd0] sm:$0xff] %v924
          %999 = vst [vmem:[%s971 + $0xd8] sm:$0xff] %v925
          %1000 = vst [vmem:[%s971 + $0xe0] sm:$0xff] %v926
          %1001 = vst [vmem:[%s971 + $0xe8] sm:$0xff] %v927
          %1002 = vst [vmem:[%s971 + $0xf0] sm:$0xff] %v928
          %1003 = vst [vmem:[%s971 + $0xf8] sm:$0xff] %v929
        $region84: #{tpu_custom_call.1} parent=63 // pred_fallthru
          _
        %p1004 = scmp.ge.s32.totalorder %s38, 1
        %p1005 = scmp.le.s32.totalorder %s38, 3
        %p1006 = pnand %p1004, %p1005
        %p1007 = pneg %p1006
        %p1008 = scmp.lt.s32.totalorder %s38, 0
        %s1009 = ssub.s32 0, %s38
        %s1010 = scalar_select %p1008, %s1009, %s38
        %s1011 = sand.u32 %s1010, 1
        %s1012 = ssub.s32 0, %s1011
        %s1013 = scalar_select %p1008, %s1012, %s1011
        %p1014 = scmp.ne.s32.totalorder %s1013, 0
        %p1015 = scmp.lt.s32.totalorder %s1013, 0
        %p1016 = pnand %p1015, %p1014
        %p1017 = pneg %p1016
        %s1018 = sadd.s32 %s1013, 2
        %s1019 = scalar_select %p1017, %s1018, %s1013
        %p1020 = scmp.eq.s32.totalorder %s1019, 1
        %p1021 = pnand %p1007, %p1020
        %p1022 = pneg %p1021
        // Predicated region
        $region85: #{tpu_custom_call.1} parent=63 // pred_check
          _
        $region86: #{tpu_custom_call.1} parent=63 // pred_check_branch
          %1024 = sbr.rel (%p1021) target = $region88
        $region87: #{tpu_custom_call.1} parent=63 // pred_region
          %v1025 = vld [vmem:[#allocation2] sm:$0xff]
          %v1026 = vld [vmem:[#allocation2 + $0x8] sm:$0xff]
          %v1027 = vld [vmem:[#allocation2 + $0x10] sm:$0xff]
          %v1028 = vld [vmem:[#allocation2 + $0x18] sm:$0xff]
          %v1029 = vld [vmem:[#allocation2 + $0x20] sm:$0xff]
          %v1030 = vld [vmem:[#allocation2 + $0x28] sm:$0xff]
          %v1031 = vld [vmem:[#allocation2 + $0x30] sm:$0xff]
          %v1032 = vld [vmem:[#allocation2 + $0x38] sm:$0xff]
          %v1033 = vld [vmem:[#allocation2 + $0x40] sm:$0xff]
          %v1034 = vld [vmem:[#allocation2 + $0x48] sm:$0xff]
          %v1035 = vld [vmem:[#allocation2 + $0x50] sm:$0xff]
          %v1036 = vld [vmem:[#allocation2 + $0x58] sm:$0xff]
          %v1037 = vld [vmem:[#allocation2 + $0x60] sm:$0xff]
          %v1038 = vld [vmem:[#allocation2 + $0x68] sm:$0xff]
          %v1039 = vld [vmem:[#allocation2 + $0x70] sm:$0xff]
          %v1040 = vld [vmem:[#allocation2 + $0x78] sm:$0xff]
          %v1041 = vld [vmem:[%s461] sm:$0xf]
          %v1042 = vld [vmem:[%s461 + $0x4] sm:$0xf]
          %v1043 = vld [vmem:[%s461 + $0x8] sm:$0xf]
          %v1044 = vld [vmem:[%s461 + $0xc] sm:$0xf]
          %v1045 = vld [vmem:[%s461 + $0x10] sm:$0xf]
          %v1046 = vld [vmem:[%s461 + $0x14] sm:$0xf]
          %v1047 = vld [vmem:[%s461 + $0x18] sm:$0xf]
          %v1048 = vld [vmem:[%s461 + $0x1c] sm:$0xf]
          %v1049 = vld [vmem:[%s461 + $0x20] sm:$0xf]
          %v1050 = vld [vmem:[%s461 + $0x24] sm:$0xf]
          %v1051 = vld [vmem:[%s461 + $0x28] sm:$0xf]
          %v1052 = vld [vmem:[%s461 + $0x2c] sm:$0xf]
          %v1053 = vld [vmem:[%s461 + $0x30] sm:$0xf]
          %v1054 = vld [vmem:[%s461 + $0x34] sm:$0xf]
          %v1055 = vld [vmem:[%s461 + $0x38] sm:$0xf]
          %v1056 = vld [vmem:[%s461 + $0x3c] sm:$0xf]
          %v1073 = vunpack.c.l.b16 %v1041
          %v1074 = vunpack.c.l.b16 %v1042
          %v1075 = vunpack.c.l.b16 %v1043
          %v1076 = vunpack.c.l.b16 %v1044
          %v1077 = vunpack.c.l.b16 %v1045
          %v1078 = vunpack.c.l.b16 %v1046
          %v1079 = vunpack.c.l.b16 %v1047
          %v1080 = vunpack.c.l.b16 %v1048
          %v1081 = vunpack.c.l.b16 %v1049
          %v1082 = vunpack.c.l.b16 %v1050
          %v1083 = vunpack.c.l.b16 %v1051
          %v1084 = vunpack.c.l.b16 %v1052
          %v1085 = vunpack.c.l.b16 %v1053
          %v1086 = vunpack.c.l.b16 %v1054
          %v1087 = vunpack.c.l.b16 %v1055
          %v1088 = vunpack.c.l.b16 %v1056
          %v1089 = vpack.c.b16 %v1074, %v1073
          %v1090 = vpack.c.b16 %v1076, %v1075
          %v1091 = vpack.c.b16 %v1078, %v1077
          %v1092 = vpack.c.b16 %v1080, %v1079
          %v1093 = vpack.c.b16 %v1082, %v1081
          %v1094 = vpack.c.b16 %v1084, %v1083
          %v1095 = vpack.c.b16 %v1086, %v1085
          %v1096 = vpack.c.b16 %v1088, %v1087
          %1105 = vmatprep.subr.bf16.mxu0 %v1026
          %1106 = vmatpush1.bf16.msra.mxu0 %v1025
          %1107 = vmatprep.subr.bf16.mxu0 %v1028
          %1108 = vmatpush1.bf16.msra.mxu0 %v1027
          %1109 = vmatprep.subr.bf16.mxu0 %v1030
          %1110 = vmatpush1.bf16.msra.mxu0 %v1029
          %1111 = vmatprep.subr.bf16.mxu0 %v1032
          %1112 = vmatpush1.bf16.msra.mxu0 %v1031
          %1113 = vmatprep.subr.bf16.mxu0 %v1034
          %1114 = vmatpush1.bf16.msra.mxu0 %v1033
          %1115 = vmatprep.subr.bf16.mxu0 %v1036
          %1116 = vmatpush1.bf16.msra.mxu0 %v1035
          %1117 = vmatprep.subr.bf16.mxu0 %v1038
          %1118 = vmatpush1.bf16.msra.mxu0 %v1037
          %1119 = vmatprep.subr.bf16.mxu0 %v1040
          %1120 = vmatpush1.bf16.msra.mxu0 %v1039
          %1121 = vmatprep.subr.bf16.mxu0 0
          %1122 = vmatpush1.bf16.msra.mxu0 0
          %1123 = vmatprep.subr.bf16.mxu0 0
          %1124 = vmatpush1.bf16.msra.mxu0 0
          %1125 = vmatprep.subr.bf16.mxu0 0
          %1126 = vmatpush1.bf16.msra.mxu0 0
          %1127 = vmatprep.subr.bf16.mxu0 0
          %1128 = vmatpush1.bf16.msra.mxu0 0
          %1129 = vmatprep.subr.bf16.mxu0 0
          %1130 = vmatpush1.bf16.msra.mxu0 0
          %1131 = vmatprep.subr.bf16.mxu0 0
          %1132 = vmatpush1.bf16.msra.mxu0 0
          %1133 = vmatprep.subr.bf16.mxu0 0
          %1134 = vmatpush1.bf16.msra.mxu0 0
          %1135 = vmatprep.subr.bf16.mxu0 0
          %1136 = vmatpush1.bf16.msra.mxu0 0
          %1137 = vmatprep.mubr.bf16.mxu0 0
          %1138 = vmatmul.mubr.bf16.gmra.mrb[0].mxu0 %v1089
          %v1139 = vpop.f32.mrb[0].mxu0
          %v1140 = vadd.f32 0.0, %v1139
          %v1141 = vpop.f32.mrb[0].mxu0
          %v1142 = vadd.f32 0.0, %v1141
          %v1143 = vpop.f32.mrb[0].mxu0
          %v1144 = vadd.f32 0.0, %v1143
          %v1145 = vpop.f32.mrb[0].mxu0
          %v1146 = vadd.f32 0.0, %v1145
          %1147 = vmatprep.mubr.bf16.mxu0 0
          %1148 = vmatmul.mubr.bf16.gmra.mrb[0].mxu0 %v1090
          %v1149 = vpop.f32.mrb[0].mxu0
          %v1150 = vadd.f32 0.0, %v1149
          %v1151 = vpop.f32.mrb[0].mxu0
          %v1152 = vadd.f32 0.0, %v1151
          %v1153 = vpop.f32.mrb[0].mxu0
          %v1154 = vadd.f32 0.0, %v1153
          %v1155 = vpop.f32.mrb[0].mxu0
          %v1156 = vadd.f32 0.0, %v1155
          %1157 = vmatprep.mubr.bf16.mxu0 0
          %1158 = vmatmul.mubr.bf16.gmra.mrb[0].mxu0 %v1091
          %v1159 = vpop.f32.mrb[0].mxu0
          %v1160 = vadd.f32 0.0, %v1159
          %v1161 = vpop.f32.mrb[0].mxu0
          %v1162 = vadd.f32 0.0, %v1161
          %v1163 = vpop.f32.mrb[0].mxu0
          %v1164 = vadd.f32 0.0, %v1163
          %v1165 = vpop.f32.mrb[0].mxu0
          %v1166 = vadd.f32 0.0, %v1165
          %1167 = vmatprep.mubr.bf16.mxu0 0
          %1168 = vmatmul.mubr.bf16.gmra.mrb[0].mxu0 %v1092
          %v1169 = vpop.f32.mrb[0].mxu0
          %v1170 = vadd.f32 0.0, %v1169
          %v1171 = vpop.f32.mrb[0].mxu0
          %v1172 = vadd.f32 0.0, %v1171
          %v1173 = vpop.f32.mrb[0].mxu0
          %v1174 = vadd.f32 0.0, %v1173
          %v1175 = vpop.f32.mrb[0].mxu0
          %v1176 = vadd.f32 0.0, %v1175
          %1177 = vmatprep.mubr.bf16.mxu0 0
          %1178 = vmatmul.mubr.bf16.gmra.mrb[0].mxu0 %v1093
          %v1179 = vpop.f32.mrb[0].mxu0
          %v1180 = vadd.f32 0.0, %v1179
          %v1181 = vpop.f32.mrb[0].mxu0
          %v1182 = vadd.f32 0.0, %v1181
          %v1183 = vpop.f32.mrb[0].mxu0
          %v1184 = vadd.f32 0.0, %v1183
          %v1185 = vpop.f32.mrb[0].mxu0
          %v1186 = vadd.f32 0.0, %v1185
          %1187 = vmatprep.mubr.bf16.mxu0 0
          %1188 = vmatmul.mubr.bf16.gmra.mrb[0].mxu0 %v1094
          %v1189 = vpop.f32.mrb[0].mxu0
          %v1190 = vadd.f32 0.0, %v1189
          %v1191 = vpop.f32.mrb[0].mxu0
          %v1192 = vadd.f32 0.0, %v1191
          %v1193 = vpop.f32.mrb[0].mxu0
          %v1194 = vadd.f32 0.0, %v1193
          %v1195 = vpop.f32.mrb[0].mxu0
          %v1196 = vadd.f32 0.0, %v1195
          %1197 = vmatprep.mubr.bf16.mxu0 0
          %1198 = vmatmul.mubr.bf16.gmra.mrb[0].mxu0 %v1095
          %v1199 = vpop.f32.mrb[0].mxu0
          %v1200 = vadd.f32 0.0, %v1199
          %v1201 = vpop.f32.mrb[0].mxu0
          %v1202 = vadd.f32 0.0, %v1201
          %v1203 = vpop.f32.mrb[0].mxu0
          %v1204 = vadd.f32 0.0, %v1203
          %v1205 = vpop.f32.mrb[0].mxu0
          %v1206 = vadd.f32 0.0, %v1205
          %1207 = vmatprep.mubr.bf16.mxu0 0
          %1208 = vmatmul.mubr.bf16.gmra.mrb[0].mxu0 %v1096
          %v1209 = vpop.f32.mrb[0].mxu0
          %v1210 = vadd.f32 0.0, %v1209
          %v1211 = vpop.f32.mrb[0].mxu0
          %v1212 = vadd.f32 0.0, %v1211
          %v1213 = vpop.f32.mrb[0].mxu0
          %v1214 = vadd.f32 0.0, %v1213
          %v1215 = vpop.f32.mrb[0].mxu0
          %v1216 = vadd.f32 0.0, %v1215
          %1217 = vdwg.mxu0
          %s1218 = sshra.s32 %s526, 4
          %s1219 = sand.u32 %s526, 15
          %s1220 = smul.u32 %s1218, 2
          %s1221 = smul.addr %s1220, 8
          %s1222 = scalar_lea.vmem [#allocation2], %s1221
          %v1223 = vld [vmem:[%s1222] sm:$0xff]
          %v1224 = vld [vmem:[%s1222 + $0x8] sm:$0xff]
          %v1225 = vld [vmem:[%s1222 + $0x10] sm:$0xff]
          %v1226 = vld [vmem:[%s1222 + $0x18] sm:$0xff]
          %v1227 = vld [vmem:[%s1222 + $0x20] sm:$0xff]
          %v1228 = vld [vmem:[%s1222 + $0x28] sm:$0xff]
          %v1229 = vld [vmem:[%s1222 + $0x30] sm:$0xff]
          %v1230 = vld [vmem:[%s1222 + $0x38] sm:$0xff]
          %v1231 = vld [vmem:[%s1222 + $0x40] sm:$0xff]
          %v1232 = vld [vmem:[%s1222 + $0x48] sm:$0xff]
          %v1233 = vld [vmem:[%s1222 + $0x50] sm:$0xff]
          %v1234 = vld [vmem:[%s1222 + $0x58] sm:$0xff]
          %v1235 = vld [vmem:[%s1222 + $0x60] sm:$0xff]
          %v1236 = vld [vmem:[%s1222 + $0x68] sm:$0xff]
          %v1237 = vld [vmem:[%s1222 + $0x70] sm:$0xff]
          %v1238 = vld [vmem:[%s1222 + $0x78] sm:$0xff]
          %v1239 = vunpack.c.l.bf16 %v1223
          %v1240 = vunpack.c.l.bf16 %v1224
          %v1241 = vunpack.c.h.bf16 %v1223
          %v1242 = vunpack.c.h.bf16 %v1224
          %v1243 = vunpack.c.l.bf16 %v1225
          %v1244 = vunpack.c.l.bf16 %v1226
          %v1245 = vunpack.c.h.bf16 %v1225
          %v1246 = vunpack.c.h.bf16 %v1226
          %v1247 = vunpack.c.l.bf16 %v1227
          %v1248 = vunpack.c.l.bf16 %v1228
          %v1249 = vunpack.c.h.bf16 %v1227
          %v1250 = vunpack.c.h.bf16 %v1228
          %v1251 = vunpack.c.l.bf16 %v1229
          %v1252 = vunpack.c.l.bf16 %v1230
          %v1253 = vunpack.c.h.bf16 %v1229
          %v1254 = vunpack.c.h.bf16 %v1230
          %v1255 = vunpack.c.l.bf16 %v1231
          %v1256 = vunpack.c.l.bf16 %v1232
          %v1257 = vunpack.c.h.bf16 %v1231
          %v1258 = vunpack.c.h.bf16 %v1232
          %v1259 = vunpack.c.l.bf16 %v1233
          %v1260 = vunpack.c.l.bf16 %v1234
          %v1261 = vunpack.c.h.bf16 %v1233
          %v1262 = vunpack.c.h.bf16 %v1234
          %v1263 = vunpack.c.l.bf16 %v1235
          %v1264 = vunpack.c.l.bf16 %v1236
          %v1265 = vunpack.c.h.bf16 %v1235
          %v1266 = vunpack.c.h.bf16 %v1236
          %v1267 = vunpack.c.l.bf16 %v1237
          %v1268 = vunpack.c.l.bf16 %v1238
          %v1269 = vunpack.c.h.bf16 %v1237
          %v1270 = vunpack.c.h.bf16 %v1238
          %v1271 = vld [vmem:[%s9] sm:$0x3]
          %v1273 = vlaneseq
          %v1274 = vshrl.u32 %v1273, 7
          %v1275 = vsub.s32 0, %v1274
          %v1276 = vrot.slane %v1271, %v1275
          %v1277 = vlaneseq
          %v1278 = vshrl.u32 %v1277, 7
          %v1279 = vsub.s32 1, %v1278
          %v1280 = vrot.slane %v1271, %v1279
          %v1283 = vmul.f32 %v1140, %v1276
          %v1284 = vmul.f32 %v1142, %v1280
          %v1285 = vmul.f32 %v1144, %v1276
          %v1286 = vmul.f32 %v1146, %v1280
          %v1287 = vmul.f32 %v1150, %v1276
          %v1288 = vmul.f32 %v1152, %v1280
          %v1289 = vmul.f32 %v1154, %v1276
          %v1290 = vmul.f32 %v1156, %v1280
          %v1291 = vmul.f32 %v1160, %v1276
          %v1292 = vmul.f32 %v1162, %v1280
          %v1293 = vmul.f32 %v1164, %v1276
          %v1294 = vmul.f32 %v1166, %v1280
          %v1295 = vmul.f32 %v1170, %v1276
          %v1296 = vmul.f32 %v1172, %v1280
          %v1297 = vmul.f32 %v1174, %v1276
          %v1298 = vmul.f32 %v1176, %v1280
          %v1299 = vmul.f32 %v1180, %v1276
          %v1300 = vmul.f32 %v1182, %v1280
          %v1301 = vmul.f32 %v1184, %v1276
          %v1302 = vmul.f32 %v1186, %v1280
          %v1303 = vmul.f32 %v1190, %v1276
          %v1304 = vmul.f32 %v1192, %v1280
          %v1305 = vmul.f32 %v1194, %v1276
          %v1306 = vmul.f32 %v1196, %v1280
          %v1307 = vmul.f32 %v1200, %v1276
          %v1308 = vmul.f32 %v1202, %v1280
          %v1309 = vmul.f32 %v1204, %v1276
          %v1310 = vmul.f32 %v1206, %v1280
          %v1311 = vmul.f32 %v1210, %v1276
          %v1312 = vmul.f32 %v1212, %v1280
          %v1313 = vmul.f32 %v1214, %v1276
          %v1314 = vmul.f32 %v1216, %v1280
          %v1315 = vld [vmem:[%s10] sm:$0x3]
          %v1317 = vlaneseq
          %v1318 = vshrl.u32 %v1317, 7
          %v1319 = vsub.s32 0, %v1318
          %v1320 = vrot.slane %v1315, %v1319
          %v1321 = vlaneseq
          %v1322 = vshrl.u32 %v1321, 7
          %v1323 = vsub.s32 1, %v1322
          %v1324 = vrot.slane %v1315, %v1323
          %v1327 = vmul.f32 %v1239, %v1320
          %v1328 = vmul.f32 %v1240, %v1324
          %v1329 = vmul.f32 %v1241, %v1320
          %v1330 = vmul.f32 %v1242, %v1324
          %v1331 = vmul.f32 %v1243, %v1320
          %v1332 = vmul.f32 %v1244, %v1324
          %v1333 = vmul.f32 %v1245, %v1320
          %v1334 = vmul.f32 %v1246, %v1324
          %v1335 = vmul.f32 %v1247, %v1320
          %v1336 = vmul.f32 %v1248, %v1324
          %v1337 = vmul.f32 %v1249, %v1320
          %v1338 = vmul.f32 %v1250, %v1324
          %v1339 = vmul.f32 %v1251, %v1320
          %v1340 = vmul.f32 %v1252, %v1324
          %v1341 = vmul.f32 %v1253, %v1320
          %v1342 = vmul.f32 %v1254, %v1324
          %v1343 = vmul.f32 %v1255, %v1320
          %v1344 = vmul.f32 %v1256, %v1324
          %v1345 = vmul.f32 %v1257, %v1320
          %v1346 = vmul.f32 %v1258, %v1324
          %v1347 = vmul.f32 %v1259, %v1320
          %v1348 = vmul.f32 %v1260, %v1324
          %v1349 = vmul.f32 %v1261, %v1320
          %v1350 = vmul.f32 %v1262, %v1324
          %v1351 = vmul.f32 %v1263, %v1320
          %v1352 = vmul.f32 %v1264, %v1324
          %v1353 = vmul.f32 %v1265, %v1320
          %v1354 = vmul.f32 %v1266, %v1324
          %v1355 = vmul.f32 %v1267, %v1320
          %v1356 = vmul.f32 %v1268, %v1324
          %v1357 = vmul.f32 %v1269, %v1320
          %v1358 = vmul.f32 %v1270, %v1324
          %v1359 = vadd.f32 %v1283, %v1327
          %v1360 = vadd.f32 %v1284, %v1328
          %v1361 = vadd.f32 %v1285, %v1329
          %v1362 = vadd.f32 %v1286, %v1330
          %v1363 = vadd.f32 %v1287, %v1331
          %v1364 = vadd.f32 %v1288, %v1332
          %v1365 = vadd.f32 %v1289, %v1333
          %v1366 = vadd.f32 %v1290, %v1334
          %v1367 = vadd.f32 %v1291, %v1335
          %v1368 = vadd.f32 %v1292, %v1336
          %v1369 = vadd.f32 %v1293, %v1337
          %v1370 = vadd.f32 %v1294, %v1338
          %v1371 = vadd.f32 %v1295, %v1339
          %v1372 = vadd.f32 %v1296, %v1340
          %v1373 = vadd.f32 %v1297, %v1341
          %v1374 = vadd.f32 %v1298, %v1342
          %v1375 = vadd.f32 %v1299, %v1343
          %v1376 = vadd.f32 %v1300, %v1344
          %v1377 = vadd.f32 %v1301, %v1345
          %v1378 = vadd.f32 %v1302, %v1346
          %v1379 = vadd.f32 %v1303, %v1347
          %v1380 = vadd.f32 %v1304, %v1348
          %v1381 = vadd.f32 %v1305, %v1349
          %v1382 = vadd.f32 %v1306, %v1350
          %v1383 = vadd.f32 %v1307, %v1351
          %v1384 = vadd.f32 %v1308, %v1352
          %v1385 = vadd.f32 %v1309, %v1353
          %v1386 = vadd.f32 %v1310, %v1354
          %v1387 = vadd.f32 %v1311, %v1355
          %v1388 = vadd.f32 %v1312, %v1356
          %v1389 = vadd.f32 %v1313, %v1357
          %v1390 = vadd.f32 %v1314, %v1358
          %v1391 = vpack.c.bf16 %v1361, %v1359
          %v1392 = vpack.c.bf16 %v1362, %v1360
          %v1393 = vpack.c.bf16 %v1365, %v1363
          %v1394 = vpack.c.bf16 %v1366, %v1364
          %v1395 = vpack.c.bf16 %v1369, %v1367
          %v1396 = vpack.c.bf16 %v1370, %v1368
          %v1397 = vpack.c.bf16 %v1373, %v1371
          %v1398 = vpack.c.bf16 %v1374, %v1372
          %v1399 = vpack.c.bf16 %v1377, %v1375
          %v1400 = vpack.c.bf16 %v1378, %v1376
          %v1401 = vpack.c.bf16 %v1381, %v1379
          %v1402 = vpack.c.bf16 %v1382, %v1380
          %v1403 = vpack.c.bf16 %v1385, %v1383
          %v1404 = vpack.c.bf16 %v1386, %v1384
          %v1405 = vpack.c.bf16 %v1389, %v1387
          %v1406 = vpack.c.bf16 %v1390, %v1388
          %s1407 = smul.addr %s1220, 8
          %s1408 = scalar_lea.vmem [#allocation3], %s1407
          %1409 = vst [vmem:[%s1408] sm:$0xff] %v1391
          %1410 = vst [vmem:[%s1408 + $0x8] sm:$0xff] %v1392
          %1411 = vst [vmem:[%s1408 + $0x10] sm:$0xff] %v1393
          %1412 = vst [vmem:[%s1408 + $0x18] sm:$0xff] %v1394
          %1413 = vst [vmem:[%s1408 + $0x20] sm:$0xff] %v1395
          %1414 = vst [vmem:[%s1408 + $0x28] sm:$0xff] %v1396
          %1415 = vst [vmem:[%s1408 + $0x30] sm:$0xff] %v1397
          %1416 = vst [vmem:[%s1408 + $0x38] sm:$0xff] %v1398
          %1417 = vst [vmem:[%s1408 + $0x40] sm:$0xff] %v1399
          %1418 = vst [vmem:[%s1408 + $0x48] sm:$0xff] %v1400
          %1419 = vst [vmem:[%s1408 + $0x50] sm:$0xff] %v1401
          %1420 = vst [vmem:[%s1408 + $0x58] sm:$0xff] %v1402
          %1421 = vst [vmem:[%s1408 + $0x60] sm:$0xff] %v1403
          %1422 = vst [vmem:[%s1408 + $0x68] sm:$0xff] %v1404
          %1423 = vst [vmem:[%s1408 + $0x70] sm:$0xff] %v1405
          %1424 = vst [vmem:[%s1408 + $0x78] sm:$0xff] %v1406
          %s1425 = sshra.s32 %s526, 3
          %s1426 = sand.u32 %s526, 7
          %s1427 = smul.u32 %s1425, 2
          %s1428 = smul.addr %s1427, 8
          %s1429 = scalar_lea.vmem [#allocation4], %s1428
          %v1430 = vld [vmem:[%s1429] sm:$0xff]
          %v1431 = vld [vmem:[%s1429 + $0x8] sm:$0xff]
          %v1432 = vld [vmem:[%s1429 + $0x10] sm:$0xff]
          %v1433 = vld [vmem:[%s1429 + $0x18] sm:$0xff]
          %v1434 = vld [vmem:[%s1429 + $0x20] sm:$0xff]
          %v1435 = vld [vmem:[%s1429 + $0x28] sm:$0xff]
          %v1436 = vld [vmem:[%s1429 + $0x30] sm:$0xff]
          %v1437 = vld [vmem:[%s1429 + $0x38] sm:$0xff]
          %v1438 = vld [vmem:[%s1429 + $0x40] sm:$0xff]
          %v1439 = vld [vmem:[%s1429 + $0x48] sm:$0xff]
          %v1440 = vld [vmem:[%s1429 + $0x50] sm:$0xff]
          %v1441 = vld [vmem:[%s1429 + $0x58] sm:$0xff]
          %v1442 = vld [vmem:[%s1429 + $0x60] sm:$0xff]
          %v1443 = vld [vmem:[%s1429 + $0x68] sm:$0xff]
          %v1444 = vld [vmem:[%s1429 + $0x70] sm:$0xff]
          %v1445 = vld [vmem:[%s1429 + $0x78] sm:$0xff]
          %v1446 = vld [vmem:[%s1429 + $0x80] sm:$0xff]
          %v1447 = vld [vmem:[%s1429 + $0x88] sm:$0xff]
          %v1448 = vld [vmem:[%s1429 + $0x90] sm:$0xff]
          %v1449 = vld [vmem:[%s1429 + $0x98] sm:$0xff]
          %v1450 = vld [vmem:[%s1429 + $0xa0] sm:$0xff]
          %v1451 = vld [vmem:[%s1429 + $0xa8] sm:$0xff]
          %v1452 = vld [vmem:[%s1429 + $0xb0] sm:$0xff]
          %v1453 = vld [vmem:[%s1429 + $0xb8] sm:$0xff]
          %v1454 = vld [vmem:[%s1429 + $0xc0] sm:$0xff]
          %v1455 = vld [vmem:[%s1429 + $0xc8] sm:$0xff]
          %v1456 = vld [vmem:[%s1429 + $0xd0] sm:$0xff]
          %v1457 = vld [vmem:[%s1429 + $0xd8] sm:$0xff]
          %v1458 = vld [vmem:[%s1429 + $0xe0] sm:$0xff]
          %v1459 = vld [vmem:[%s1429 + $0xe8] sm:$0xff]
          %v1460 = vld [vmem:[%s1429 + $0xf0] sm:$0xff]
          %v1461 = vld [vmem:[%s1429 + $0xf8] sm:$0xff]
          %v1462 = vadd.f32 %v1430, %v1359
          %v1463 = vadd.f32 %v1431, %v1360
          %v1464 = vadd.f32 %v1432, %v1361
          %v1465 = vadd.f32 %v1433, %v1362
          %v1466 = vadd.f32 %v1434, %v1363
          %v1467 = vadd.f32 %v1435, %v1364
          %v1468 = vadd.f32 %v1436, %v1365
          %v1469 = vadd.f32 %v1437, %v1366
          %v1470 = vadd.f32 %v1438, %v1367
          %v1471 = vadd.f32 %v1439, %v1368
          %v1472 = vadd.f32 %v1440, %v1369
          %v1473 = vadd.f32 %v1441, %v1370
          %v1474 = vadd.f32 %v1442, %v1371
          %v1475 = vadd.f32 %v1443, %v1372
          %v1476 = vadd.f32 %v1444, %v1373
          %v1477 = vadd.f32 %v1445, %v1374
          %v1478 = vadd.f32 %v1446, %v1375
          %v1479 = vadd.f32 %v1447, %v1376
          %v1480 = vadd.f32 %v1448, %v1377
          %v1481 = vadd.f32 %v1449, %v1378
          %v1482 = vadd.f32 %v1450, %v1379
          %v1483 = vadd.f32 %v1451, %v1380
          %v1484 = vadd.f32 %v1452, %v1381
          %v1485 = vadd.f32 %v1453, %v1382
          %v1486 = vadd.f32 %v1454, %v1383
          %v1487 = vadd.f32 %v1455, %v1384
          %v1488 = vadd.f32 %v1456, %v1385
          %v1489 = vadd.f32 %v1457, %v1386
          %v1490 = vadd.f32 %v1458, %v1387
          %v1491 = vadd.f32 %v1459, %v1388
          %v1492 = vadd.f32 %v1460, %v1389
          %v1493 = vadd.f32 %v1461, %v1390
          %1494 = vst [vmem:[%s1429] sm:$0xff] %v1462
          %1495 = vst [vmem:[%s1429 + $0x8] sm:$0xff] %v1463
          %1496 = vst [vmem:[%s1429 + $0x10] sm:$0xff] %v1464
          %1497 = vst [vmem:[%s1429 + $0x18] sm:$0xff] %v1465
          %1498 = vst [vmem:[%s1429 + $0x20] sm:$0xff] %v1466
          %1499 = vst [vmem:[%s1429 + $0x28] sm:$0xff] %v1467
          %1500 = vst [vmem:[%s1429 + $0x30] sm:$0xff] %v1468
          %1501 = vst [vmem:[%s1429 + $0x38] sm:$0xff] %v1469
          %1502 = vst [vmem:[%s1429 + $0x40] sm:$0xff] %v1470
          %1503 = vst [vmem:[%s1429 + $0x48] sm:$0xff] %v1471
          %1504 = vst [vmem:[%s1429 + $0x50] sm:$0xff] %v1472
          %1505 = vst [vmem:[%s1429 + $0x58] sm:$0xff] %v1473
          %1506 = vst [vmem:[%s1429 + $0x60] sm:$0xff] %v1474
          %1507 = vst [vmem:[%s1429 + $0x68] sm:$0xff] %v1475
          %1508 = vst [vmem:[%s1429 + $0x70] sm:$0xff] %v1476
          %1509 = vst [vmem:[%s1429 + $0x78] sm:$0xff] %v1477
          %1510 = vst [vmem:[%s1429 + $0x80] sm:$0xff] %v1478
          %1511 = vst [vmem:[%s1429 + $0x88] sm:$0xff] %v1479
          %1512 = vst [vmem:[%s1429 + $0x90] sm:$0xff] %v1480
          %1513 = vst [vmem:[%s1429 + $0x98] sm:$0xff] %v1481
          %1514 = vst [vmem:[%s1429 + $0xa0] sm:$0xff] %v1482
          %1515 = vst [vmem:[%s1429 + $0xa8] sm:$0xff] %v1483
          %1516 = vst [vmem:[%s1429 + $0xb0] sm:$0xff] %v1484
          %1517 = vst [vmem:[%s1429 + $0xb8] sm:$0xff] %v1485
          %1518 = vst [vmem:[%s1429 + $0xc0] sm:$0xff] %v1486
          %1519 = vst [vmem:[%s1429 + $0xc8] sm:$0xff] %v1487
          %1520 = vst [vmem:[%s1429 + $0xd0] sm:$0xff] %v1488
          %1521 = vst [vmem:[%s1429 + $0xd8] sm:$0xff] %v1489
          %1522 = vst [vmem:[%s1429 + $0xe0] sm:$0xff] %v1490
          %1523 = vst [vmem:[%s1429 + $0xe8] sm:$0xff] %v1491
          %1524 = vst [vmem:[%s1429 + $0xf0] sm:$0xff] %v1492
          %1525 = vst [vmem:[%s1429 + $0xf8] sm:$0xff] %v1493
          %p1526 = scmp.eq.s32.totalorder %s38, 3
          // Predicated region
          $region89: #{tpu_custom_call.1} parent=87 // pred_check
            %p1527 = pneg %p1526
          $region90: #{tpu_custom_call.1} parent=87 // pred_check_branch
            %1529 = sbr.rel (%p1527) target = $region92
          $region91: #{tpu_custom_call.1} parent=87 // pred_region
            %p1530 = scmp.eq.s32.totalorder %s39, 0
            // Predicated region
            $region93: #{tpu_custom_call.1} parent=91 // pred_check
              %p1531 = pneg %p1530
            $region94: #{tpu_custom_call.1} parent=91 // pred_check_branch
              %1533 = sbr.rel (%p1531) target = $region96
            $region95: #{tpu_custom_call.1} parent=91 // pred_region
              %v1534 = vlaneseq
              %vm1535 = vcmp.ge.s32.totalorder %v1534, 0
              %vm1536 = vcmp.lt.s32.totalorder %v1534, 256
              %vm1537 = vmand %vm1535, %vm1536
              %1538 = vst.msk [vmem:[#allocation5] sm:$0x3] %vm1537, 0.0
              %1539 = vst.msk [vmem:[#allocation6] sm:$0x3] %vm1537, 0.0
            $region96: #{tpu_custom_call.1} parent=91 // pred_fallthru
              _
            %v1540 = vld [vmem:[#allocation5] sm:$0x3]
            %v1541 = vadd.f32 %v1462, %v1464
            %v1542 = vadd.f32 %v1541, %v1466
            %v1543 = vadd.f32 %v1542, %v1468
            %v1544 = vadd.f32 %v1543, %v1470
            %v1545 = vadd.f32 %v1544, %v1472
            %v1546 = vadd.f32 %v1545, %v1474
            %v1547 = vadd.f32 %v1546, %v1476
            %v1548 = vadd.f32 %v1547, %v1478
            %v1549 = vadd.f32 %v1548, %v1480
            %v1550 = vadd.f32 %v1549, %v1482
            %v1551 = vadd.f32 %v1550, %v1484
            %v1552 = vadd.f32 %v1551, %v1486
            %v1553 = vadd.f32 %v1552, %v1488
            %v1554 = vadd.f32 %v1553, %v1490
            %v1555 = vadd.f32 %v1554, %v1492
            %v1556 = vrot.slane %v1555, 4
            %v1557 = vadd.f32 %v1555, %v1556
            %v1558 = vrot.slane %v1557, 2
            %v1559 = vadd.f32 %v1557, %v1558
            %v1560 = vrot.slane %v1559, 1
            %v1561 = vadd.f32 %v1559, %v1560
            %v1562 = vadd.f32 %v1463, %v1465
            %v1563 = vadd.f32 %v1562, %v1467
            %v1564 = vadd.f32 %v1563, %v1469
            %v1565 = vadd.f32 %v1564, %v1471
            %v1566 = vadd.f32 %v1565, %v1473
            %v1567 = vadd.f32 %v1566, %v1475
            %v1568 = vadd.f32 %v1567, %v1477
            %v1569 = vadd.f32 %v1568, %v1479
            %v1570 = vadd.f32 %v1569, %v1481
            %v1571 = vadd.f32 %v1570, %v1483
            %v1572 = vadd.f32 %v1571, %v1485
            %v1573 = vadd.f32 %v1572, %v1487
            %v1574 = vadd.f32 %v1573, %v1489
            %v1575 = vadd.f32 %v1574, %v1491
            %v1576 = vadd.f32 %v1575, %v1493
            %v1577 = vrot.slane %v1576, 4
            %v1578 = vadd.f32 %v1576, %v1577
            %v1579 = vrot.slane %v1578, 2
            %v1580 = vadd.f32 %v1578, %v1579
            %v1581 = vrot.slane %v1580, 1
            %v1582 = vadd.f32 %v1580, %v1581
            %v1585 = vcombine.low %v1561, %v1582
            %v1587 = vunpack.c.l.s4 1966171168
            %v1588 = vunpack.c.0.s8 %v1587
            %v1589 = vlaneseq
            %v1590 = vshrl.u32 %v1589, 7
            %v1591 = vsub.s32 %v1588, %v1590
            %v1592 = vrot.slane %v1585, %v1591
            %v1594 = vunpack.c.l.s4 1966171168
            %v1595 = vunpack.c.0.s8 %v1594
            %v1596 = vlaneseq
            %v1597 = vshrl.u32 %v1596, 7
            %v1598 = vsub.s32 %v1595, %v1597
            %v1599 = vrot.slane %v1592, %v1598
            %v1601 = vadd.f32 %v1540, %v1599
            %v1602 = vlaneseq
            %vm1603 = vcmp.ge.s32.totalorder %v1602, 0
            %vm1604 = vcmp.lt.s32.totalorder %v1602, 256
            %vm1605 = vmand %vm1603, %vm1604
            %1606 = vst.msk [vmem:[#allocation5] sm:$0x3] %vm1605, %v1601
            %v1607 = vld [vmem:[#allocation6] sm:$0x3]
            %v1608 = vmul.f32 %v1462, %v1462
            %v1609 = vmul.f32 %v1463, %v1463
            %v1610 = vmul.f32 %v1464, %v1464
            %v1611 = vmul.f32 %v1465, %v1465
            %v1612 = vmul.f32 %v1466, %v1466
            %v1613 = vmul.f32 %v1467, %v1467
            %v1614 = vmul.f32 %v1468, %v1468
            %v1615 = vmul.f32 %v1469, %v1469
            %v1616 = vmul.f32 %v1470, %v1470
            %v1617 = vmul.f32 %v1471, %v1471
            %v1618 = vmul.f32 %v1472, %v1472
            %v1619 = vmul.f32 %v1473, %v1473
            %v1620 = vmul.f32 %v1474, %v1474
            %v1621 = vmul.f32 %v1475, %v1475
            %v1622 = vmul.f32 %v1476, %v1476
            %v1623 = vmul.f32 %v1477, %v1477
            %v1624 = vmul.f32 %v1478, %v1478
            %v1625 = vmul.f32 %v1479, %v1479
            %v1626 = vmul.f32 %v1480, %v1480
            %v1627 = vmul.f32 %v1481, %v1481
            %v1628 = vmul.f32 %v1482, %v1482
            %v1629 = vmul.f32 %v1483, %v1483
            %v1630 = vmul.f32 %v1484, %v1484
            %v1631 = vmul.f32 %v1485, %v1485
            %v1632 = vmul.f32 %v1486, %v1486
            %v1633 = vmul.f32 %v1487, %v1487
            %v1634 = vmul.f32 %v1488, %v1488
            %v1635 = vmul.f32 %v1489, %v1489
            %v1636 = vmul.f32 %v1490, %v1490
            %v1637 = vmul.f32 %v1491, %v1491
            %v1638 = vmul.f32 %v1492, %v1492
            %v1639 = vmul.f32 %v1493, %v1493
            %v1640 = vadd.f32 %v1608, %v1610
            %v1641 = vadd.f32 %v1640, %v1612
            %v1642 = vadd.f32 %v1641, %v1614
            %v1643 = vadd.f32 %v1642, %v1616
            %v1644 = vadd.f32 %v1643, %v1618
            %v1645 = vadd.f32 %v1644, %v1620
            %v1646 = vadd.f32 %v1645, %v1622
            %v1647 = vadd.f32 %v1646, %v1624
            %v1648 = vadd.f32 %v1647, %v1626
            %v1649 = vadd.f32 %v1648, %v1628
            %v1650 = vadd.f32 %v1649, %v1630
            %v1651 = vadd.f32 %v1650, %v1632
            %v1652 = vadd.f32 %v1651, %v1634
            %v1653 = vadd.f32 %v1652, %v1636
            %v1654 = vadd.f32 %v1653, %v1638
            %v1655 = vrot.slane %v1654, 4
            %v1656 = vadd.f32 %v1654, %v1655
            %v1657 = vrot.slane %v1656, 2
            %v1658 = vadd.f32 %v1656, %v1657
            %v1659 = vrot.slane %v1658, 1
            %v1660 = vadd.f32 %v1658, %v1659
            %v1661 = vadd.f32 %v1609, %v1611
            %v1662 = vadd.f32 %v1661, %v1613
            %v1663 = vadd.f32 %v1662, %v1615
            %v1664 = vadd.f32 %v1663, %v1617
            %v1665 = vadd.f32 %v1664, %v1619
            %v1666 = vadd.f32 %v1665, %v1621
            %v1667 = vadd.f32 %v1666, %v1623
            %v1668 = vadd.f32 %v1667, %v1625
            %v1669 = vadd.f32 %v1668, %v1627
            %v1670 = vadd.f32 %v1669, %v1629
            %v1671 = vadd.f32 %v1670, %v1631
            %v1672 = vadd.f32 %v1671, %v1633
            %v1673 = vadd.f32 %v1672, %v1635
            %v1674 = vadd.f32 %v1673, %v1637
            %v1675 = vadd.f32 %v1674, %v1639
            %v1676 = vrot.slane %v1675, 4
            %v1677 = vadd.f32 %v1675, %v1676
            %v1678 = vrot.slane %v1677, 2
            %v1679 = vadd.f32 %v1677, %v1678
            %v1680 = vrot.slane %v1679, 1
            %v1681 = vadd.f32 %v1679, %v1680
            %v1684 = vcombine.low %v1660, %v1681
            %v1686 = vunpack.c.l.s4 1966171168
            %v1687 = vunpack.c.0.s8 %v1686
            %v1688 = vlaneseq
            %v1689 = vshrl.u32 %v1688, 7
            %v1690 = vsub.s32 %v1687, %v1689
            %v1691 = vrot.slane %v1684, %v1690
            %v1693 = vunpack.c.l.s4 1966171168
            %v1694 = vunpack.c.0.s8 %v1693
            %v1695 = vlaneseq
            %v1696 = vshrl.u32 %v1695, 7
            %v1697 = vsub.s32 %v1694, %v1696
            %v1698 = vrot.slane %v1691, %v1697
            %v1700 = vadd.f32 %v1607, %v1698
            %1701 = vst.msk [vmem:[#allocation6] sm:$0x3] %vm1605, %v1700
          $region92: #{tpu_custom_call.1} parent=87 // pred_fallthru
            _
        $region88: #{tpu_custom_call.1} parent=63 // pred_fallthru
          _
        %p1702 = scmp.ne.s32.totalorder %s1019, 1
        %p1703 = pnand %p1007, %p1702
        %p1704 = pneg %p1703
        // Predicated region
        $region97: #{tpu_custom_call.1} parent=63 // pred_check
          _
        $region98: #{tpu_custom_call.1} parent=63 // pred_check_branch
          %1706 = sbr.rel (%p1703) target = $region100
        $region99: #{tpu_custom_call.1} parent=63 // pred_region
          %v1707 = vld [vmem:[#allocation3] sm:$0xff]
          %v1708 = vld [vmem:[#allocation3 + $0x8] sm:$0xff]
          %v1709 = vld [vmem:[#allocation3 + $0x10] sm:$0xff]
          %v1710 = vld [vmem:[#allocation3 + $0x18] sm:$0xff]
          %v1711 = vld [vmem:[#allocation3 + $0x20] sm:$0xff]
          %v1712 = vld [vmem:[#allocation3 + $0x28] sm:$0xff]
          %v1713 = vld [vmem:[#allocation3 + $0x30] sm:$0xff]
          %v1714 = vld [vmem:[#allocation3 + $0x38] sm:$0xff]
          %v1715 = vld [vmem:[#allocation3 + $0x40] sm:$0xff]
          %v1716 = vld [vmem:[#allocation3 + $0x48] sm:$0xff]
          %v1717 = vld [vmem:[#allocation3 + $0x50] sm:$0xff]
          %v1718 = vld [vmem:[#allocation3 + $0x58] sm:$0xff]
          %v1719 = vld [vmem:[#allocation3 + $0x60] sm:$0xff]
          %v1720 = vld [vmem:[#allocation3 + $0x68] sm:$0xff]
          %v1721 = vld [vmem:[#allocation3 + $0x70] sm:$0xff]
          %v1722 = vld [vmem:[#allocation3 + $0x78] sm:$0xff]
          %v1723 = vld [vmem:[%s461] sm:$0xf]
          %v1724 = vld [vmem:[%s461 + $0x4] sm:$0xf]
          %v1725 = vld [vmem:[%s461 + $0x8] sm:$0xf]
          %v1726 = vld [vmem:[%s461 + $0xc] sm:$0xf]
          %v1727 = vld [vmem:[%s461 + $0x10] sm:$0xf]
          %v1728 = vld [vmem:[%s461 + $0x14] sm:$0xf]
          %v1729 = vld [vmem:[%s461 + $0x18] sm:$0xf]
          %v1730 = vld [vmem:[%s461 + $0x1c] sm:$0xf]
          %v1731 = vld [vmem:[%s461 + $0x20] sm:$0xf]
          %v1732 = vld [vmem:[%s461 + $0x24] sm:$0xf]
          %v1733 = vld [vmem:[%s461 + $0x28] sm:$0xf]
          %v1734 = vld [vmem:[%s461 + $0x2c] sm:$0xf]
          %v1735 = vld [vmem:[%s461 + $0x30] sm:$0xf]
          %v1736 = vld [vmem:[%s461 + $0x34] sm:$0xf]
          %v1737 = vld [vmem:[%s461 + $0x38] sm:$0xf]
          %v1738 = vld [vmem:[%s461 + $0x3c] sm:$0xf]
          %v1755 = vunpack.c.l.b16 %v1723
          %v1756 = vunpack.c.l.b16 %v1724
          %v1757 = vunpack.c.l.b16 %v1725
          %v1758 = vunpack.c.l.b16 %v1726
          %v1759 = vunpack.c.l.b16 %v1727
          %v1760 = vunpack.c.l.b16 %v1728
          %v1761 = vunpack.c.l.b16 %v1729
          %v1762 = vunpack.c.l.b16 %v1730
          %v1763 = vunpack.c.l.b16 %v1731
          %v1764 = vunpack.c.l.b16 %v1732
          %v1765 = vunpack.c.l.b16 %v1733
          %v1766 = vunpack.c.l.b16 %v1734
          %v1767 = vunpack.c.l.b16 %v1735
          %v1768 = vunpack.c.l.b16 %v1736
          %v1769 = vunpack.c.l.b16 %v1737
          %v1770 = vunpack.c.l.b16 %v1738
          %v1771 = vpack.c.b16 %v1756, %v1755
          %v1772 = vpack.c.b16 %v1758, %v1757
          %v1773 = vpack.c.b16 %v1760, %v1759
          %v1774 = vpack.c.b16 %v1762, %v1761
          %v1775 = vpack.c.b16 %v1764, %v1763
          %v1776 = vpack.c.b16 %v1766, %v1765
          %v1777 = vpack.c.b16 %v1768, %v1767
          %v1778 = vpack.c.b16 %v1770, %v1769
          %1787 = vmatprep.subr.bf16.mxu0 %v1708
          %1788 = vmatpush1.bf16.msra.mxu0 %v1707
          %1789 = vmatprep.subr.bf16.mxu0 %v1710
          %1790 = vmatpush1.bf16.msra.mxu0 %v1709
          %1791 = vmatprep.subr.bf16.mxu0 %v1712
          %1792 = vmatpush1.bf16.msra.mxu0 %v1711
          %1793 = vmatprep.subr.bf16.mxu0 %v1714
          %1794 = vmatpush1.bf16.msra.mxu0 %v1713
          %1795 = vmatprep.subr.bf16.mxu0 %v1716
          %1796 = vmatpush1.bf16.msra.mxu0 %v1715
          %1797 = vmatprep.subr.bf16.mxu0 %v1718
          %1798 = vmatpush1.bf16.msra.mxu0 %v1717
          %1799 = vmatprep.subr.bf16.mxu0 %v1720
          %1800 = vmatpush1.bf16.msra.mxu0 %v1719
          %1801 = vmatprep.subr.bf16.mxu0 %v1722
          %1802 = vmatpush1.bf16.msra.mxu0 %v1721
          %1803 = vmatprep.subr.bf16.mxu0 0
          %1804 = vmatpush1.bf16.msra.mxu0 0
          %1805 = vmatprep.subr.bf16.mxu0 0
          %1806 = vmatpush1.bf16.msra.mxu0 0
          %1807 = vmatprep.subr.bf16.mxu0 0
          %1808 = vmatpush1.bf16.msra.mxu0 0
          %1809 = vmatprep.subr.bf16.mxu0 0
          %1810 = vmatpush1.bf16.msra.mxu0 0
          %1811 = vmatprep.subr.bf16.mxu0 0
          %1812 = vmatpush1.bf16.msra.mxu0 0
          %1813 = vmatprep.subr.bf16.mxu0 0
          %1814 = vmatpush1.bf16.msra.mxu0 0
          %1815 = vmatprep.subr.bf16.mxu0 0
          %1816 = vmatpush1.bf16.msra.mxu0 0
          %1817 = vmatprep.subr.bf16.mxu0 0
          %1818 = vmatpush1.bf16.msra.mxu0 0
          %1819 = vmatprep.mubr.bf16.mxu0 0
          %1820 = vmatmul.mubr.bf16.gmra.mrb[0].mxu0 %v1771
          %v1821 = vpop.f32.mrb[0].mxu0
          %v1822 = vadd.f32 0.0, %v1821
          %v1823 = vpop.f32.mrb[0].mxu0
          %v1824 = vadd.f32 0.0, %v1823
          %v1825 = vpop.f32.mrb[0].mxu0
          %v1826 = vadd.f32 0.0, %v1825
          %v1827 = vpop.f32.mrb[0].mxu0
          %v1828 = vadd.f32 0.0, %v1827
          %1829 = vmatprep.mubr.bf16.mxu0 0
          %1830 = vmatmul.mubr.bf16.gmra.mrb[0].mxu0 %v1772
          %v1831 = vpop.f32.mrb[0].mxu0
          %v1832 = vadd.f32 0.0, %v1831
          %v1833 = vpop.f32.mrb[0].mxu0
          %v1834 = vadd.f32 0.0, %v1833
          %v1835 = vpop.f32.mrb[0].mxu0
          %v1836 = vadd.f32 0.0, %v1835
          %v1837 = vpop.f32.mrb[0].mxu0
          %v1838 = vadd.f32 0.0, %v1837
          %1839 = vmatprep.mubr.bf16.mxu0 0
          %1840 = vmatmul.mubr.bf16.gmra.mrb[0].mxu0 %v1773
          %v1841 = vpop.f32.mrb[0].mxu0
          %v1842 = vadd.f32 0.0, %v1841
          %v1843 = vpop.f32.mrb[0].mxu0
          %v1844 = vadd.f32 0.0, %v1843
          %v1845 = vpop.f32.mrb[0].mxu0
          %v1846 = vadd.f32 0.0, %v1845
          %v1847 = vpop.f32.mrb[0].mxu0
          %v1848 = vadd.f32 0.0, %v1847
          %1849 = vmatprep.mubr.bf16.mxu0 0
          %1850 = vmatmul.mubr.bf16.gmra.mrb[0].mxu0 %v1774
          %v1851 = vpop.f32.mrb[0].mxu0
          %v1852 = vadd.f32 0.0, %v1851
          %v1853 = vpop.f32.mrb[0].mxu0
          %v1854 = vadd.f32 0.0, %v1853
          %v1855 = vpop.f32.mrb[0].mxu0
          %v1856 = vadd.f32 0.0, %v1855
          %v1857 = vpop.f32.mrb[0].mxu0
          %v1858 = vadd.f32 0.0, %v1857
          %1859 = vmatprep.mubr.bf16.mxu0 0
          %1860 = vmatmul.mubr.bf16.gmra.mrb[0].mxu0 %v1775
          %v1861 = vpop.f32.mrb[0].mxu0
          %v1862 = vadd.f32 0.0, %v1861
          %v1863 = vpop.f32.mrb[0].mxu0
          %v1864 = vadd.f32 0.0, %v1863
          %v1865 = vpop.f32.mrb[0].mxu0
          %v1866 = vadd.f32 0.0, %v1865
          %v1867 = vpop.f32.mrb[0].mxu0
          %v1868 = vadd.f32 0.0, %v1867
          %1869 = vmatprep.mubr.bf16.mxu0 0
          %1870 = vmatmul.mubr.bf16.gmra.mrb[0].mxu0 %v1776
          %v1871 = vpop.f32.mrb[0].mxu0
          %v1872 = vadd.f32 0.0, %v1871
          %v1873 = vpop.f32.mrb[0].mxu0
          %v1874 = vadd.f32 0.0, %v1873
          %v1875 = vpop.f32.mrb[0].mxu0
          %v1876 = vadd.f32 0.0, %v1875
          %v1877 = vpop.f32.mrb[0].mxu0
          %v1878 = vadd.f32 0.0, %v1877
          %1879 = vmatprep.mubr.bf16.mxu0 0
          %1880 = vmatmul.mubr.bf16.gmra.mrb[0].mxu0 %v1777
          %v1881 = vpop.f32.mrb[0].mxu0
          %v1882 = vadd.f32 0.0, %v1881
          %v1883 = vpop.f32.mrb[0].mxu0
          %v1884 = vadd.f32 0.0, %v1883
          %v1885 = vpop.f32.mrb[0].mxu0
          %v1886 = vadd.f32 0.0, %v1885
          %v1887 = vpop.f32.mrb[0].mxu0
          %v1888 = vadd.f32 0.0, %v1887
          %1889 = vmatprep.mubr.bf16.mxu0 0
          %1890 = vmatmul.mubr.bf16.gmra.mrb[0].mxu0 %v1778
          %v1891 = vpop.f32.mrb[0].mxu0
          %v1892 = vadd.f32 0.0, %v1891
          %v1893 = vpop.f32.mrb[0].mxu0
          %v1894 = vadd.f32 0.0, %v1893
          %v1895 = vpop.f32.mrb[0].mxu0
          %v1896 = vadd.f32 0.0, %v1895
          %v1897 = vpop.f32.mrb[0].mxu0
          %v1898 = vadd.f32 0.0, %v1897
          %1899 = vdwg.mxu0
          %s1900 = sshra.s32 %s526, 4
          %s1901 = sand.u32 %s526, 15
          %s1902 = smul.u32 %s1900, 2
          %s1903 = smul.addr %s1902, 8
          %s1904 = scalar_lea.vmem [#allocation3], %s1903
          %v1905 = vld [vmem:[%s1904] sm:$0xff]
          %v1906 = vld [vmem:[%s1904 + $0x8] sm:$0xff]
          %v1907 = vld [vmem:[%s1904 + $0x10] sm:$0xff]
          %v1908 = vld [vmem:[%s1904 + $0x18] sm:$0xff]
          %v1909 = vld [vmem:[%s1904 + $0x20] sm:$0xff]
          %v1910 = vld [vmem:[%s1904 + $0x28] sm:$0xff]
          %v1911 = vld [vmem:[%s1904 + $0x30] sm:$0xff]
          %v1912 = vld [vmem:[%s1904 + $0x38] sm:$0xff]
          %v1913 = vld [vmem:[%s1904 + $0x40] sm:$0xff]
          %v1914 = vld [vmem:[%s1904 + $0x48] sm:$0xff]
          %v1915 = vld [vmem:[%s1904 + $0x50] sm:$0xff]
          %v1916 = vld [vmem:[%s1904 + $0x58] sm:$0xff]
          %v1917 = vld [vmem:[%s1904 + $0x60] sm:$0xff]
          %v1918 = vld [vmem:[%s1904 + $0x68] sm:$0xff]
          %v1919 = vld [vmem:[%s1904 + $0x70] sm:$0xff]
          %v1920 = vld [vmem:[%s1904 + $0x78] sm:$0xff]
          %v1921 = vunpack.c.l.bf16 %v1905
          %v1922 = vunpack.c.l.bf16 %v1906
          %v1923 = vunpack.c.h.bf16 %v1905
          %v1924 = vunpack.c.h.bf16 %v1906
          %v1925 = vunpack.c.l.bf16 %v1907
          %v1926 = vunpack.c.l.bf16 %v1908
          %v1927 = vunpack.c.h.bf16 %v1907
          %v1928 = vunpack.c.h.bf16 %v1908
          %v1929 = vunpack.c.l.bf16 %v1909
          %v1930 = vunpack.c.l.bf16 %v1910
          %v1931 = vunpack.c.h.bf16 %v1909
          %v1932 = vunpack.c.h.bf16 %v1910
          %v1933 = vunpack.c.l.bf16 %v1911
          %v1934 = vunpack.c.l.bf16 %v1912
          %v1935 = vunpack.c.h.bf16 %v1911
          %v1936 = vunpack.c.h.bf16 %v1912
          %v1937 = vunpack.c.l.bf16 %v1913
          %v1938 = vunpack.c.l.bf16 %v1914
          %v1939 = vunpack.c.h.bf16 %v1913
          %v1940 = vunpack.c.h.bf16 %v1914
          %v1941 = vunpack.c.l.bf16 %v1915
          %v1942 = vunpack.c.l.bf16 %v1916
          %v1943 = vunpack.c.h.bf16 %v1915
          %v1944 = vunpack.c.h.bf16 %v1916
          %v1945 = vunpack.c.l.bf16 %v1917
          %v1946 = vunpack.c.l.bf16 %v1918
          %v1947 = vunpack.c.h.bf16 %v1917
          %v1948 = vunpack.c.h.bf16 %v1918
          %v1949 = vunpack.c.l.bf16 %v1919
          %v1950 = vunpack.c.l.bf16 %v1920
          %v1951 = vunpack.c.h.bf16 %v1919
          %v1952 = vunpack.c.h.bf16 %v1920
          %v1953 = vld [vmem:[%s9] sm:$0x3]
          %v1955 = vlaneseq
          %v1956 = vshrl.u32 %v1955, 7
          %v1957 = vsub.s32 0, %v1956
          %v1958 = vrot.slane %v1953, %v1957
          %v1959 = vlaneseq
          %v1960 = vshrl.u32 %v1959, 7
          %v1961 = vsub.s32 1, %v1960
          %v1962 = vrot.slane %v1953, %v1961
          %v1965 = vmul.f32 %v1822, %v1958
          %v1966 = vmul.f32 %v1824, %v1962
          %v1967 = vmul.f32 %v1826, %v1958
          %v1968 = vmul.f32 %v1828, %v1962
          %v1969 = vmul.f32 %v1832, %v1958
          %v1970 = vmul.f32 %v1834, %v1962
          %v1971 = vmul.f32 %v1836, %v1958
          %v1972 = vmul.f32 %v1838, %v1962
          %v1973 = vmul.f32 %v1842, %v1958
          %v1974 = vmul.f32 %v1844, %v1962
          %v1975 = vmul.f32 %v1846, %v1958
          %v1976 = vmul.f32 %v1848, %v1962
          %v1977 = vmul.f32 %v1852, %v1958
          %v1978 = vmul.f32 %v1854, %v1962
          %v1979 = vmul.f32 %v1856, %v1958
          %v1980 = vmul.f32 %v1858, %v1962
          %v1981 = vmul.f32 %v1862, %v1958
          %v1982 = vmul.f32 %v1864, %v1962
          %v1983 = vmul.f32 %v1866, %v1958
          %v1984 = vmul.f32 %v1868, %v1962
          %v1985 = vmul.f32 %v1872, %v1958
          %v1986 = vmul.f32 %v1874, %v1962
          %v1987 = vmul.f32 %v1876, %v1958
          %v1988 = vmul.f32 %v1878, %v1962
          %v1989 = vmul.f32 %v1882, %v1958
          %v1990 = vmul.f32 %v1884, %v1962
          %v1991 = vmul.f32 %v1886, %v1958
          %v1992 = vmul.f32 %v1888, %v1962
          %v1993 = vmul.f32 %v1892, %v1958
          %v1994 = vmul.f32 %v1894, %v1962
          %v1995 = vmul.f32 %v1896, %v1958
          %v1996 = vmul.f32 %v1898, %v1962
          %v1997 = vld [vmem:[%s10] sm:$0x3]
          %v1999 = vlaneseq
          %v2000 = vshrl.u32 %v1999, 7
          %v2001 = vsub.s32 0, %v2000
          %v2002 = vrot.slane %v1997, %v2001
          %v2003 = vlaneseq
          %v2004 = vshrl.u32 %v2003, 7
          %v2005 = vsub.s32 1, %v2004
          %v2006 = vrot.slane %v1997, %v2005
          %v2009 = vmul.f32 %v1921, %v2002
          %v2010 = vmul.f32 %v1922, %v2006
          %v2011 = vmul.f32 %v1923, %v2002
          %v2012 = vmul.f32 %v1924, %v2006
          %v2013 = vmul.f32 %v1925, %v2002
          %v2014 = vmul.f32 %v1926, %v2006
          %v2015 = vmul.f32 %v1927, %v2002
          %v2016 = vmul.f32 %v1928, %v2006
          %v2017 = vmul.f32 %v1929, %v2002
          %v2018 = vmul.f32 %v1930, %v2006
          %v2019 = vmul.f32 %v1931, %v2002
          %v2020 = vmul.f32 %v1932, %v2006
          %v2021 = vmul.f32 %v1933, %v2002
          %v2022 = vmul.f32 %v1934, %v2006
          %v2023 = vmul.f32 %v1935, %v2002
          %v2024 = vmul.f32 %v1936, %v2006
          %v2025 = vmul.f32 %v1937, %v2002
          %v2026 = vmul.f32 %v1938, %v2006
          %v2027 = vmul.f32 %v1939, %v2002
          %v2028 = vmul.f32 %v1940, %v2006
          %v2029 = vmul.f32 %v1941, %v2002
          %v2030 = vmul.f32 %v1942, %v2006
          %v2031 = vmul.f32 %v1943, %v2002
          %v2032 = vmul.f32 %v1944, %v2006
          %v2033 = vmul.f32 %v1945, %v2002
          %v2034 = vmul.f32 %v1946, %v2006
          %v2035 = vmul.f32 %v1947, %v2002
          %v2036 = vmul.f32 %v1948, %v2006
          %v2037 = vmul.f32 %v1949, %v2002
          %v2038 = vmul.f32 %v1950, %v2006
          %v2039 = vmul.f32 %v1951, %v2002
          %v2040 = vmul.f32 %v1952, %v2006
          %v2041 = vadd.f32 %v1965, %v2009
          %v2042 = vadd.f32 %v1966, %v2010
          %v2043 = vadd.f32 %v1967, %v2011
          %v2044 = vadd.f32 %v1968, %v2012
          %v2045 = vadd.f32 %v1969, %v2013
          %v2046 = vadd.f32 %v1970, %v2014
          %v2047 = vadd.f32 %v1971, %v2015
          %v2048 = vadd.f32 %v1972, %v2016
          %v2049 = vadd.f32 %v1973, %v2017
          %v2050 = vadd.f32 %v1974, %v2018
          %v2051 = vadd.f32 %v1975, %v2019
          %v2052 = vadd.f32 %v1976, %v2020
          %v2053 = vadd.f32 %v1977, %v2021
          %v2054 = vadd.f32 %v1978, %v2022
          %v2055 = vadd.f32 %v1979, %v2023
          %v2056 = vadd.f32 %v1980, %v2024
          %v2057 = vadd.f32 %v1981, %v2025
          %v2058 = vadd.f32 %v1982, %v2026
          %v2059 = vadd.f32 %v1983, %v2027
          %v2060 = vadd.f32 %v1984, %v2028
          %v2061 = vadd.f32 %v1985, %v2029
          %v2062 = vadd.f32 %v1986, %v2030
          %v2063 = vadd.f32 %v1987, %v2031
          %v2064 = vadd.f32 %v1988, %v2032
          %v2065 = vadd.f32 %v1989, %v2033
          %v2066 = vadd.f32 %v1990, %v2034
          %v2067 = vadd.f32 %v1991, %v2035
          %v2068 = vadd.f32 %v1992, %v2036
          %v2069 = vadd.f32 %v1993, %v2037
          %v2070 = vadd.f32 %v1994, %v2038
          %v2071 = vadd.f32 %v1995, %v2039
          %v2072 = vadd.f32 %v1996, %v2040
          %v2073 = vpack.c.bf16 %v2043, %v2041
          %v2074 = vpack.c.bf16 %v2044, %v2042
          %v2075 = vpack.c.bf16 %v2047, %v2045
          %v2076 = vpack.c.bf16 %v2048, %v2046
          %v2077 = vpack.c.bf16 %v2051, %v2049
          %v2078 = vpack.c.bf16 %v2052, %v2050
          %v2079 = vpack.c.bf16 %v2055, %v2053
          %v2080 = vpack.c.bf16 %v2056, %v2054
          %v2081 = vpack.c.bf16 %v2059, %v2057
          %v2082 = vpack.c.bf16 %v2060, %v2058
          %v2083 = vpack.c.bf16 %v2063, %v2061
          %v2084 = vpack.c.bf16 %v2064, %v2062
          %v2085 = vpack.c.bf16 %v2067, %v2065
          %v2086 = vpack.c.bf16 %v2068, %v2066
          %v2087 = vpack.c.bf16 %v2071, %v2069
          %v2088 = vpack.c.bf16 %v2072, %v2070
          %s2089 = smul.addr %s1902, 8
          %s2090 = scalar_lea.vmem [#allocation2], %s2089
          %2091 = vst [vmem:[%s2090] sm:$0xff] %v2073
          %2092 = vst [vmem:[%s2090 + $0x8] sm:$0xff] %v2074
          %2093 = vst [vmem:[%s2090 + $0x10] sm:$0xff] %v2075
          %2094 = vst [vmem:[%s2090 + $0x18] sm:$0xff] %v2076
          %2095 = vst [vmem:[%s2090 + $0x20] sm:$0xff] %v2077
          %2096 = vst [vmem:[%s2090 + $0x28] sm:$0xff] %v2078
          %2097 = vst [vmem:[%s2090 + $0x30] sm:$0xff] %v2079
          %2098 = vst [vmem:[%s2090 + $0x38] sm:$0xff] %v2080
          %2099 = vst [vmem:[%s2090 + $0x40] sm:$0xff] %v2081
          %2100 = vst [vmem:[%s2090 + $0x48] sm:$0xff] %v2082
          %2101 = vst [vmem:[%s2090 + $0x50] sm:$0xff] %v2083
          %2102 = vst [vmem:[%s2090 + $0x58] sm:$0xff] %v2084
          %2103 = vst [vmem:[%s2090 + $0x60] sm:$0xff] %v2085
          %2104 = vst [vmem:[%s2090 + $0x68] sm:$0xff] %v2086
          %2105 = vst [vmem:[%s2090 + $0x70] sm:$0xff] %v2087
          %2106 = vst [vmem:[%s2090 + $0x78] sm:$0xff] %v2088
          %s2107 = sshra.s32 %s526, 3
          %s2108 = sand.u32 %s526, 7
          %s2109 = smul.u32 %s2107, 2
          %s2110 = smul.addr %s2109, 8
          %s2111 = scalar_lea.vmem [#allocation4], %s2110
          %v2112 = vld [vmem:[%s2111] sm:$0xff]
          %v2113 = vld [vmem:[%s2111 + $0x8] sm:$0xff]
          %v2114 = vld [vmem:[%s2111 + $0x10] sm:$0xff]
          %v2115 = vld [vmem:[%s2111 + $0x18] sm:$0xff]
          %v2116 = vld [vmem:[%s2111 + $0x20] sm:$0xff]
          %v2117 = vld [vmem:[%s2111 + $0x28] sm:$0xff]
          %v2118 = vld [vmem:[%s2111 + $0x30] sm:$0xff]
          %v2119 = vld [vmem:[%s2111 + $0x38] sm:$0xff]
          %v2120 = vld [vmem:[%s2111 + $0x40] sm:$0xff]
          %v2121 = vld [vmem:[%s2111 + $0x48] sm:$0xff]
          %v2122 = vld [vmem:[%s2111 + $0x50] sm:$0xff]
          %v2123 = vld [vmem:[%s2111 + $0x58] sm:$0xff]
          %v2124 = vld [vmem:[%s2111 + $0x60] sm:$0xff]
          %v2125 = vld [vmem:[%s2111 + $0x68] sm:$0xff]
          %v2126 = vld [vmem:[%s2111 + $0x70] sm:$0xff]
          %v2127 = vld [vmem:[%s2111 + $0x78] sm:$0xff]
          %v2128 = vld [vmem:[%s2111 + $0x80] sm:$0xff]
          %v2129 = vld [vmem:[%s2111 + $0x88] sm:$0xff]
          %v2130 = vld [vmem:[%s2111 + $0x90] sm:$0xff]
          %v2131 = vld [vmem:[%s2111 + $0x98] sm:$0xff]
          %v2132 = vld [vmem:[%s2111 + $0xa0] sm:$0xff]
          %v2133 = vld [vmem:[%s2111 + $0xa8] sm:$0xff]
          %v2134 = vld [vmem:[%s2111 + $0xb0] sm:$0xff]
          %v2135 = vld [vmem:[%s2111 + $0xb8] sm:$0xff]
          %v2136 = vld [vmem:[%s2111 + $0xc0] sm:$0xff]
          %v2137 = vld [vmem:[%s2111 + $0xc8] sm:$0xff]
          %v2138 = vld [vmem:[%s2111 + $0xd0] sm:$0xff]
          %v2139 = vld [vmem:[%s2111 + $0xd8] sm:$0xff]
          %v2140 = vld [vmem:[%s2111 + $0xe0] sm:$0xff]
          %v2141 = vld [vmem:[%s2111 + $0xe8] sm:$0xff]
          %v2142 = vld [vmem:[%s2111 + $0xf0] sm:$0xff]
          %v2143 = vld [vmem:[%s2111 + $0xf8] sm:$0xff]
          %v2144 = vadd.f32 %v2112, %v2041
          %v2145 = vadd.f32 %v2113, %v2042
          %v2146 = vadd.f32 %v2114, %v2043
          %v2147 = vadd.f32 %v2115, %v2044
          %v2148 = vadd.f32 %v2116, %v2045
          %v2149 = vadd.f32 %v2117, %v2046
          %v2150 = vadd.f32 %v2118, %v2047
          %v2151 = vadd.f32 %v2119, %v2048
          %v2152 = vadd.f32 %v2120, %v2049
          %v2153 = vadd.f32 %v2121, %v2050
          %v2154 = vadd.f32 %v2122, %v2051
          %v2155 = vadd.f32 %v2123, %v2052
          %v2156 = vadd.f32 %v2124, %v2053
          %v2157 = vadd.f32 %v2125, %v2054
          %v2158 = vadd.f32 %v2126, %v2055
          %v2159 = vadd.f32 %v2127, %v2056
          %v2160 = vadd.f32 %v2128, %v2057
          %v2161 = vadd.f32 %v2129, %v2058
          %v2162 = vadd.f32 %v2130, %v2059
          %v2163 = vadd.f32 %v2131, %v2060
          %v2164 = vadd.f32 %v2132, %v2061
          %v2165 = vadd.f32 %v2133, %v2062
          %v2166 = vadd.f32 %v2134, %v2063
          %v2167 = vadd.f32 %v2135, %v2064
          %v2168 = vadd.f32 %v2136, %v2065
          %v2169 = vadd.f32 %v2137, %v2066
          %v2170 = vadd.f32 %v2138, %v2067
          %v2171 = vadd.f32 %v2139, %v2068
          %v2172 = vadd.f32 %v2140, %v2069
          %v2173 = vadd.f32 %v2141, %v2070
          %v2174 = vadd.f32 %v2142, %v2071
          %v2175 = vadd.f32 %v2143, %v2072
          %2176 = vst [vmem:[%s2111] sm:$0xff] %v2144
          %2177 = vst [vmem:[%s2111 + $0x8] sm:$0xff] %v2145
          %2178 = vst [vmem:[%s2111 + $0x10] sm:$0xff] %v2146
          %2179 = vst [vmem:[%s2111 + $0x18] sm:$0xff] %v2147
          %2180 = vst [vmem:[%s2111 + $0x20] sm:$0xff] %v2148
          %2181 = vst [vmem:[%s2111 + $0x28] sm:$0xff] %v2149
          %2182 = vst [vmem:[%s2111 + $0x30] sm:$0xff] %v2150
          %2183 = vst [vmem:[%s2111 + $0x38] sm:$0xff] %v2151
          %2184 = vst [vmem:[%s2111 + $0x40] sm:$0xff] %v2152
          %2185 = vst [vmem:[%s2111 + $0x48] sm:$0xff] %v2153
          %2186 = vst [vmem:[%s2111 + $0x50] sm:$0xff] %v2154
          %2187 = vst [vmem:[%s2111 + $0x58] sm:$0xff] %v2155
          %2188 = vst [vmem:[%s2111 + $0x60] sm:$0xff] %v2156
          %2189 = vst [vmem:[%s2111 + $0x68] sm:$0xff] %v2157
          %2190 = vst [vmem:[%s2111 + $0x70] sm:$0xff] %v2158
          %2191 = vst [vmem:[%s2111 + $0x78] sm:$0xff] %v2159
          %2192 = vst [vmem:[%s2111 + $0x80] sm:$0xff] %v2160
          %2193 = vst [vmem:[%s2111 + $0x88] sm:$0xff] %v2161
          %2194 = vst [vmem:[%s2111 + $0x90] sm:$0xff] %v2162
          %2195 = vst [vmem:[%s2111 + $0x98] sm:$0xff] %v2163
          %2196 = vst [vmem:[%s2111 + $0xa0] sm:$0xff] %v2164
          %2197 = vst [vmem:[%s2111 + $0xa8] sm:$0xff] %v2165
          %2198 = vst [vmem:[%s2111 + $0xb0] sm:$0xff] %v2166
          %2199 = vst [vmem:[%s2111 + $0xb8] sm:$0xff] %v2167
          %2200 = vst [vmem:[%s2111 + $0xc0] sm:$0xff] %v2168
          %2201 = vst [vmem:[%s2111 + $0xc8] sm:$0xff] %v2169
          %2202 = vst [vmem:[%s2111 + $0xd0] sm:$0xff] %v2170
          %2203 = vst [vmem:[%s2111 + $0xd8] sm:$0xff] %v2171
          %2204 = vst [vmem:[%s2111 + $0xe0] sm:$0xff] %v2172
          %2205 = vst [vmem:[%s2111 + $0xe8] sm:$0xff] %v2173
          %2206 = vst [vmem:[%s2111 + $0xf0] sm:$0xff] %v2174
          %2207 = vst [vmem:[%s2111 + $0xf8] sm:$0xff] %v2175
          %p2208 = scmp.eq.s32.totalorder %s38, 3
          // Predicated region
          $region101: #{tpu_custom_call.1} parent=99 // pred_check
            %p2209 = pneg %p2208
          $region102: #{tpu_custom_call.1} parent=99 // pred_check_branch
            %2211 = sbr.rel (%p2209) target = $region104
          $region103: #{tpu_custom_call.1} parent=99 // pred_region
            %p2212 = scmp.eq.s32.totalorder %s39, 0
            // Predicated region
            $region105: #{tpu_custom_call.1} parent=103 // pred_check
              %p2213 = pneg %p2212
            $region106: #{tpu_custom_call.1} parent=103 // pred_check_branch
              %2215 = sbr.rel (%p2213) target = $region108
            $region107: #{tpu_custom_call.1} parent=103 // pred_region
              %v2216 = vlaneseq
              %vm2217 = vcmp.ge.s32.totalorder %v2216, 0
              %vm2218 = vcmp.lt.s32.totalorder %v2216, 256
              %vm2219 = vmand %vm2217, %vm2218
              %2220 = vst.msk [vmem:[#allocation5] sm:$0x3] %vm2219, 0.0
              %2221 = vst.msk [vmem:[#allocation6] sm:$0x3] %vm2219, 0.0
            $region108: #{tpu_custom_call.1} parent=103 // pred_fallthru
              _
            %v2222 = vld [vmem:[#allocation5] sm:$0x3]
            %v2223 = vadd.f32 %v2144, %v2146
            %v2224 = vadd.f32 %v2223, %v2148
            %v2225 = vadd.f32 %v2224, %v2150
            %v2226 = vadd.f32 %v2225, %v2152
            %v2227 = vadd.f32 %v2226, %v2154
            %v2228 = vadd.f32 %v2227, %v2156
            %v2229 = vadd.f32 %v2228, %v2158
            %v2230 = vadd.f32 %v2229, %v2160
            %v2231 = vadd.f32 %v2230, %v2162
            %v2232 = vadd.f32 %v2231, %v2164
            %v2233 = vadd.f32 %v2232, %v2166
            %v2234 = vadd.f32 %v2233, %v2168
            %v2235 = vadd.f32 %v2234, %v2170
            %v2236 = vadd.f32 %v2235, %v2172
            %v2237 = vadd.f32 %v2236, %v2174
            %v2238 = vrot.slane %v2237, 4
            %v2239 = vadd.f32 %v2237, %v2238
            %v2240 = vrot.slane %v2239, 2
            %v2241 = vadd.f32 %v2239, %v2240
            %v2242 = vrot.slane %v2241, 1
            %v2243 = vadd.f32 %v2241, %v2242
            %v2244 = vadd.f32 %v2145, %v2147
            %v2245 = vadd.f32 %v2244, %v2149
            %v2246 = vadd.f32 %v2245, %v2151
            %v2247 = vadd.f32 %v2246, %v2153
            %v2248 = vadd.f32 %v2247, %v2155
            %v2249 = vadd.f32 %v2248, %v2157
            %v2250 = vadd.f32 %v2249, %v2159
            %v2251 = vadd.f32 %v2250, %v2161
            %v2252 = vadd.f32 %v2251, %v2163
            %v2253 = vadd.f32 %v2252, %v2165
            %v2254 = vadd.f32 %v2253, %v2167
            %v2255 = vadd.f32 %v2254, %v2169
            %v2256 = vadd.f32 %v2255, %v2171
            %v2257 = vadd.f32 %v2256, %v2173
            %v2258 = vadd.f32 %v2257, %v2175
            %v2259 = vrot.slane %v2258, 4
            %v2260 = vadd.f32 %v2258, %v2259
            %v2261 = vrot.slane %v2260, 2
            %v2262 = vadd.f32 %v2260, %v2261
            %v2263 = vrot.slane %v2262, 1
            %v2264 = vadd.f32 %v2262, %v2263
            %v2267 = vcombine.low %v2243, %v2264
            %v2269 = vunpack.c.l.s4 1966171168
            %v2270 = vunpack.c.0.s8 %v2269
            %v2271 = vlaneseq
            %v2272 = vshrl.u32 %v2271, 7
            %v2273 = vsub.s32 %v2270, %v2272
            %v2274 = vrot.slane %v2267, %v2273
            %v2276 = vunpack.c.l.s4 1966171168
            %v2277 = vunpack.c.0.s8 %v2276
            %v2278 = vlaneseq
            %v2279 = vshrl.u32 %v2278, 7
            %v2280 = vsub.s32 %v2277, %v2279
            %v2281 = vrot.slane %v2274, %v2280
            %v2283 = vadd.f32 %v2222, %v2281
            %v2284 = vlaneseq
            %vm2285 = vcmp.ge.s32.totalorder %v2284, 0
            %vm2286 = vcmp.lt.s32.totalorder %v2284, 256
            %vm2287 = vmand %vm2285, %vm2286
            %2288 = vst.msk [vmem:[#allocation5] sm:$0x3] %vm2287, %v2283
            %v2289 = vld [vmem:[#allocation6] sm:$0x3]
            %v2290 = vmul.f32 %v2144, %v2144
            %v2291 = vmul.f32 %v2145, %v2145
            %v2292 = vmul.f32 %v2146, %v2146
            %v2293 = vmul.f32 %v2147, %v2147
            %v2294 = vmul.f32 %v2148, %v2148
            %v2295 = vmul.f32 %v2149, %v2149
            %v2296 = vmul.f32 %v2150, %v2150
            %v2297 = vmul.f32 %v2151, %v2151
            %v2298 = vmul.f32 %v2152, %v2152
            %v2299 = vmul.f32 %v2153, %v2153
            %v2300 = vmul.f32 %v2154, %v2154
            %v2301 = vmul.f32 %v2155, %v2155
            %v2302 = vmul.f32 %v2156, %v2156
            %v2303 = vmul.f32 %v2157, %v2157
            %v2304 = vmul.f32 %v2158, %v2158
            %v2305 = vmul.f32 %v2159, %v2159
            %v2306 = vmul.f32 %v2160, %v2160
            %v2307 = vmul.f32 %v2161, %v2161
            %v2308 = vmul.f32 %v2162, %v2162
            %v2309 = vmul.f32 %v2163, %v2163
            %v2310 = vmul.f32 %v2164, %v2164
            %v2311 = vmul.f32 %v2165, %v2165
            %v2312 = vmul.f32 %v2166, %v2166
            %v2313 = vmul.f32 %v2167, %v2167
            %v2314 = vmul.f32 %v2168, %v2168
            %v2315 = vmul.f32 %v2169, %v2169
            %v2316 = vmul.f32 %v2170, %v2170
            %v2317 = vmul.f32 %v2171, %v2171
            %v2318 = vmul.f32 %v2172, %v2172
            %v2319 = vmul.f32 %v2173, %v2173
            %v2320 = vmul.f32 %v2174, %v2174
            %v2321 = vmul.f32 %v2175, %v2175
            %v2322 = vadd.f32 %v2290, %v2292
            %v2323 = vadd.f32 %v2322, %v2294
            %v2324 = vadd.f32 %v2323, %v2296
            %v2325 = vadd.f32 %v2324, %v2298
            %v2326 = vadd.f32 %v2325, %v2300
            %v2327 = vadd.f32 %v2326, %v2302
            %v2328 = vadd.f32 %v2327, %v2304
            %v2329 = vadd.f32 %v2328, %v2306
            %v2330 = vadd.f32 %v2329, %v2308
            %v2331 = vadd.f32 %v2330, %v2310
            %v2332 = vadd.f32 %v2331, %v2312
            %v2333 = vadd.f32 %v2332, %v2314
            %v2334 = vadd.f32 %v2333, %v2316
            %v2335 = vadd.f32 %v2334, %v2318
            %v2336 = vadd.f32 %v2335, %v2320
            %v2337 = vrot.slane %v2336, 4
            %v2338 = vadd.f32 %v2336, %v2337
            %v2339 = vrot.slane %v2338, 2
            %v2340 = vadd.f32 %v2338, %v2339
            %v2341 = vrot.slane %v2340, 1
            %v2342 = vadd.f32 %v2340, %v2341
            %v2343 = vadd.f32 %v2291, %v2293
            %v2344 = vadd.f32 %v2343, %v2295
            %v2345 = vadd.f32 %v2344, %v2297
            %v2346 = vadd.f32 %v2345, %v2299
            %v2347 = vadd.f32 %v2346, %v2301
            %v2348 = vadd.f32 %v2347, %v2303
            %v2349 = vadd.f32 %v2348, %v2305
            %v2350 = vadd.f32 %v2349, %v2307
            %v2351 = vadd.f32 %v2350, %v2309
            %v2352 = vadd.f32 %v2351, %v2311
            %v2353 = vadd.f32 %v2352, %v2313
            %v2354 = vadd.f32 %v2353, %v2315
            %v2355 = vadd.f32 %v2354, %v2317
            %v2356 = vadd.f32 %v2355, %v2319
            %v2357 = vadd.f32 %v2356, %v2321
            %v2358 = vrot.slane %v2357, 4
            %v2359 = vadd.f32 %v2357, %v2358
            %v2360 = vrot.slane %v2359, 2
            %v2361 = vadd.f32 %v2359, %v2360
            %v2362 = vrot.slane %v2361, 1
            %v2363 = vadd.f32 %v2361, %v2362
            %v2366 = vcombine.low %v2342, %v2363
            %v2368 = vunpack.c.l.s4 1966171168
            %v2369 = vunpack.c.0.s8 %v2368
            %v2370 = vlaneseq
            %v2371 = vshrl.u32 %v2370, 7
            %v2372 = vsub.s32 %v2369, %v2371
            %v2373 = vrot.slane %v2366, %v2372
            %v2375 = vunpack.c.l.s4 1966171168
            %v2376 = vunpack.c.0.s8 %v2375
            %v2377 = vlaneseq
            %v2378 = vshrl.u32 %v2377, 7
            %v2379 = vsub.s32 %v2376, %v2378
            %v2380 = vrot.slane %v2373, %v2379
            %v2382 = vadd.f32 %v2289, %v2380
            %2383 = vst.msk [vmem:[#allocation6] sm:$0x3] %vm2287, %v2382
          $region104: #{tpu_custom_call.1} parent=99 // pred_fallthru
            _
        $region100: #{tpu_custom_call.1} parent=63 // pred_fallthru
          _
        %p2384 = scmp.eq.s32.totalorder %s38, 4
        // Predicated region
        $region109: #{tpu_custom_call.1} parent=63 // pred_check
          %p2385 = pneg %p2384
        $region110: #{tpu_custom_call.1} parent=63 // pred_check_branch
          %2387 = sbr.rel (%p2385) target = $region112
        $region111: #{tpu_custom_call.1} parent=63 // pred_region
          %s2388 = sshra.s32 %s526, 3
          %s2389 = sand.u32 %s526, 7
          %s2390 = smul.u32 %s2388, 2
          %s2391 = smul.addr %s2390, 8
          %s2392 = scalar_lea.vmem [#allocation4], %s2391
          %v2393 = vld [vmem:[%s2392] sm:$0xff]
          %v2394 = vld [vmem:[%s2392 + $0x8] sm:$0xff]
          %v2395 = vld [vmem:[%s2392 + $0x10] sm:$0xff]
          %v2396 = vld [vmem:[%s2392 + $0x18] sm:$0xff]
          %v2397 = vld [vmem:[%s2392 + $0x20] sm:$0xff]
          %v2398 = vld [vmem:[%s2392 + $0x28] sm:$0xff]
          %v2399 = vld [vmem:[%s2392 + $0x30] sm:$0xff]
          %v2400 = vld [vmem:[%s2392 + $0x38] sm:$0xff]
          %v2401 = vld [vmem:[%s2392 + $0x40] sm:$0xff]
          %v2402 = vld [vmem:[%s2392 + $0x48] sm:$0xff]
          %v2403 = vld [vmem:[%s2392 + $0x50] sm:$0xff]
          %v2404 = vld [vmem:[%s2392 + $0x58] sm:$0xff]
          %v2405 = vld [vmem:[%s2392 + $0x60] sm:$0xff]
          %v2406 = vld [vmem:[%s2392 + $0x68] sm:$0xff]
          %v2407 = vld [vmem:[%s2392 + $0x70] sm:$0xff]
          %v2408 = vld [vmem:[%s2392 + $0x78] sm:$0xff]
          %v2409 = vld [vmem:[%s2392 + $0x80] sm:$0xff]
          %v2410 = vld [vmem:[%s2392 + $0x88] sm:$0xff]
          %v2411 = vld [vmem:[%s2392 + $0x90] sm:$0xff]
          %v2412 = vld [vmem:[%s2392 + $0x98] sm:$0xff]
          %v2413 = vld [vmem:[%s2392 + $0xa0] sm:$0xff]
          %v2414 = vld [vmem:[%s2392 + $0xa8] sm:$0xff]
          %v2415 = vld [vmem:[%s2392 + $0xb0] sm:$0xff]
          %v2416 = vld [vmem:[%s2392 + $0xb8] sm:$0xff]
          %v2417 = vld [vmem:[%s2392 + $0xc0] sm:$0xff]
          %v2418 = vld [vmem:[%s2392 + $0xc8] sm:$0xff]
          %v2419 = vld [vmem:[%s2392 + $0xd0] sm:$0xff]
          %v2420 = vld [vmem:[%s2392 + $0xd8] sm:$0xff]
          %v2421 = vld [vmem:[%s2392 + $0xe0] sm:$0xff]
          %v2422 = vld [vmem:[%s2392 + $0xe8] sm:$0xff]
          %v2423 = vld [vmem:[%s2392 + $0xf0] sm:$0xff]
          %v2424 = vld [vmem:[%s2392 + $0xf8] sm:$0xff]
          %v2425 = vmul.f32 %v2393, 0.25
          %v2426 = vmul.f32 %v2394, 0.25
          %v2427 = vmul.f32 %v2395, 0.25
          %v2428 = vmul.f32 %v2396, 0.25
          %v2429 = vmul.f32 %v2397, 0.25
          %v2430 = vmul.f32 %v2398, 0.25
          %v2431 = vmul.f32 %v2399, 0.25
          %v2432 = vmul.f32 %v2400, 0.25
          %v2433 = vmul.f32 %v2401, 0.25
          %v2434 = vmul.f32 %v2402, 0.25
          %v2435 = vmul.f32 %v2403, 0.25
          %v2436 = vmul.f32 %v2404, 0.25
          %v2437 = vmul.f32 %v2405, 0.25
          %v2438 = vmul.f32 %v2406, 0.25
          %v2439 = vmul.f32 %v2407, 0.25
          %v2440 = vmul.f32 %v2408, 0.25
          %v2441 = vmul.f32 %v2409, 0.25
          %v2442 = vmul.f32 %v2410, 0.25
          %v2443 = vmul.f32 %v2411, 0.25
          %v2444 = vmul.f32 %v2412, 0.25
          %v2445 = vmul.f32 %v2413, 0.25
          %v2446 = vmul.f32 %v2414, 0.25
          %v2447 = vmul.f32 %v2415, 0.25
          %v2448 = vmul.f32 %v2416, 0.25
          %v2449 = vmul.f32 %v2417, 0.25
          %v2450 = vmul.f32 %v2418, 0.25
          %v2451 = vmul.f32 %v2419, 0.25
          %v2452 = vmul.f32 %v2420, 0.25
          %v2453 = vmul.f32 %v2421, 0.25
          %v2454 = vmul.f32 %v2422, 0.25
          %v2455 = vmul.f32 %v2423, 0.25
          %v2456 = vmul.f32 %v2424, 0.25
          %v2457 = vld [vmem:[#allocation5] sm:$0x3]
          %v2458 = vmul.f32 %v2457, 0.0078125
          %v2459 = vld [vmem:[#allocation6] sm:$0x3]
          %v2460 = vmul.f32 %v2459, 0.001953125
          %v2461 = vmul.f32 %v2458, %v2458
          %v2462 = vsub.f32 %v2460, %v2461
          %v2463 = vmax.f32 %v2462, 0.0
          %v2465 = vlaneseq
          %v2466 = vshrl.u32 %v2465, 7
          %v2467 = vsub.s32 0, %v2466
          %v2468 = vrot.slane %v2458, %v2467
          %v2469 = vlaneseq
          %v2470 = vshrl.u32 %v2469, 7
          %v2471 = vsub.s32 1, %v2470
          %v2472 = vrot.slane %v2458, %v2471
          %v2475 = vsub.f32 %v2425, %v2468
          %v2476 = vsub.f32 %v2426, %v2472
          %v2477 = vsub.f32 %v2427, %v2468
          %v2478 = vsub.f32 %v2428, %v2472
          %v2479 = vsub.f32 %v2429, %v2468
          %v2480 = vsub.f32 %v2430, %v2472
          %v2481 = vsub.f32 %v2431, %v2468
          %v2482 = vsub.f32 %v2432, %v2472
          %v2483 = vsub.f32 %v2433, %v2468
          %v2484 = vsub.f32 %v2434, %v2472
          %v2485 = vsub.f32 %v2435, %v2468
          %v2486 = vsub.f32 %v2436, %v2472
          %v2487 = vsub.f32 %v2437, %v2468
          %v2488 = vsub.f32 %v2438, %v2472
          %v2489 = vsub.f32 %v2439, %v2468
          %v2490 = vsub.f32 %v2440, %v2472
          %v2491 = vsub.f32 %v2441, %v2468
          %v2492 = vsub.f32 %v2442, %v2472
          %v2493 = vsub.f32 %v2443, %v2468
          %v2494 = vsub.f32 %v2444, %v2472
          %v2495 = vsub.f32 %v2445, %v2468
          %v2496 = vsub.f32 %v2446, %v2472
          %v2497 = vsub.f32 %v2447, %v2468
          %v2498 = vsub.f32 %v2448, %v2472
          %v2499 = vsub.f32 %v2449, %v2468
          %v2500 = vsub.f32 %v2450, %v2472
          %v2501 = vsub.f32 %v2451, %v2468
          %v2502 = vsub.f32 %v2452, %v2472
          %v2503 = vsub.f32 %v2453, %v2468
          %v2504 = vsub.f32 %v2454, %v2472
          %v2505 = vsub.f32 %v2455, %v2468
          %v2506 = vsub.f32 %v2456, %v2472
          %v2507 = vadd.f32 %v2463, 1e-05
          %v2508 = vrsqrt.pop %v2507
          %v2510 = vlaneseq
          %v2511 = vshrl.u32 %v2510, 7
          %v2512 = vsub.s32 0, %v2511
          %v2513 = vrot.slane %v2508, %v2512
          %v2514 = vlaneseq
          %v2515 = vshrl.u32 %v2514, 7
          %v2516 = vsub.s32 1, %v2515
          %v2517 = vrot.slane %v2508, %v2516
          %v2520 = vmul.f32 %v2475, %v2513
          %v2521 = vmul.f32 %v2476, %v2517
          %v2522 = vmul.f32 %v2477, %v2513
          %v2523 = vmul.f32 %v2478, %v2517
          %v2524 = vmul.f32 %v2479, %v2513
          %v2525 = vmul.f32 %v2480, %v2517
          %v2526 = vmul.f32 %v2481, %v2513
          %v2527 = vmul.f32 %v2482, %v2517
          %v2528 = vmul.f32 %v2483, %v2513
          %v2529 = vmul.f32 %v2484, %v2517
          %v2530 = vmul.f32 %v2485, %v2513
          %v2531 = vmul.f32 %v2486, %v2517
          %v2532 = vmul.f32 %v2487, %v2513
          %v2533 = vmul.f32 %v2488, %v2517
          %v2534 = vmul.f32 %v2489, %v2513
          %v2535 = vmul.f32 %v2490, %v2517
          %v2536 = vmul.f32 %v2491, %v2513
          %v2537 = vmul.f32 %v2492, %v2517
          %v2538 = vmul.f32 %v2493, %v2513
          %v2539 = vmul.f32 %v2494, %v2517
          %v2540 = vmul.f32 %v2495, %v2513
          %v2541 = vmul.f32 %v2496, %v2517
          %v2542 = vmul.f32 %v2497, %v2513
          %v2543 = vmul.f32 %v2498, %v2517
          %v2544 = vmul.f32 %v2499, %v2513
          %v2545 = vmul.f32 %v2500, %v2517
          %v2546 = vmul.f32 %v2501, %v2513
          %v2547 = vmul.f32 %v2502, %v2517
          %v2548 = vmul.f32 %v2503, %v2513
          %v2549 = vmul.f32 %v2504, %v2517
          %v2550 = vmul.f32 %v2505, %v2513
          %v2551 = vmul.f32 %v2506, %v2517
          %v2552 = vld [vmem:[%s4] sm:$0x3]
          %v2554 = vlaneseq
          %v2555 = vshrl.u32 %v2554, 7
          %v2556 = vsub.s32 0, %v2555
          %v2557 = vrot.slane %v2552, %v2556
          %v2558 = vlaneseq
          %v2559 = vshrl.u32 %v2558, 7
          %v2560 = vsub.s32 1, %v2559
          %v2561 = vrot.slane %v2552, %v2560
          %v2564 = vmul.f32 %v2520, %v2557
          %v2565 = vmul.f32 %v2521, %v2561
          %v2566 = vmul.f32 %v2522, %v2557
          %v2567 = vmul.f32 %v2523, %v2561
          %v2568 = vmul.f32 %v2524, %v2557
          %v2569 = vmul.f32 %v2525, %v2561
          %v2570 = vmul.f32 %v2526, %v2557
          %v2571 = vmul.f32 %v2527, %v2561
          %v2572 = vmul.f32 %v2528, %v2557
          %v2573 = vmul.f32 %v2529, %v2561
          %v2574 = vmul.f32 %v2530, %v2557
          %v2575 = vmul.f32 %v2531, %v2561
          %v2576 = vmul.f32 %v2532, %v2557
          %v2577 = vmul.f32 %v2533, %v2561
          %v2578 = vmul.f32 %v2534, %v2557
          %v2579 = vmul.f32 %v2535, %v2561
          %v2580 = vmul.f32 %v2536, %v2557
          %v2581 = vmul.f32 %v2537, %v2561
          %v2582 = vmul.f32 %v2538, %v2557
          %v2583 = vmul.f32 %v2539, %v2561
          %v2584 = vmul.f32 %v2540, %v2557
          %v2585 = vmul.f32 %v2541, %v2561
          %v2586 = vmul.f32 %v2542, %v2557
          %v2587 = vmul.f32 %v2543, %v2561
          %v2588 = vmul.f32 %v2544, %v2557
          %v2589 = vmul.f32 %v2545, %v2561
          %v2590 = vmul.f32 %v2546, %v2557
          %v2591 = vmul.f32 %v2547, %v2561
          %v2592 = vmul.f32 %v2548, %v2557
          %v2593 = vmul.f32 %v2549, %v2561
          %v2594 = vmul.f32 %v2550, %v2557
          %v2595 = vmul.f32 %v2551, %v2561
          %v2596 = vld [vmem:[%s5] sm:$0x3]
          %v2598 = vlaneseq
          %v2599 = vshrl.u32 %v2598, 7
          %v2600 = vsub.s32 0, %v2599
          %v2601 = vrot.slane %v2596, %v2600
          %v2602 = vlaneseq
          %v2603 = vshrl.u32 %v2602, 7
          %v2604 = vsub.s32 1, %v2603
          %v2605 = vrot.slane %v2596, %v2604
          %v2608 = vadd.f32 %v2564, %v2601
          %v2609 = vadd.f32 %v2565, %v2605
          %v2610 = vadd.f32 %v2566, %v2601
          %v2611 = vadd.f32 %v2567, %v2605
          %v2612 = vadd.f32 %v2568, %v2601
          %v2613 = vadd.f32 %v2569, %v2605
          %v2614 = vadd.f32 %v2570, %v2601
          %v2615 = vadd.f32 %v2571, %v2605
          %v2616 = vadd.f32 %v2572, %v2601
          %v2617 = vadd.f32 %v2573, %v2605
          %v2618 = vadd.f32 %v2574, %v2601
          %v2619 = vadd.f32 %v2575, %v2605
          %v2620 = vadd.f32 %v2576, %v2601
          %v2621 = vadd.f32 %v2577, %v2605
          %v2622 = vadd.f32 %v2578, %v2601
          %v2623 = vadd.f32 %v2579, %v2605
          %v2624 = vadd.f32 %v2580, %v2601
          %v2625 = vadd.f32 %v2581, %v2605
          %v2626 = vadd.f32 %v2582, %v2601
          %v2627 = vadd.f32 %v2583, %v2605
          %v2628 = vadd.f32 %v2584, %v2601
          %v2629 = vadd.f32 %v2585, %v2605
          %v2630 = vadd.f32 %v2586, %v2601
          %v2631 = vadd.f32 %v2587, %v2605
          %v2632 = vadd.f32 %v2588, %v2601
          %v2633 = vadd.f32 %v2589, %v2605
          %v2634 = vadd.f32 %v2590, %v2601
          %v2635 = vadd.f32 %v2591, %v2605
          %v2636 = vadd.f32 %v2592, %v2601
          %v2637 = vadd.f32 %v2593, %v2605
          %v2638 = vadd.f32 %v2594, %v2601
          %v2639 = vadd.f32 %v2595, %v2605
          %v2640 = vpack.c.bf16 %v2610, %v2608
          %v2641 = vpack.c.bf16 %v2611, %v2609
          %v2642 = vpack.c.bf16 %v2614, %v2612
          %v2643 = vpack.c.bf16 %v2615, %v2613
          %v2644 = vpack.c.bf16 %v2618, %v2616
          %v2645 = vpack.c.bf16 %v2619, %v2617
          %v2646 = vpack.c.bf16 %v2622, %v2620
          %v2647 = vpack.c.bf16 %v2623, %v2621
          %v2648 = vpack.c.bf16 %v2626, %v2624
          %v2649 = vpack.c.bf16 %v2627, %v2625
          %v2650 = vpack.c.bf16 %v2630, %v2628
          %v2651 = vpack.c.bf16 %v2631, %v2629
          %v2652 = vpack.c.bf16 %v2634, %v2632
          %v2653 = vpack.c.bf16 %v2635, %v2633
          %v2654 = vpack.c.bf16 %v2638, %v2636
          %v2655 = vpack.c.bf16 %v2639, %v2637
          %v2656 = vld [vmem:[#allocation14] sm:$0xff]
          %v2657 = vld [vmem:[#allocation14 + $0x8] sm:$0xff]
          %v2658 = vld [vmem:[#allocation14 + $0x10] sm:$0xff]
          %v2659 = vld [vmem:[#allocation14 + $0x18] sm:$0xff]
          %v2660 = vld [vmem:[#allocation14 + $0x20] sm:$0xff]
          %v2661 = vld [vmem:[#allocation14 + $0x28] sm:$0xff]
          %v2662 = vld [vmem:[#allocation14 + $0x30] sm:$0xff]
          %v2663 = vld [vmem:[#allocation14 + $0x38] sm:$0xff]
          %v2664 = vld [vmem:[#allocation14 + $0x40] sm:$0xff]
          %v2665 = vld [vmem:[#allocation14 + $0x48] sm:$0xff]
          %v2666 = vld [vmem:[#allocation14 + $0x50] sm:$0xff]
          %v2667 = vld [vmem:[#allocation14 + $0x58] sm:$0xff]
          %v2668 = vld [vmem:[#allocation14 + $0x60] sm:$0xff]
          %v2669 = vld [vmem:[#allocation14 + $0x68] sm:$0xff]
          %v2670 = vld [vmem:[#allocation14 + $0x70] sm:$0xff]
          %v2671 = vld [vmem:[#allocation14 + $0x78] sm:$0xff]
          %v2672 = vld [vmem:[#allocation14 + $0x80] sm:$0xff]
          %v2673 = vld [vmem:[#allocation14 + $0x88] sm:$0xff]
          %v2674 = vld [vmem:[#allocation14 + $0x90] sm:$0xff]
          %v2675 = vld [vmem:[#allocation14 + $0x98] sm:$0xff]
          %v2676 = vld [vmem:[#allocation14 + $0xa0] sm:$0xff]
          %v2677 = vld [vmem:[#allocation14 + $0xa8] sm:$0xff]
          %v2678 = vld [vmem:[#allocation14 + $0xb0] sm:$0xff]
          %v2679 = vld [vmem:[#allocation14 + $0xb8] sm:$0xff]
          %v2680 = vld [vmem:[#allocation14 + $0xc0] sm:$0xff]
          %v2681 = vld [vmem:[#allocation14 + $0xc8] sm:$0xff]
          %v2682 = vld [vmem:[#allocation14 + $0xd0] sm:$0xff]
          %v2683 = vld [vmem:[#allocation14 + $0xd8] sm:$0xff]
          %v2684 = vld [vmem:[#allocation14 + $0xe0] sm:$0xff]
          %v2685 = vld [vmem:[#allocation14 + $0xe8] sm:$0xff]
          %v2686 = vld [vmem:[#allocation14 + $0xf0] sm:$0xff]
          %v2687 = vld [vmem:[#allocation14 + $0xf8] sm:$0xff]
          %v2688 = vld [vmem:[%s7] sm:$0x3]
          %v2690 = vlaneseq
          %v2691 = vshrl.u32 %v2690, 7
          %v2692 = vsub.s32 0, %v2691
          %v2693 = vrot.slane %v2688, %v2692
          %v2694 = vlaneseq
          %v2695 = vshrl.u32 %v2694, 7
          %v2696 = vsub.s32 1, %v2695
          %v2697 = vrot.slane %v2688, %v2696
          %v2732 = vunpack.c.l.b16 %v2656
          %v2733 = vunpack.c.h.b16 %v2656
          %v2734 = vunpack.c.l.b16 %v2657
          %v2735 = vunpack.c.h.b16 %v2657
          %v2736 = vunpack.c.l.b16 %v2658
          %v2737 = vunpack.c.h.b16 %v2658
          %v2738 = vunpack.c.l.b16 %v2659
          %v2739 = vunpack.c.h.b16 %v2659
          %v2740 = vunpack.c.l.b16 %v2660
          %v2741 = vunpack.c.h.b16 %v2660
          %v2742 = vunpack.c.l.b16 %v2661
          %v2743 = vunpack.c.h.b16 %v2661
          %v2744 = vunpack.c.l.b16 %v2662
          %v2745 = vunpack.c.h.b16 %v2662
          %v2746 = vunpack.c.l.b16 %v2663
          %v2747 = vunpack.c.h.b16 %v2663
          %v2748 = vunpack.c.l.b16 %v2664
          %v2749 = vunpack.c.h.b16 %v2664
          %v2750 = vunpack.c.l.b16 %v2665
          %v2751 = vunpack.c.h.b16 %v2665
          %v2752 = vunpack.c.l.b16 %v2666
          %v2753 = vunpack.c.h.b16 %v2666
          %v2754 = vunpack.c.l.b16 %v2667
          %v2755 = vunpack.c.h.b16 %v2667
          %v2756 = vunpack.c.l.b16 %v2668
          %v2757 = vunpack.c.h.b16 %v2668
          %v2758 = vunpack.c.l.b16 %v2669
          %v2759 = vunpack.c.h.b16 %v2669
          %v2760 = vunpack.c.l.b16 %v2670
          %v2761 = vunpack.c.h.b16 %v2670
          %v2762 = vunpack.c.l.b16 %v2671
          %v2763 = vunpack.c.h.b16 %v2671
          %v2764 = vunpack.c.l.b16 %v2672
          %v2765 = vunpack.c.h.b16 %v2672
          %v2766 = vunpack.c.l.b16 %v2673
          %v2767 = vunpack.c.h.b16 %v2673
          %v2768 = vunpack.c.l.b16 %v2674
          %v2769 = vunpack.c.h.b16 %v2674
          %v2770 = vunpack.c.l.b16 %v2675
          %v2771 = vunpack.c.h.b16 %v2675
          %v2772 = vunpack.c.l.b16 %v2676
          %v2773 = vunpack.c.h.b16 %v2676
          %v2774 = vunpack.c.l.b16 %v2677
          %v2775 = vunpack.c.h.b16 %v2677
          %v2776 = vunpack.c.l.b16 %v2678
          %v2777 = vunpack.c.h.b16 %v2678
          %v2778 = vunpack.c.l.b16 %v2679
          %v2779 = vunpack.c.h.b16 %v2679
          %v2780 = vunpack.c.l.b16 %v2680
          %v2781 = vunpack.c.h.b16 %v2680
          %v2782 = vunpack.c.l.b16 %v2681
          %v2783 = vunpack.c.h.b16 %v2681
          %v2784 = vunpack.c.l.b16 %v2682
          %v2785 = vunpack.c.h.b16 %v2682
          %v2786 = vunpack.c.l.b16 %v2683
          %v2787 = vunpack.c.h.b16 %v2683
          %v2788 = vunpack.c.l.b16 %v2684
          %v2789 = vunpack.c.h.b16 %v2684
          %v2790 = vunpack.c.l.b16 %v2685
          %v2791 = vunpack.c.h.b16 %v2685
          %v2792 = vunpack.c.l.b16 %v2686
          %v2793 = vunpack.c.h.b16 %v2686
          %v2794 = vunpack.c.l.b16 %v2687
          %v2795 = vunpack.c.h.b16 %v2687
          %v2796 = vpack.c.b16 %v2734, %v2732
          %v2797 = vpack.c.b16 %v2735, %v2733
          %v2798 = vpack.c.b16 %v2738, %v2736
          %v2799 = vpack.c.b16 %v2739, %v2737
          %v2800 = vpack.c.b16 %v2742, %v2740
          %v2801 = vpack.c.b16 %v2743, %v2741
          %v2802 = vpack.c.b16 %v2746, %v2744
          %v2803 = vpack.c.b16 %v2747, %v2745
          %v2804 = vpack.c.b16 %v2750, %v2748
          %v2805 = vpack.c.b16 %v2751, %v2749
          %v2806 = vpack.c.b16 %v2754, %v2752
          %v2807 = vpack.c.b16 %v2755, %v2753
          %v2808 = vpack.c.b16 %v2758, %v2756
          %v2809 = vpack.c.b16 %v2759, %v2757
          %v2810 = vpack.c.b16 %v2762, %v2760
          %v2811 = vpack.c.b16 %v2763, %v2761
          %v2812 = vpack.c.b16 %v2766, %v2764
          %v2813 = vpack.c.b16 %v2767, %v2765
          %v2814 = vpack.c.b16 %v2770, %v2768
          %v2815 = vpack.c.b16 %v2771, %v2769
          %v2816 = vpack.c.b16 %v2774, %v2772
          %v2817 = vpack.c.b16 %v2775, %v2773
          %v2818 = vpack.c.b16 %v2778, %v2776
          %v2819 = vpack.c.b16 %v2779, %v2777
          %v2820 = vpack.c.b16 %v2782, %v2780
          %v2821 = vpack.c.b16 %v2783, %v2781
          %v2822 = vpack.c.b16 %v2786, %v2784
          %v2823 = vpack.c.b16 %v2787, %v2785
          %v2824 = vpack.c.b16 %v2790, %v2788
          %v2825 = vpack.c.b16 %v2791, %v2789
          %v2826 = vpack.c.b16 %v2794, %v2792
          %v2827 = vpack.c.b16 %v2795, %v2793
          %2860 = vmatprep.subr.bf16.mxu0 %v2797
          %2861 = vmatpush1.bf16.msra.mxu0 %v2796
          %2862 = vmatprep.subr.bf16.mxu0 %v2799
          %2863 = vmatpush1.bf16.msra.mxu0 %v2798
          %2864 = vmatprep.subr.bf16.mxu0 %v2801
          %2865 = vmatpush1.bf16.msra.mxu0 %v2800
          %2866 = vmatprep.subr.bf16.mxu0 %v2803
          %2867 = vmatpush1.bf16.msra.mxu0 %v2802
          %2868 = vmatprep.subr.bf16.mxu0 %v2805
          %2869 = vmatpush1.bf16.msra.mxu0 %v2804
          %2870 = vmatprep.subr.bf16.mxu0 %v2807
          %2871 = vmatpush1.bf16.msra.mxu0 %v2806
          %2872 = vmatprep.subr.bf16.mxu0 %v2809
          %2873 = vmatpush1.bf16.msra.mxu0 %v2808
          %2874 = vmatprep.subr.bf16.mxu0 %v2811
          %2875 = vmatpush1.bf16.msra.mxu0 %v2810
          %2876 = vmatprep.subr.bf16.mxu0 %v2813
          %2877 = vmatpush1.bf16.msra.mxu0 %v2812
          %2878 = vmatprep.subr.bf16.mxu0 %v2815
          %2879 = vmatpush1.bf16.msra.mxu0 %v2814
          %2880 = vmatprep.subr.bf16.mxu0 %v2817
          %2881 = vmatpush1.bf16.msra.mxu0 %v2816
          %2882 = vmatprep.subr.bf16.mxu0 %v2819
          %2883 = vmatpush1.bf16.msra.mxu0 %v2818
          %2884 = vmatprep.subr.bf16.mxu0 %v2821
          %2885 = vmatpush1.bf16.msra.mxu0 %v2820
          %2886 = vmatprep.subr.bf16.mxu0 %v2823
          %2887 = vmatpush1.bf16.msra.mxu0 %v2822
          %2888 = vmatprep.subr.bf16.mxu0 %v2825
          %2889 = vmatpush1.bf16.msra.mxu0 %v2824
          %2890 = vmatprep.subr.bf16.mxu0 %v2827
          %2891 = vmatpush1.bf16.msra.mxu0 %v2826
          %2892 = vmatprep.mubr.bf16.mxu0 %v2641
          %2893 = vmatmul.mubr.bf16.gmra.mrb[0].mxu0 %v2640
          %v2894 = vpop.f32.mrb[0].mxu0
          %v2895 = vadd.f32 %v2693, %v2894
          %v2896 = vpop.f32.mrb[0].mxu0
          %v2897 = vadd.f32 %v2697, %v2896
          %v2898 = vpop.f32.mrb[0].mxu0
          %v2899 = vadd.f32 %v2693, %v2898
          %v2900 = vpop.f32.mrb[0].mxu0
          %v2901 = vadd.f32 %v2697, %v2900
          %2902 = vmatprep.mubr.bf16.mxu0 %v2643
          %2903 = vmatmul.mubr.bf16.gmra.mrb[0].mxu0 %v2642
          %v2904 = vpop.f32.mrb[0].mxu0
          %v2905 = vadd.f32 %v2693, %v2904
          %v2906 = vpop.f32.mrb[0].mxu0
          %v2907 = vadd.f32 %v2697, %v2906
          %v2908 = vpop.f32.mrb[0].mxu0
          %v2909 = vadd.f32 %v2693, %v2908
          %v2910 = vpop.f32.mrb[0].mxu0
          %v2911 = vadd.f32 %v2697, %v2910
          %2912 = vmatprep.mubr.bf16.mxu0 %v2645
          %2913 = vmatmul.mubr.bf16.gmra.mrb[0].mxu0 %v2644
          %v2914 = vpop.f32.mrb[0].mxu0
          %v2915 = vadd.f32 %v2693, %v2914
          %v2916 = vpop.f32.mrb[0].mxu0
          %v2917 = vadd.f32 %v2697, %v2916
          %v2918 = vpop.f32.mrb[0].mxu0
          %v2919 = vadd.f32 %v2693, %v2918
          %v2920 = vpop.f32.mrb[0].mxu0
          %v2921 = vadd.f32 %v2697, %v2920
          %2922 = vmatprep.mubr.bf16.mxu0 %v2647
          %2923 = vmatmul.mubr.bf16.gmra.mrb[0].mxu0 %v2646
          %v2924 = vpop.f32.mrb[0].mxu0
          %v2925 = vadd.f32 %v2693, %v2924
          %v2926 = vpop.f32.mrb[0].mxu0
          %v2927 = vadd.f32 %v2697, %v2926
          %v2928 = vpop.f32.mrb[0].mxu0
          %v2929 = vadd.f32 %v2693, %v2928
          %v2930 = vpop.f32.mrb[0].mxu0
          %v2931 = vadd.f32 %v2697, %v2930
          %2932 = vmatprep.mubr.bf16.mxu0 %v2649
          %2933 = vmatmul.mubr.bf16.gmra.mrb[0].mxu0 %v2648
          %v2934 = vpop.f32.mrb[0].mxu0
          %v2935 = vadd.f32 %v2693, %v2934
          %v2936 = vpop.f32.mrb[0].mxu0
          %v2937 = vadd.f32 %v2697, %v2936
          %v2938 = vpop.f32.mrb[0].mxu0
          %v2939 = vadd.f32 %v2693, %v2938
          %v2940 = vpop.f32.mrb[0].mxu0
          %v2941 = vadd.f32 %v2697, %v2940
          %2942 = vmatprep.mubr.bf16.mxu0 %v2651
          %2943 = vmatmul.mubr.bf16.gmra.mrb[0].mxu0 %v2650
          %v2944 = vpop.f32.mrb[0].mxu0
          %v2945 = vadd.f32 %v2693, %v2944
          %v2946 = vpop.f32.mrb[0].mxu0
          %v2947 = vadd.f32 %v2697, %v2946
          %v2948 = vpop.f32.mrb[0].mxu0
          %v2949 = vadd.f32 %v2693, %v2948
          %v2950 = vpop.f32.mrb[0].mxu0
          %v2951 = vadd.f32 %v2697, %v2950
          %2952 = vmatprep.mubr.bf16.mxu0 %v2653
          %2953 = vmatmul.mubr.bf16.gmra.mrb[0].mxu0 %v2652
          %v2954 = vpop.f32.mrb[0].mxu0
          %v2955 = vadd.f32 %v2693, %v2954
          %v2956 = vpop.f32.mrb[0].mxu0
          %v2957 = vadd.f32 %v2697, %v2956
          %v2958 = vpop.f32.mrb[0].mxu0
          %v2959 = vadd.f32 %v2693, %v2958
          %v2960 = vpop.f32.mrb[0].mxu0
          %v2961 = vadd.f32 %v2697, %v2960
          %2962 = vmatprep.mubr.bf16.mxu0 %v2655
          %2963 = vmatmul.mubr.bf16.gmra.mrb[0].mxu0 %v2654
          %v2964 = vpop.f32.mrb[0].mxu0
          %v2965 = vadd.f32 %v2693, %v2964
          %v2966 = vpop.f32.mrb[0].mxu0
          %v2967 = vadd.f32 %v2697, %v2966
          %v2968 = vpop.f32.mrb[0].mxu0
          %v2969 = vadd.f32 %v2693, %v2968
          %v2970 = vpop.f32.mrb[0].mxu0
          %v2971 = vadd.f32 %v2697, %v2970
          %2972 = vdwg.mxu0
          %v2973 = vmax.f32 %v2895, 0.0
          %v2974 = vmax.f32 %v2897, 0.0
          %v2975 = vmax.f32 %v2899, 0.0
          %v2976 = vmax.f32 %v2901, 0.0
          %v2977 = vmax.f32 %v2905, 0.0
          %v2978 = vmax.f32 %v2907, 0.0
          %v2979 = vmax.f32 %v2909, 0.0
          %v2980 = vmax.f32 %v2911, 0.0
          %v2981 = vmax.f32 %v2915, 0.0
          %v2982 = vmax.f32 %v2917, 0.0
          %v2983 = vmax.f32 %v2919, 0.0
          %v2984 = vmax.f32 %v2921, 0.0
          %v2985 = vmax.f32 %v2925, 0.0
          %v2986 = vmax.f32 %v2927, 0.0
          %v2987 = vmax.f32 %v2929, 0.0
          %v2988 = vmax.f32 %v2931, 0.0
          %v2989 = vmax.f32 %v2935, 0.0
          %v2990 = vmax.f32 %v2937, 0.0
          %v2991 = vmax.f32 %v2939, 0.0
          %v2992 = vmax.f32 %v2941, 0.0
          %v2993 = vmax.f32 %v2945, 0.0
          %v2994 = vmax.f32 %v2947, 0.0
          %v2995 = vmax.f32 %v2949, 0.0
          %v2996 = vmax.f32 %v2951, 0.0
          %v2997 = vmax.f32 %v2955, 0.0
          %v2998 = vmax.f32 %v2957, 0.0
          %v2999 = vmax.f32 %v2959, 0.0
          %v3000 = vmax.f32 %v2961, 0.0
          %v3001 = vmax.f32 %v2965, 0.0
          %v3002 = vmax.f32 %v2967, 0.0
          %v3003 = vmax.f32 %v2969, 0.0
          %v3004 = vmax.f32 %v2971, 0.0
          %v3005 = vld [vmem:[#allocation7] sm:$0x1]
          %v3006 = vmin.f32 %v2895, 0.0
          %v3007 = vmin.f32 %v2897, 0.0
          %v3008 = vmin.f32 %v2899, 0.0
          %v3009 = vmin.f32 %v2901, 0.0
          %v3010 = vmin.f32 %v2905, 0.0
          %v3011 = vmin.f32 %v2907, 0.0
          %v3012 = vmin.f32 %v2909, 0.0
          %v3013 = vmin.f32 %v2911, 0.0
          %v3014 = vmin.f32 %v2915, 0.0
          %v3015 = vmin.f32 %v2917, 0.0
          %v3016 = vmin.f32 %v2919, 0.0
          %v3017 = vmin.f32 %v2921, 0.0
          %v3018 = vmin.f32 %v2925, 0.0
          %v3019 = vmin.f32 %v2927, 0.0
          %v3020 = vmin.f32 %v2929, 0.0
          %v3021 = vmin.f32 %v2931, 0.0
          %v3022 = vmin.f32 %v2935, 0.0
          %v3023 = vmin.f32 %v2937, 0.0
          %v3024 = vmin.f32 %v2939, 0.0
          %v3025 = vmin.f32 %v2941, 0.0
          %v3026 = vmin.f32 %v2945, 0.0
          %v3027 = vmin.f32 %v2947, 0.0
          %v3028 = vmin.f32 %v2949, 0.0
          %v3029 = vmin.f32 %v2951, 0.0
          %v3030 = vmin.f32 %v2955, 0.0
          %v3031 = vmin.f32 %v2957, 0.0
          %v3032 = vmin.f32 %v2959, 0.0
          %v3033 = vmin.f32 %v2961, 0.0
          %v3034 = vmin.f32 %v2965, 0.0
          %v3035 = vmin.f32 %v2967, 0.0
          %v3036 = vmin.f32 %v2969, 0.0
          %v3037 = vmin.f32 %v2971, 0.0
          %v3039 = vlaneseq
          %v3040 = vshrl.u32 %v3039, 7
          %v3041 = vsub.s32 0, %v3040
          %v3042 = vrot.slane %v3005, %v3041
          %3043 = vset.pattern.permute.xlu0 0
          %3044 = vperm.xlu0 %3043, %v3042
          %v3045 = vpop.permute.xlu0 %3044
          %v3047 = vmul.f32 %v3045, %v3006
          %v3048 = vmul.f32 %v3045, %v3007
          %v3049 = vmul.f32 %v3045, %v3008
          %v3050 = vmul.f32 %v3045, %v3009
          %v3051 = vmul.f32 %v3045, %v3010
          %v3052 = vmul.f32 %v3045, %v3011
          %v3053 = vmul.f32 %v3045, %v3012
          %v3054 = vmul.f32 %v3045, %v3013
          %v3055 = vmul.f32 %v3045, %v3014
          %v3056 = vmul.f32 %v3045, %v3015
          %v3057 = vmul.f32 %v3045, %v3016
          %v3058 = vmul.f32 %v3045, %v3017
          %v3059 = vmul.f32 %v3045, %v3018
          %v3060 = vmul.f32 %v3045, %v3019
          %v3061 = vmul.f32 %v3045, %v3020
          %v3062 = vmul.f32 %v3045, %v3021
          %v3063 = vmul.f32 %v3045, %v3022
          %v3064 = vmul.f32 %v3045, %v3023
          %v3065 = vmul.f32 %v3045, %v3024
          %v3066 = vmul.f32 %v3045, %v3025
          %v3067 = vmul.f32 %v3045, %v3026
          %v3068 = vmul.f32 %v3045, %v3027
          %v3069 = vmul.f32 %v3045, %v3028
          %v3070 = vmul.f32 %v3045, %v3029
          %v3071 = vmul.f32 %v3045, %v3030
          %v3072 = vmul.f32 %v3045, %v3031
          %v3073 = vmul.f32 %v3045, %v3032
          %v3074 = vmul.f32 %v3045, %v3033
          %v3075 = vmul.f32 %v3045, %v3034
          %v3076 = vmul.f32 %v3045, %v3035
          %v3077 = vmul.f32 %v3045, %v3036
          %v3078 = vmul.f32 %v3045, %v3037
          %v3079 = vadd.f32 %v2973, %v3047
          %v3080 = vadd.f32 %v2974, %v3048
          %v3081 = vadd.f32 %v2975, %v3049
          %v3082 = vadd.f32 %v2976, %v3050
          %v3083 = vadd.f32 %v2977, %v3051
          %v3084 = vadd.f32 %v2978, %v3052
          %v3085 = vadd.f32 %v2979, %v3053
          %v3086 = vadd.f32 %v2980, %v3054
          %v3087 = vadd.f32 %v2981, %v3055
          %v3088 = vadd.f32 %v2982, %v3056
          %v3089 = vadd.f32 %v2983, %v3057
          %v3090 = vadd.f32 %v2984, %v3058
          %v3091 = vadd.f32 %v2985, %v3059
          %v3092 = vadd.f32 %v2986, %v3060
          %v3093 = vadd.f32 %v2987, %v3061
          %v3094 = vadd.f32 %v2988, %v3062
          %v3095 = vadd.f32 %v2989, %v3063
          %v3096 = vadd.f32 %v2990, %v3064
          %v3097 = vadd.f32 %v2991, %v3065
          %v3098 = vadd.f32 %v2992, %v3066
          %v3099 = vadd.f32 %v2993, %v3067
          %v3100 = vadd.f32 %v2994, %v3068
          %v3101 = vadd.f32 %v2995, %v3069
          %v3102 = vadd.f32 %v2996, %v3070
          %v3103 = vadd.f32 %v2997, %v3071
          %v3104 = vadd.f32 %v2998, %v3072
          %v3105 = vadd.f32 %v2999, %v3073
          %v3106 = vadd.f32 %v3000, %v3074
          %v3107 = vadd.f32 %v3001, %v3075
          %v3108 = vadd.f32 %v3002, %v3076
          %v3109 = vadd.f32 %v3003, %v3077
          %v3110 = vadd.f32 %v3004, %v3078
          %3111 = vst [vmem:[%s512] sm:$0xff] %v3079
          %3112 = vst [vmem:[%s512 + $0x8] sm:$0xff] %v3080
          %3113 = vst [vmem:[%s512 + $0x10] sm:$0xff] %v3081
          %3114 = vst [vmem:[%s512 + $0x18] sm:$0xff] %v3082
          %3115 = vst [vmem:[%s512 + $0x20] sm:$0xff] %v3083
          %3116 = vst [vmem:[%s512 + $0x28] sm:$0xff] %v3084
          %3117 = vst [vmem:[%s512 + $0x30] sm:$0xff] %v3085
          %3118 = vst [vmem:[%s512 + $0x38] sm:$0xff] %v3086
          %3119 = vst [vmem:[%s512 + $0x40] sm:$0xff] %v3087
          %3120 = vst [vmem:[%s512 + $0x48] sm:$0xff] %v3088
          %3121 = vst [vmem:[%s512 + $0x50] sm:$0xff] %v3089
          %3122 = vst [vmem:[%s512 + $0x58] sm:$0xff] %v3090
          %3123 = vst [vmem:[%s512 + $0x60] sm:$0xff] %v3091
          %3124 = vst [vmem:[%s512 + $0x68] sm:$0xff] %v3092
          %3125 = vst [vmem:[%s512 + $0x70] sm:$0xff] %v3093
          %3126 = vst [vmem:[%s512 + $0x78] sm:$0xff] %v3094
          %3127 = vst [vmem:[%s512 + $0x80] sm:$0xff] %v3095
          %3128 = vst [vmem:[%s512 + $0x88] sm:$0xff] %v3096
          %3129 = vst [vmem:[%s512 + $0x90] sm:$0xff] %v3097
          %3130 = vst [vmem:[%s512 + $0x98] sm:$0xff] %v3098
          %3131 = vst [vmem:[%s512 + $0xa0] sm:$0xff] %v3099
          %3132 = vst [vmem:[%s512 + $0xa8] sm:$0xff] %v3100
          %3133 = vst [vmem:[%s512 + $0xb0] sm:$0xff] %v3101
          %3134 = vst [vmem:[%s512 + $0xb8] sm:$0xff] %v3102
          %3135 = vst [vmem:[%s512 + $0xc0] sm:$0xff] %v3103
          %3136 = vst [vmem:[%s512 + $0xc8] sm:$0xff] %v3104
          %3137 = vst [vmem:[%s512 + $0xd0] sm:$0xff] %v3105
          %3138 = vst [vmem:[%s512 + $0xd8] sm:$0xff] %v3106
          %3139 = vst [vmem:[%s512 + $0xe0] sm:$0xff] %v3107
          %3140 = vst [vmem:[%s512 + $0xe8] sm:$0xff] %v3108
          %3141 = vst [vmem:[%s512 + $0xf0] sm:$0xff] %v3109
          %3142 = vst [vmem:[%s512 + $0xf8] sm:$0xff] %v3110
        $region112: #{tpu_custom_call.1} parent=63 // pred_fallthru
          _
        %s3143 = sand.u32 %s313, 1
        %s3144 = scalar_lea.sflag [#allocation10], %s3143
        %s3145 = sand.u32 %s313, 1
        %s3146 = smul.addr %s3145, 256
        %s3147 = scalar_lea.vmem [#allocation16], %s3146
        // Predicated region
        $region113: #{tpu_custom_call.1} parent=63 // pred_check
          %p3148 = pneg %p323
        $region114: #{tpu_custom_call.1} parent=63 // pred_check_branch
          %3150 = sbr.rel (%p3148) target = $region116
        $region115: #{tpu_custom_call.1} parent=63 // pred_region
          %p3151 = scmp.eq.s32.totalorder %s38, 4
          %s3152 = scalar_select %p3151, %s39, 0
          %s3153 = smul.u32 16, %s3152
          %s3155 = ssub.s32 4096, 4096
          %3156 = vsyncadd %s3144, %s3155
          %s3157 = smul.addr %s3153, 2
          %s3158 = smul.addr %s3157, 128
          %s3159 = scalar_lea.hbm %s11, %s3158
          %s3160 = sshll.u32 %s3147, 4
          %s3161 = int_to_ptr.vmem [resolvable:$true] %s3160
          %3166 = dma.vmem_to_hbm [thread:$0]  %s3161, 4096, %s3159, %s3144, 256, 256, 16
        $region116: #{tpu_custom_call.1} parent=63 // pred_fallthru
          _
      $region64: #{tpu_custom_call.1} parent=5 // pred_fallthru
        _
      %p3167 = scmp.le.s32.totalorder 2, %s29
      // Predicated region
      $region117: #{tpu_custom_call.1} parent=5 // pred_check
        %p3168 = pneg %p3167
      $region118: #{tpu_custom_call.1} parent=5 // pred_check_branch
        %3170 = sbr.rel (%p3168) target = $region120
      $region119: #{tpu_custom_call.1} parent=5 // pred_region
        %s3171 = ssub.s32 %s29, 2
        // Predicated region
        $region121: #{tpu_custom_call.1} parent=119 // pred_check
          %p3172 = pneg %p329
        $region122: #{tpu_custom_call.1} parent=119 // pred_check_branch
          %3174 = sbr.rel (%p3172) target = $region124
        $region123: #{tpu_custom_call.1} parent=119 // pred_region
          %s3175 = sand.u32 %s314, 1
          %s3176 = scalar_lea.sflag [#allocation10], %s3175
          %s3177 = sand.u32 %s314, 1
          %s3178 = smul.addr %s3177, 256
          %s3179 = scalar_lea.vmem [#allocation16], %s3178
          %3180 = dma.done %s3176, 4096
        $region124: #{tpu_custom_call.1} parent=119 // pred_fallthru
          _
      $region120: #{tpu_custom_call.1} parent=5 // pred_fallthru
        _
    $region6: #{tpu_custom_call.1} parent=1 // loop_footer
      %s33 = sadd.s32 1, %s29
    $region7: #{tpu_custom_call.1} parent=1 // loop_footer_branch
      %28 = sbr.rel target = $region3
    $region8: #{tpu_custom_call.1} parent=1 // loop_exit
      _
    %3181 = vsyncpa [#allocation9], 1
    %s3182 = scalar_lea.sflag [#allocation9], 1
    %3183 = vsyncpa %s3182, 1
    %3184 = vsyncpa [#allocation12], 1
    %s3185 = scalar_lea.sflag [#allocation12], 1
    %3186 = vsyncpa %s3185, 1
    %3187 = vsyncpa [#allocation15], 1
    %3188 = vsyncpa [#allocation10], 1
    %s3189 = scalar_lea.sflag [#allocation10], 1
    %3190 = vsyncpa %s3189, 1

</llo_original>
